<compile_context>
chip_gen: v7x
topology: tpu7x:2x2x1
jax: 0.10.0
libtpu: 0.0.40
codegen_flags: <defaults>
</compile_context>

<pallas_src>
import functools

import numpy as np
import jax
import jax.numpy as jnp
from jax.experimental import pallas as pl
from jax.experimental.pallas import tpu as pltpu

_OUT_PAD = 128  # lane-dense kernel output width; the real scalar output is column 0


# -----------------------------------------------------------------------------
# Fused kernel
# -----------------------------------------------------------------------------
def _fused_kernel(ids1_ref, ids2_ref,                               # scalar prefetch (SMEM)
                  x3_ref, t_tbl_ref, f_tbl_ref,
                  t_w1_ref, t_b1_ref, t_w2_ref, t_b2_ref,
                  f_w1_ref, f_b1_ref, f_w2_ref, f_b2_ref,
                  wc_ref, bc_ref, wi_ref, bi_ref, wf_ref, bf_ref,
                  o_ref,
                  t_buf, f_buf, t_sem, f_sem,                       # scratch
                  *, Bt, L1, L2, H):
    b0 = pl.program_id(0) * Bt          # first batch element of this tile

    # ---- Embedding row gather: HBM table -> VMEM scratch, one small DMA per token.
    # NOTE: out-of-range token ids are undefined behaviour here (torch nn.Embedding raises).
    # TODO(synk): for long sequences, chunk into pl.loop with a bounded number of in-flight DMAs.
    def start_gather(ids_ref, tbl_ref, buf, sem, L):
        for i in range(Bt * L):
            tok = ids_ref[b0 * L + i]
            pltpu.make_async_copy(tbl_ref.at[pl.ds(tok, 1)],
                                  buf.at[pl.ds(i, 1)], sem.at[i]).start()

    def wait_gather(tbl_ref, buf, sem, L):
        for i in range(Bt * L):
            pltpu.make_async_copy(tbl_ref.at[pl.ds(0, 1)],
                                  buf.at[pl.ds(i, 1)], sem.at[i]).wait()

    # Issue both branches' gathers up front so the "full" DMAs overlap the "title" compute.
    start_gather(ids1_ref, t_tbl_ref, t_buf, t_sem, L1)
    start_gather(ids2_ref, f_tbl_ref, f_buf, f_sem, L2)

    def conv_relu(x, w_ref, b_ref):
        # x: (Bt, T, H) f32 -> (Bt, T-1, H) f32.  Two K=H dots (no lane concat);
        # bf16 MXU operands, f32 accumulate; bias add + ReLU stay f32 (VPU).
        T = x.shape[1]
        xa = x[:, :T - 1, :].reshape(Bt * (T - 1), H).astype(jnp.bfloat16)
        xb = x[:, 1:, :].reshape(Bt * (T - 1), H).astype(jnp.bfloat16)
        y = (jnp.dot(xa, w_ref[:H, :], preferred_element_type=jnp.float32)
             + jnp.dot(xb, w_ref[H:, :], preferred_element_type=jnp.float32)
             + b_ref[...])
        return jnp.maximum(y, 0.0).reshape(Bt, T - 1, H)

    def branch(tbl_ref, buf, sem, L, w1_ref, b1_ref, w2_ref, b2_ref):
        wait_gather(tbl_ref, buf, sem, L)
        x = buf[...].reshape(Bt, L, H)                              # (Bt, L, H) f32
        h1 = conv_relu(x, w1_ref, b1_ref)                           # (Bt, L-1, H)
        h2 = conv_relu(h1, w2_ref, b2_ref)                          # (Bt, L-2, H)
        return jnp.mean(h2, axis=1)                                 # AdaptiveAvgPool1d(1)

    title = branch(t_tbl_ref, t_buf, t_sem, L1, t_w1_ref, t_b1_ref, t_w2_ref, t_b2_ref)
    full = branch(f_tbl_ref, f_buf, f_sem, L2, f_w1_ref, f_b1_ref, f_w2_ref, f_b2_ref)

    # Categorical head.
    x3 = x3_ref[...][:, 0, :]                                       # (Bt, n_cat) bf16
    cat = jnp.dot(x3, wc_ref[...], preferred_element_type=jnp.float32) + bc_ref[...]

    # inter_dense on concat([title, full, cat]) (single K=3H dot), then final dense.
    feats = jnp.concatenate([title, full, cat], axis=-1).astype(jnp.bfloat16)   # (Bt, 3H)
    h = jnp.maximum(jnp.dot(feats, wi_ref[...], preferred_element_type=jnp.float32)
                    + bi_ref[...], 0.0)
    out = jnp.dot(h.astype(jnp.bfloat16), wf_ref[...],
                  preferred_element_type=jnp.float32) + bf_ref[...]             # (Bt, 128)
    o_ref[...] = out[:, None, :]                                    # lane-dense store


# -----------------------------------------------------------------------------
# Wrapper
# -----------------------------------------------------------------------------
def three_inputs_net(params, input1, input2, input3, *, batch_tile=1):
    """input1: (B, L1) int32, input2: (B, L2) int32, input3: (B, n_cat) f32 -> (B, 1)."""
    B, L1 = input1.shape
    _, L2 = input2.shape
    n_cat = input3.shape[1]
    H = params["title_emb"].shape[1]
    assert L1 >= 3 and L2 >= 3, "two Conv1d(k=2) layers + pooling need sequence length >= 3"
    assert B % batch_tile == 0
    Bt = batch_tile
    bf16 = jnp.bfloat16

    ids1 = input1.astype(jnp.int32).reshape(B * L1)
    ids2 = input2.astype(jnp.int32).reshape(B * L2)
    x3 = input3.astype(bf16).reshape(B, 1, n_cat)

    # MXU operands in bf16 (native MXU rate on v5e/v6e/v7x); biases stay f32.
    t_w1 = params["t_w1"].astype(bf16); t_w2 = params["t_w2"].astype(bf16)
    f_w1 = params["f_w1"].astype(bf16); f_w2 = params["f_w2"].astype(bf16)
    wc = params["wc"].astype(bf16)
    wi = params["wi"].astype(bf16)
    # Pad the final (2H, 1) dense to (2H, 128) so the kernel's store is lane-dense.
    wf = jnp.pad(params["wf"], ((0, 0), (0, _OUT_PAD - params["wf"].shape[1]))).astype(bf16)
    bf_pad = jnp.pad(params["bf"], ((0, 0), (0, _OUT_PAD - params["bf"].shape[1])))

    weights = (t_w1, params["t_b1"], t_w2, params["t_b2"],
               f_w1, params["f_b1"], f_w2, params["f_b2"],
               wc, params["bc"], wi, params["bi"], wf, bf_pad)

    def tile_spec(shape):   # per-batch-tile blocks (last two dims are the full array dims)
        return pl.BlockSpec(shape, lambda b, *_: (b, 0, 0))

    def const_spec(arr):    # full-array block, constant index map -> stays VMEM-resident
        rank = arr.ndim
        return pl.BlockSpec(arr.shape, lambda *_: (0,) * rank)

    # Advisory cost estimate so XLA can schedule/overlap around the custom call.
    nbytes = lambda a: int(a.size) * a.dtype.itemsize
    conv_positions = B * ((L1 - 1) + (L1 - 2) + (L2 - 1) + (L2 - 2))
    flops = int(2 * conv_positions * 2 * H * H            # four conv layers (2 taps each)
                + 2 * B * n_cat * H                       # category linear
                + 2 * B * 3 * H * 2 * H                   # inter_dense
                + 2 * B * 2 * H * _OUT_PAD)               # final dense (lane-padded)
    bytes_accessed = int(nbytes(ids1) + nbytes(ids2) + nbytes(x3)
                         + B * (L1 + L2) * H * 4          # gathered embedding rows
                         + sum(nbytes(w) for w in weights)
                         + B * _OUT_PAD * 4)
    cost = pl.CostEstimate(flops=flops, transcendentals=0, bytes_accessed=bytes_accessed)

    grid_spec = pltpu.PrefetchScalarGridSpec(
        num_scalar_prefetch=2,                            # ids1, ids2 -> SMEM
        grid=(B // Bt,),
        in_specs=[
            tile_spec((Bt, 1, n_cat)),                    # x3 (batch-tiled, pipelined)
            pl.BlockSpec(memory_space=pl.ANY),            # title embedding table (HBM)
            pl.BlockSpec(memory_space=pl.ANY),            # full embedding table (HBM)
            *[const_spec(w) for w in weights],            # weights resident across tiles
        ],
        out_specs=tile_spec((Bt, 1, _OUT_PAD)),
        scratch_shapes=[
            pltpu.VMEM((Bt * L1, H), jnp.float32),        # gathered title rows
            pltpu.VMEM((Bt * L2, H), jnp.float32),        # gathered full rows
            pltpu.SemaphoreType.DMA((Bt * L1,)),
            pltpu.SemaphoreType.DMA((Bt * L2,)),
        ],
    )

    out = pl.pallas_call(
        functools.partial(_fused_kernel, Bt=Bt, L1=L1, L2=L2, H=H),
        out_shape=jax.ShapeDtypeStruct((B, 1, _OUT_PAD), jnp.float32),
        grid_spec=grid_spec,
        compiler_params=pltpu.CompilerParams(
            dimension_semantics=("parallel",),            # v7x: shard batch tiles over 2 TCs
            vmem_limit_bytes=32 * 1024 * 1024,
        ),
        cost_estimate=cost,
    )(ids1, ids2, x3, params["title_emb"], params["full_emb"], *weights)
    return out.reshape(B, _OUT_PAD)[:, :1]


# -----------------------------------------------------------------------------
# Parameters (deterministic synthetic; shapes/semantics match the torch module)
# -----------------------------------------------------------------------------
def init_params(key, n_tokens, n_cat_features, hid):
    ks = jax.random.split(key, 16)

    def uni(k, fan_in, shape):
        bound = 1.0 / np.sqrt(fan_in)
        return jax.random.uniform(k, shape, jnp.float32, -bound, bound)

    p = {}
    # Embeddings (torch default init: N(0, 1))
    p["title_emb"] = jax.random.normal(ks[0], (n_tokens, hid), jnp.float32)
    p["full_emb"] = jax.random.normal(ks[1], (n_tokens, hid), jnp.float32)

    # Conv1d(hid, hid, k=2), folded: rows [0:H] = tap-0 weight (H_in, H_out), rows [H:2H] = tap-1.
    fan_conv = 2 * hid
    p["t_w1"] = uni(ks[2], fan_conv, (2 * hid, hid)); p["t_b1"] = uni(ks[3], fan_conv, (1, hid))
    p["t_w2"] = uni(ks[4], fan_conv, (2 * hid, hid)); p["t_b2"] = uni(ks[5], fan_conv, (1, hid))
    p["f_w1"] = uni(ks[6], fan_conv, (2 * hid, hid)); p["f_b1"] = uni(ks[7], fan_conv, (1, hid))
    p["f_w2"] = uni(ks[8], fan_conv, (2 * hid, hid)); p["f_b2"] = uni(ks[9], fan_conv, (1, hid))

    # Linear layers stored as (in, out) == torch weight.T, each with its own key.
    p["wc"] = uni(ks[10], n_cat_features, (n_cat_features, hid))
    p["bc"] = uni(ks[11], n_cat_features, (1, hid))
    p["wi"] = uni(ks[12], 3 * hid, (3 * hid, 2 * hid))
    p["bi"] = uni(ks[13], 3 * hid, (1, 2 * hid))
    p["wf"] = uni(ks[14], 2 * hid, (2 * hid, 1))
    p["bf"] = uni(ks[15], 2 * hid, (1, 1))
    return p


# -----------------------------------------------------------------------------
# Pure-JAX references
# -----------------------------------------------------------------------------
def three_inputs_net_ref(params, input1, input2, input3):
    """Exact f32 reference (torch semantics)."""
    H = params["title_emb"].shape[1]

    def branch(tbl, ids, w1, b1, w2, b2):
        x = tbl[ids]                                                         # (B, L, H)
        h1 = jnp.maximum(x[:, :-1] @ w1[:H] + x[:, 1:] @ w1[H:] + b1, 0.0)   # (B, L-1, H)
        h2 = jnp.maximum(h1[:, :-1] @ w2[:H] + h1[:, 1:] @ w2[H:] + b2, 0.0) # (B, L-2, H)
        return jnp.mean(h2, axis=1)                                          # (B, H)

    t = branch(params["title_emb"], input1, params["t_w1"], params["t_b1"],
               params["t_w2"], params["t_b2"])
    f = branch(params["full_emb"], input2, params["f_w1"], params["f_b1"],
               params["f_w2"], params["f_b2"])
    c = input3 @ params["wc"] + params["bc"]
    h = jnp.maximum(jnp.concatenate([t, f, c], axis=-1) @ params["wi"] + params["bi"], 0.0)
    return h @ params["wf"] + params["bf"]


def three_inputs_net_mixed_ref(params, input1, input2, input3):
    """Reference mirroring the kernel's bf16-operand / f32-accumulate dot boundaries."""
    H = params["title_emb"].shape[1]
    bf16, f32 = jnp.bfloat16, jnp.float32

    def mm(a, b):
        return jnp.dot(a.astype(bf16), b.astype(bf16), preferred_element_type=f32)

    def branch(tbl, ids, w1, b1, w2, b2):
        x = tbl[ids]                                                         # exact f32 gather

        def conv(v, w, b):
            B_, T = v.shape[0], v.shape[1]
            va = v[:, :-1].reshape(B_ * (T - 1), H)
            vb = v[:, 1:].reshape(B_ * (T - 1), H)
            y = mm(va, w[:H]) + mm(vb, w[H:]) + b
            return jnp.maximum(y, 0.0).reshape(B_, T - 1, H)

        h1 = conv(x, w1, b1)
        h2 = conv(h1, w2, b2)
        return jnp.mean(h2, axis=1)

    t = branch(params["title_emb"], input1, params["t_w1"], params["t_b1"],
               params["t_w2"], params["t_b2"])
    f = branch(params["full_emb"], input2, params["f_w1"], params["f_b1"],
               params["f_w2"], params["f_b2"])
    c = mm(input3, params["wc"]) + params["bc"]
    h = jnp.maximum(mm(jnp.concatenate([t, f, c], axis=-1), params["wi"]) + params["bi"], 0.0)
    return mm(h, params["wf"]) + params["bf"]


if __name__ == "__main__":
    B, L1, L2 = 2, 8, 12
    n_tokens, n_cat_features, hid = 50, 16, 32

    key = jax.random.PRNGKey(0)
    k1, k2, k3, kp = jax.random.split(key, 4)
    input1 = jax.random.randint(k1, (B, L1), 0, n_tokens, dtype=jnp.int32)
    input2 = jax.random.randint(k2, (B, L2), 0, n_tokens, dtype=jnp.int32)
    input3 = jax.random.normal(k3, (B, n_cat_features), jnp.float32)

    params = init_params(kp, n_tokens, n_cat_features, hid)

    fwd = jax.jit(three_inputs_net)
    out = jax.block_until_ready(fwd(params, input1, input2, input3))

    ref_mixed = jax.block_until_ready(three_inputs_net_mixed_ref(params, input1, input2, input3))
    ref_f32 = jax.block_until_ready(three_inputs_net_ref(params, input1, input2, input3))

    assert out.shape == (B, 1), out.shape
    # Tight check vs a reference with identical bf16-operand / f32-accumulate dots.
    np.testing.assert_allclose(np.asarray(out), np.asarray(ref_mixed), rtol=2e-3, atol=2e-3)
    # Loose check vs the exact f32 torch-semantics reference (only bf16 operand rounding differs).
    np.testing.assert_allclose(np.asarray(out), np.asarray(ref_f32), rtol=3e-2, atol=3e-2)
    print("KERNEL_OK")
</pallas_src>

<mosaic_0001>
module attributes {stable_mosaic.version = 11 : i64} {
  func.func @_fused_kernel(%arg0: i32, %arg1: memref<16xi32, #tpu.memory_space<smem>>, %arg2: memref<24xi32, #tpu.memory_space<smem>>, %arg3: memref<1x1x16xbf16, #tpu.memory_space<vmem>>, %arg4: memref<50x32xf32, #tpu.memory_space<any>>, %arg5: memref<50x32xf32, #tpu.memory_space<any>>, %arg6: memref<64x32xbf16, #tpu.memory_space<vmem>>, %arg7: memref<1x32xf32, #tpu.memory_space<vmem>>, %arg8: memref<64x32xbf16, #tpu.memory_space<vmem>>, %arg9: memref<1x32xf32, #tpu.memory_space<vmem>>, %arg10: memref<64x32xbf16, #tpu.memory_space<vmem>>, %arg11: memref<1x32xf32, #tpu.memory_space<vmem>>, %arg12: memref<64x32xbf16, #tpu.memory_space<vmem>>, %arg13: memref<1x32xf32, #tpu.memory_space<vmem>>, %arg14: memref<16x32xbf16, #tpu.memory_space<vmem>>, %arg15: memref<1x32xf32, #tpu.memory_space<vmem>>, %arg16: memref<96x64xbf16, #tpu.memory_space<vmem>>, %arg17: memref<1x64xf32, #tpu.memory_space<vmem>>, %arg18: memref<64x128xbf16, #tpu.memory_space<vmem>>, %arg19: memref<1x128xf32, #tpu.memory_space<vmem>>, %arg20: memref<1x1x128xf32, #tpu.memory_space<vmem>>, %arg21: memref<8x32xf32, #tpu.memory_space<vmem>>, %arg22: memref<12x32xf32, #tpu.memory_space<vmem>>, %arg23: memref<8x!tpu.dma_semaphore, #tpu.memory_space<semaphore_mem>>, %arg24: memref<12x!tpu.dma_semaphore, #tpu.memory_space<semaphore_mem>>) attributes {dimension_semantics = [#tpu.dimension_semantics<parallel>], iteration_bounds = array<i64: 2>, scalar_prefetch = 2 : i64, scratch_operands = 4 : i64, tpu.core_type = #tpu.core_type<tc>, window_params = [{transform_indices = @transform_0, window_bounds = array<i64: 1, 1, 16>}, {}, {}, {pipeline_mode = #tpu.pipeline_mode<synchronous>, transform_indices = @transform_3, window_bounds = array<i64: 64, 32>}, {pipeline_mode = #tpu.pipeline_mode<synchronous>, transform_indices = @transform_4, window_bounds = array<i64: 1, 32>}, {pipeline_mode = #tpu.pipeline_mode<synchronous>, transform_indices = @transform_5, window_bounds = array<i64: 64, 32>}, {pipeline_mode = #tpu.pipeline_mode<synchronous>, transform_indices = @transform_6, window_bounds = array<i64: 1, 32>}, {pipeline_mode = #tpu.pipeline_mode<synchronous>, transform_indices = @transform_7, window_bounds = array<i64: 64, 32>}, {pipeline_mode = #tpu.pipeline_mode<synchronous>, transform_indices = @transform_8, window_bounds = array<i64: 1, 32>}, {pipeline_mode = #tpu.pipeline_mode<synchronous>, transform_indices = @transform_9, window_bounds = array<i64: 64, 32>}, {pipeline_mode = #tpu.pipeline_mode<synchronous>, transform_indices = @transform_10, window_bounds = array<i64: 1, 32>}, {pipeline_mode = #tpu.pipeline_mode<synchronous>, transform_indices = @transform_11, window_bounds = array<i64: 16, 32>}, {pipeline_mode = #tpu.pipeline_mode<synchronous>, transform_indices = @transform_12, window_bounds = array<i64: 1, 32>}, {pipeline_mode = #tpu.pipeline_mode<synchronous>, transform_indices = @transform_13, window_bounds = array<i64: 96, 64>}, {pipeline_mode = #tpu.pipeline_mode<synchronous>, transform_indices = @transform_14, window_bounds = array<i64: 1, 64>}, {pipeline_mode = #tpu.pipeline_mode<synchronous>, transform_indices = @transform_15, window_bounds = array<i64: 64, 128>}, {pipeline_mode = #tpu.pipeline_mode<synchronous>, transform_indices = @transform_16, window_bounds = array<i64: 1, 128>}, {transform_indices = @transform_17, window_bounds = array<i64: 1, 1, 128>}]} {
    %c1_i32 = arith.constant 1 : i32
    %0 = arith.muli %arg0, %c1_i32 : i32
    %c8_i32 = arith.constant 8 : i32
    %1 = arith.muli %0, %c8_i32 : i32
    %c0_i32 = arith.constant 0 : i32
    %2 = arith.addi %1, %c0_i32 : i32
    %3 = arith.index_cast %2 : i32 to index
    %4 = memref.load %arg1[%3] : memref<16xi32, #tpu.memory_space<smem>>
    %c0_i32_0 = arith.constant 0 : i32
    %c0_i32_1 = arith.constant 0 : i32
    %5 = tpu.memref_slice %arg4[%4, %c0_i32_1] : memref<50x32xf32, #tpu.memory_space<any>> -> memref<1x32xf32, #tpu.memory_space<any>>
    %c0_i32_2 = arith.constant 0 : i32
    %c0_i32_3 = arith.constant 0 : i32
    %6 = tpu.memref_slice %arg21[%c0_i32_2, %c0_i32_3] : memref<8x32xf32, #tpu.memory_space<vmem>> -> memref<1x32xf32, #tpu.memory_space<vmem>>
    %7 = tpu.memref_slice %arg23[%c0_i32_0] : memref<8x!tpu.dma_semaphore, #tpu.memory_space<semaphore_mem>> -> memref<1x!tpu.dma_semaphore, #tpu.memory_space<semaphore_mem>>
    %8 = tpu.memref_squeeze %7 : memref<1x!tpu.dma_semaphore, #tpu.memory_space<semaphore_mem>> -> memref<!tpu.dma_semaphore, #tpu.memory_space<semaphore_mem>>
    tpu.enqueue_dma source(%5 : memref<1x32xf32, #tpu.memory_space<any>>) target(%6 : memref<1x32xf32, #tpu.memory_space<vmem>>) target_semaphore(%8 : memref<!tpu.dma_semaphore, #tpu.memory_space<semaphore_mem>>)
    %c8_i32_4 = arith.constant 8 : i32
    %9 = arith.muli %0, %c8_i32_4 : i32
    %c1_i32_5 = arith.constant 1 : i32
    %10 = arith.addi %9, %c1_i32_5 : i32
    %11 = arith.index_cast %10 : i32 to index
    %12 = memref.load %arg1[%11] : memref<16xi32, #tpu.memory_space<smem>>
    %c1_i32_6 = arith.constant 1 : i32
    %c0_i32_7 = arith.constant 0 : i32
    %13 = tpu.memref_slice %arg4[%12, %c0_i32_7] : memref<50x32xf32, #tpu.memory_space<any>> -> memref<1x32xf32, #tpu.memory_space<any>>
    %c1_i32_8 = arith.constant 1 : i32
    %c0_i32_9 = arith.constant 0 : i32
    %14 = tpu.memref_slice %arg21[%c1_i32_8, %c0_i32_9] : memref<8x32xf32, #tpu.memory_space<vmem>> -> memref<1x32xf32, #tpu.memory_space<vmem>>
    %15 = tpu.memref_slice %arg23[%c1_i32_6] : memref<8x!tpu.dma_semaphore, #tpu.memory_space<semaphore_mem>> -> memref<1x!tpu.dma_semaphore, #tpu.memory_space<semaphore_mem>>
    %16 = tpu.memref_squeeze %15 : memref<1x!tpu.dma_semaphore, #tpu.memory_space<semaphore_mem>> -> memref<!tpu.dma_semaphore, #tpu.memory_space<semaphore_mem>>
    tpu.enqueue_dma source(%13 : memref<1x32xf32, #tpu.memory_space<any>>) target(%14 : memref<1x32xf32, #tpu.memory_space<vmem>>) target_semaphore(%16 : memref<!tpu.dma_semaphore, #tpu.memory_space<semaphore_mem>>)
    %c8_i32_10 = arith.constant 8 : i32
    %17 = arith.muli %0, %c8_i32_10 : i32
    %c2_i32 = arith.constant 2 : i32
    %18 = arith.addi %17, %c2_i32 : i32
    %19 = arith.index_cast %18 : i32 to index
    %20 = memref.load %arg1[%19] : memref<16xi32, #tpu.memory_space<smem>>
    %c2_i32_11 = arith.constant 2 : i32
    %c0_i32_12 = arith.constant 0 : i32
    %21 = tpu.memref_slice %arg4[%20, %c0_i32_12] : memref<50x32xf32, #tpu.memory_space<any>> -> memref<1x32xf32, #tpu.memory_space<any>>
    %c2_i32_13 = arith.constant 2 : i32
    %c0_i32_14 = arith.constant 0 : i32
    %22 = tpu.memref_slice %arg21[%c2_i32_13, %c0_i32_14] : memref<8x32xf32, #tpu.memory_space<vmem>> -> memref<1x32xf32, #tpu.memory_space<vmem>>
    %23 = tpu.memref_slice %arg23[%c2_i32_11] : memref<8x!tpu.dma_semaphore, #tpu.memory_space<semaphore_mem>> -> memref<1x!tpu.dma_semaphore, #tpu.memory_space<semaphore_mem>>
    %24 = tpu.memref_squeeze %23 : memref<1x!tpu.dma_semaphore, #tpu.memory_space<semaphore_mem>> -> memref<!tpu.dma_semaphore, #tpu.memory_space<semaphore_mem>>
    tpu.enqueue_dma source(%21 : memref<1x32xf32, #tpu.memory_space<any>>) target(%22 : memref<1x32xf32, #tpu.memory_space<vmem>>) target_semaphore(%24 : memref<!tpu.dma_semaphore, #tpu.memory_space<semaphore_mem>>)
    %c8_i32_15 = arith.constant 8 : i32
    %25 = arith.muli %0, %c8_i32_15 : i32
    %c3_i32 = arith.constant 3 : i32
    %26 = arith.addi %25, %c3_i32 : i32
    %27 = arith.index_cast %26 : i32 to index
    %28 = memref.load %arg1[%27] : memref<16xi32, #tpu.memory_space<smem>>
    %c3_i32_16 = arith.constant 3 : i32
    %c0_i32_17 = arith.constant 0 : i32
    %29 = tpu.memref_slice %arg4[%28, %c0_i32_17] : memref<50x32xf32, #tpu.memory_space<any>> -> memref<1x32xf32, #tpu.memory_space<any>>
    %c3_i32_18 = arith.constant 3 : i32
    %c0_i32_19 = arith.constant 0 : i32
    %30 = tpu.memref_slice %arg21[%c3_i32_18, %c0_i32_19] : memref<8x32xf32, #tpu.memory_space<vmem>> -> memref<1x32xf32, #tpu.memory_space<vmem>>
    %31 = tpu.memref_slice %arg23[%c3_i32_16] : memref<8x!tpu.dma_semaphore, #tpu.memory_space<semaphore_mem>> -> memref<1x!tpu.dma_semaphore, #tpu.memory_space<semaphore_mem>>
    %32 = tpu.memref_squeeze %31 : memref<1x!tpu.dma_semaphore, #tpu.memory_space<semaphore_mem>> -> memref<!tpu.dma_semaphore, #tpu.memory_space<semaphore_mem>>
    tpu.enqueue_dma source(%29 : memref<1x32xf32, #tpu.memory_space<any>>) target(%30 : memref<1x32xf32, #tpu.memory_space<vmem>>) target_semaphore(%32 : memref<!tpu.dma_semaphore, #tpu.memory_space<semaphore_mem>>)
    %c8_i32_20 = arith.constant 8 : i32
    %33 = arith.muli %0, %c8_i32_20 : i32
    %c4_i32 = arith.constant 4 : i32
    %34 = arith.addi %33, %c4_i32 : i32
    %35 = arith.index_cast %34 : i32 to index
    %36 = memref.load %arg1[%35] : memref<16xi32, #tpu.memory_space<smem>>
    %c4_i32_21 = arith.constant 4 : i32
    %c0_i32_22 = arith.constant 0 : i32
    %37 = tpu.memref_slice %arg4[%36, %c0_i32_22] : memref<50x32xf32, #tpu.memory_space<any>> -> memref<1x32xf32, #tpu.memory_space<any>>
    %c4_i32_23 = arith.constant 4 : i32
    %c0_i32_24 = arith.constant 0 : i32
    %38 = tpu.memref_slice %arg21[%c4_i32_23, %c0_i32_24] : memref<8x32xf32, #tpu.memory_space<vmem>> -> memref<1x32xf32, #tpu.memory_space<vmem>>
    %39 = tpu.memref_slice %arg23[%c4_i32_21] : memref<8x!tpu.dma_semaphore, #tpu.memory_space<semaphore_mem>> -> memref<1x!tpu.dma_semaphore, #tpu.memory_space<semaphore_mem>>
    %40 = tpu.memref_squeeze %39 : memref<1x!tpu.dma_semaphore, #tpu.memory_space<semaphore_mem>> -> memref<!tpu.dma_semaphore, #tpu.memory_space<semaphore_mem>>
    tpu.enqueue_dma source(%37 : memref<1x32xf32, #tpu.memory_space<any>>) target(%38 : memref<1x32xf32, #tpu.memory_space<vmem>>) target_semaphore(%40 : memref<!tpu.dma_semaphore, #tpu.memory_space<semaphore_mem>>)
    %c8_i32_25 = arith.constant 8 : i32
    %41 = arith.muli %0, %c8_i32_25 : i32
    %c5_i32 = arith.constant 5 : i32
    %42 = arith.addi %41, %c5_i32 : i32
    %43 = arith.index_cast %42 : i32 to index
    %44 = memref.load %arg1[%43] : memref<16xi32, #tpu.memory_space<smem>>
    %c5_i32_26 = arith.constant 5 : i32
    %c0_i32_27 = arith.constant 0 : i32
    %45 = tpu.memref_slice %arg4[%44, %c0_i32_27] : memref<50x32xf32, #tpu.memory_space<any>> -> memref<1x32xf32, #tpu.memory_space<any>>
    %c5_i32_28 = arith.constant 5 : i32
    %c0_i32_29 = arith.constant 0 : i32
    %46 = tpu.memref_slice %arg21[%c5_i32_28, %c0_i32_29] : memref<8x32xf32, #tpu.memory_space<vmem>> -> memref<1x32xf32, #tpu.memory_space<vmem>>
    %47 = tpu.memref_slice %arg23[%c5_i32_26] : memref<8x!tpu.dma_semaphore, #tpu.memory_space<semaphore_mem>> -> memref<1x!tpu.dma_semaphore, #tpu.memory_space<semaphore_mem>>
    %48 = tpu.memref_squeeze %47 : memref<1x!tpu.dma_semaphore, #tpu.memory_space<semaphore_mem>> -> memref<!tpu.dma_semaphore, #tpu.memory_space<semaphore_mem>>
    tpu.enqueue_dma source(%45 : memref<1x32xf32, #tpu.memory_space<any>>) target(%46 : memref<1x32xf32, #tpu.memory_space<vmem>>) target_semaphore(%48 : memref<!tpu.dma_semaphore, #tpu.memory_space<semaphore_mem>>)
    %c8_i32_30 = arith.constant 8 : i32
    %49 = arith.muli %0, %c8_i32_30 : i32
    %c6_i32 = arith.constant 6 : i32
    %50 = arith.addi %49, %c6_i32 : i32
    %51 = arith.index_cast %50 : i32 to index
    %52 = memref.load %arg1[%51] : memref<16xi32, #tpu.memory_space<smem>>
    %c6_i32_31 = arith.constant 6 : i32
    %c0_i32_32 = arith.constant 0 : i32
    %53 = tpu.memref_slice %arg4[%52, %c0_i32_32] : memref<50x32xf32, #tpu.memory_space<any>> -> memref<1x32xf32, #tpu.memory_space<any>>
    %c6_i32_33 = arith.constant 6 : i32
    %c0_i32_34 = arith.constant 0 : i32
    %54 = tpu.memref_slice %arg21[%c6_i32_33, %c0_i32_34] : memref<8x32xf32, #tpu.memory_space<vmem>> -> memref<1x32xf32, #tpu.memory_space<vmem>>
    %55 = tpu.memref_slice %arg23[%c6_i32_31] : memref<8x!tpu.dma_semaphore, #tpu.memory_space<semaphore_mem>> -> memref<1x!tpu.dma_semaphore, #tpu.memory_space<semaphore_mem>>
    %56 = tpu.memref_squeeze %55 : memref<1x!tpu.dma_semaphore, #tpu.memory_space<semaphore_mem>> -> memref<!tpu.dma_semaphore, #tpu.memory_space<semaphore_mem>>
    tpu.enqueue_dma source(%53 : memref<1x32xf32, #tpu.memory_space<any>>) target(%54 : memref<1x32xf32, #tpu.memory_space<vmem>>) target_semaphore(%56 : memref<!tpu.dma_semaphore, #tpu.memory_space<semaphore_mem>>)
    %c8_i32_35 = arith.constant 8 : i32
    %57 = arith.muli %0, %c8_i32_35 : i32
    %c7_i32 = arith.constant 7 : i32
    %58 = arith.addi %57, %c7_i32 : i32
    %59 = arith.index_cast %58 : i32 to index
    %60 = memref.load %arg1[%59] : memref<16xi32, #tpu.memory_space<smem>>
    %c7_i32_36 = arith.constant 7 : i32
    %c0_i32_37 = arith.constant 0 : i32
    %61 = tpu.memref_slice %arg4[%60, %c0_i32_37] : memref<50x32xf32, #tpu.memory_space<any>> -> memref<1x32xf32, #tpu.memory_space<any>>
    %c7_i32_38 = arith.constant 7 : i32
    %c0_i32_39 = arith.constant 0 : i32
    %62 = tpu.memref_slice %arg21[%c7_i32_38, %c0_i32_39] : memref<8x32xf32, #tpu.memory_space<vmem>> -> memref<1x32xf32, #tpu.memory_space<vmem>>
    %63 = tpu.memref_slice %arg23[%c7_i32_36] : memref<8x!tpu.dma_semaphore, #tpu.memory_space<semaphore_mem>> -> memref<1x!tpu.dma_semaphore, #tpu.memory_space<semaphore_mem>>
    %64 = tpu.memref_squeeze %63 : memref<1x!tpu.dma_semaphore, #tpu.memory_space<semaphore_mem>> -> memref<!tpu.dma_semaphore, #tpu.memory_space<semaphore_mem>>
    tpu.enqueue_dma source(%61 : memref<1x32xf32, #tpu.memory_space<any>>) target(%62 : memref<1x32xf32, #tpu.memory_space<vmem>>) target_semaphore(%64 : memref<!tpu.dma_semaphore, #tpu.memory_space<semaphore_mem>>)
    %c12_i32 = arith.constant 12 : i32
    %65 = arith.muli %0, %c12_i32 : i32
    %c0_i32_40 = arith.constant 0 : i32
    %66 = arith.addi %65, %c0_i32_40 : i32
    %67 = arith.index_cast %66 : i32 to index
    %68 = memref.load %arg2[%67] : memref<24xi32, #tpu.memory_space<smem>>
    %c0_i32_41 = arith.constant 0 : i32
    %c0_i32_42 = arith.constant 0 : i32
    %69 = tpu.memref_slice %arg5[%68, %c0_i32_42] : memref<50x32xf32, #tpu.memory_space<any>> -> memref<1x32xf32, #tpu.memory_space<any>>
    %c0_i32_43 = arith.constant 0 : i32
    %c0_i32_44 = arith.constant 0 : i32
    %70 = tpu.memref_slice %arg22[%c0_i32_43, %c0_i32_44] : memref<12x32xf32, #tpu.memory_space<vmem>> -> memref<1x32xf32, #tpu.memory_space<vmem>>
    %71 = tpu.memref_slice %arg24[%c0_i32_41] : memref<12x!tpu.dma_semaphore, #tpu.memory_space<semaphore_mem>> -> memref<1x!tpu.dma_semaphore, #tpu.memory_space<semaphore_mem>>
    %72 = tpu.memref_squeeze %71 : memref<1x!tpu.dma_semaphore, #tpu.memory_space<semaphore_mem>> -> memref<!tpu.dma_semaphore, #tpu.memory_space<semaphore_mem>>
    tpu.enqueue_dma source(%69 : memref<1x32xf32, #tpu.memory_space<any>>) target(%70 : memref<1x32xf32, #tpu.memory_space<vmem>>) target_semaphore(%72 : memref<!tpu.dma_semaphore, #tpu.memory_space<semaphore_mem>>)
    %c12_i32_45 = arith.constant 12 : i32
    %73 = arith.muli %0, %c12_i32_45 : i32
    %c1_i32_46 = arith.constant 1 : i32
    %74 = arith.addi %73, %c1_i32_46 : i32
    %75 = arith.index_cast %74 : i32 to index
    %76 = memref.load %arg2[%75] : memref<24xi32, #tpu.memory_space<smem>>
    %c1_i32_47 = arith.constant 1 : i32
    %c0_i32_48 = arith.constant 0 : i32
    %77 = tpu.memref_slice %arg5[%76, %c0_i32_48] : memref<50x32xf32, #tpu.memory_space<any>> -> memref<1x32xf32, #tpu.memory_space<any>>
    %c1_i32_49 = arith.constant 1 : i32
    %c0_i32_50 = arith.constant 0 : i32
    %78 = tpu.memref_slice %arg22[%c1_i32_49, %c0_i32_50] : memref<12x32xf32, #tpu.memory_space<vmem>> -> memref<1x32xf32, #tpu.memory_space<vmem>>
    %79 = tpu.memref_slice %arg24[%c1_i32_47] : memref<12x!tpu.dma_semaphore, #tpu.memory_space<semaphore_mem>> -> memref<1x!tpu.dma_semaphore, #tpu.memory_space<semaphore_mem>>
    %80 = tpu.memref_squeeze %79 : memref<1x!tpu.dma_semaphore, #tpu.memory_space<semaphore_mem>> -> memref<!tpu.dma_semaphore, #tpu.memory_space<semaphore_mem>>
    tpu.enqueue_dma source(%77 : memref<1x32xf32, #tpu.memory_space<any>>) target(%78 : memref<1x32xf32, #tpu.memory_space<vmem>>) target_semaphore(%80 : memref<!tpu.dma_semaphore, #tpu.memory_space<semaphore_mem>>)
    %c12_i32_51 = arith.constant 12 : i32
    %81 = arith.muli %0, %c12_i32_51 : i32
    %c2_i32_52 = arith.constant 2 : i32
    %82 = arith.addi %81, %c2_i32_52 : i32
    %83 = arith.index_cast %82 : i32 to index
    %84 = memref.load %arg2[%83] : memref<24xi32, #tpu.memory_space<smem>>
    %c2_i32_53 = arith.constant 2 : i32
    %c0_i32_54 = arith.constant 0 : i32
    %85 = tpu.memref_slice %arg5[%84, %c0_i32_54] : memref<50x32xf32, #tpu.memory_space<any>> -> memref<1x32xf32, #tpu.memory_space<any>>
    %c2_i32_55 = arith.constant 2 : i32
    %c0_i32_56 = arith.constant 0 : i32
    %86 = tpu.memref_slice %arg22[%c2_i32_55, %c0_i32_56] : memref<12x32xf32, #tpu.memory_space<vmem>> -> memref<1x32xf32, #tpu.memory_space<vmem>>
    %87 = tpu.memref_slice %arg24[%c2_i32_53] : memref<12x!tpu.dma_semaphore, #tpu.memory_space<semaphore_mem>> -> memref<1x!tpu.dma_semaphore, #tpu.memory_space<semaphore_mem>>
    %88 = tpu.memref_squeeze %87 : memref<1x!tpu.dma_semaphore, #tpu.memory_space<semaphore_mem>> -> memref<!tpu.dma_semaphore, #tpu.memory_space<semaphore_mem>>
    tpu.enqueue_dma source(%85 : memref<1x32xf32, #tpu.memory_space<any>>) target(%86 : memref<1x32xf32, #tpu.memory_space<vmem>>) target_semaphore(%88 : memref<!tpu.dma_semaphore, #tpu.memory_space<semaphore_mem>>)
    %c12_i32_57 = arith.constant 12 : i32
    %89 = arith.muli %0, %c12_i32_57 : i32
    %c3_i32_58 = arith.constant 3 : i32
    %90 = arith.addi %89, %c3_i32_58 : i32
    %91 = arith.index_cast %90 : i32 to index
    %92 = memref.load %arg2[%91] : memref<24xi32, #tpu.memory_space<smem>>
    %c3_i32_59 = arith.constant 3 : i32
    %c0_i32_60 = arith.constant 0 : i32
    %93 = tpu.memref_slice %arg5[%92, %c0_i32_60] : memref<50x32xf32, #tpu.memory_space<any>> -> memref<1x32xf32, #tpu.memory_space<any>>
    %c3_i32_61 = arith.constant 3 : i32
    %c0_i32_62 = arith.constant 0 : i32
    %94 = tpu.memref_slice %arg22[%c3_i32_61, %c0_i32_62] : memref<12x32xf32, #tpu.memory_space<vmem>> -> memref<1x32xf32, #tpu.memory_space<vmem>>
    %95 = tpu.memref_slice %arg24[%c3_i32_59] : memref<12x!tpu.dma_semaphore, #tpu.memory_space<semaphore_mem>> -> memref<1x!tpu.dma_semaphore, #tpu.memory_space<semaphore_mem>>
    %96 = tpu.memref_squeeze %95 : memref<1x!tpu.dma_semaphore, #tpu.memory_space<semaphore_mem>> -> memref<!tpu.dma_semaphore, #tpu.memory_space<semaphore_mem>>
    tpu.enqueue_dma source(%93 : memref<1x32xf32, #tpu.memory_space<any>>) target(%94 : memref<1x32xf32, #tpu.memory_space<vmem>>) target_semaphore(%96 : memref<!tpu.dma_semaphore, #tpu.memory_space<semaphore_mem>>)
    %c12_i32_63 = arith.constant 12 : i32
    %97 = arith.muli %0, %c12_i32_63 : i32
    %c4_i32_64 = arith.constant 4 : i32
    %98 = arith.addi %97, %c4_i32_64 : i32
    %99 = arith.index_cast %98 : i32 to index
    %100 = memref.load %arg2[%99] : memref<24xi32, #tpu.memory_space<smem>>
    %c4_i32_65 = arith.constant 4 : i32
    %c0_i32_66 = arith.constant 0 : i32
    %101 = tpu.memref_slice %arg5[%100, %c0_i32_66] : memref<50x32xf32, #tpu.memory_space<any>> -> memref<1x32xf32, #tpu.memory_space<any>>
    %c4_i32_67 = arith.constant 4 : i32
    %c0_i32_68 = arith.constant 0 : i32
    %102 = tpu.memref_slice %arg22[%c4_i32_67, %c0_i32_68] : memref<12x32xf32, #tpu.memory_space<vmem>> -> memref<1x32xf32, #tpu.memory_space<vmem>>
    %103 = tpu.memref_slice %arg24[%c4_i32_65] : memref<12x!tpu.dma_semaphore, #tpu.memory_space<semaphore_mem>> -> memref<1x!tpu.dma_semaphore, #tpu.memory_space<semaphore_mem>>
    %104 = tpu.memref_squeeze %103 : memref<1x!tpu.dma_semaphore, #tpu.memory_space<semaphore_mem>> -> memref<!tpu.dma_semaphore, #tpu.memory_space<semaphore_mem>>
    tpu.enqueue_dma source(%101 : memref<1x32xf32, #tpu.memory_space<any>>) target(%102 : memref<1x32xf32, #tpu.memory_space<vmem>>) target_semaphore(%104 : memref<!tpu.dma_semaphore, #tpu.memory_space<semaphore_mem>>)
    %c12_i32_69 = arith.constant 12 : i32
    %105 = arith.muli %0, %c12_i32_69 : i32
    %c5_i32_70 = arith.constant 5 : i32
    %106 = arith.addi %105, %c5_i32_70 : i32
    %107 = arith.index_cast %106 : i32 to index
    %108 = memref.load %arg2[%107] : memref<24xi32, #tpu.memory_space<smem>>
    %c5_i32_71 = arith.constant 5 : i32
    %c0_i32_72 = arith.constant 0 : i32
    %109 = tpu.memref_slice %arg5[%108, %c0_i32_72] : memref<50x32xf32, #tpu.memory_space<any>> -> memref<1x32xf32, #tpu.memory_space<any>>
    %c5_i32_73 = arith.constant 5 : i32
    %c0_i32_74 = arith.constant 0 : i32
    %110 = tpu.memref_slice %arg22[%c5_i32_73, %c0_i32_74] : memref<12x32xf32, #tpu.memory_space<vmem>> -> memref<1x32xf32, #tpu.memory_space<vmem>>
    %111 = tpu.memref_slice %arg24[%c5_i32_71] : memref<12x!tpu.dma_semaphore, #tpu.memory_space<semaphore_mem>> -> memref<1x!tpu.dma_semaphore, #tpu.memory_space<semaphore_mem>>
    %112 = tpu.memref_squeeze %111 : memref<1x!tpu.dma_semaphore, #tpu.memory_space<semaphore_mem>> -> memref<!tpu.dma_semaphore, #tpu.memory_space<semaphore_mem>>
    tpu.enqueue_dma source(%109 : memref<1x32xf32, #tpu.memory_space<any>>) target(%110 : memref<1x32xf32, #tpu.memory_space<vmem>>) target_semaphore(%112 : memref<!tpu.dma_semaphore, #tpu.memory_space<semaphore_mem>>)
    %c12_i32_75 = arith.constant 12 : i32
    %113 = arith.muli %0, %c12_i32_75 : i32
    %c6_i32_76 = arith.constant 6 : i32
    %114 = arith.addi %113, %c6_i32_76 : i32
    %115 = arith.index_cast %114 : i32 to index
    %116 = memref.load %arg2[%115] : memref<24xi32, #tpu.memory_space<smem>>
    %c6_i32_77 = arith.constant 6 : i32
    %c0_i32_78 = arith.constant 0 : i32
    %117 = tpu.memref_slice %arg5[%116, %c0_i32_78] : memref<50x32xf32, #tpu.memory_space<any>> -> memref<1x32xf32, #tpu.memory_space<any>>
    %c6_i32_79 = arith.constant 6 : i32
    %c0_i32_80 = arith.constant 0 : i32
    %118 = tpu.memref_slice %arg22[%c6_i32_79, %c0_i32_80] : memref<12x32xf32, #tpu.memory_space<vmem>> -> memref<1x32xf32, #tpu.memory_space<vmem>>
    %119 = tpu.memref_slice %arg24[%c6_i32_77] : memref<12x!tpu.dma_semaphore, #tpu.memory_space<semaphore_mem>> -> memref<1x!tpu.dma_semaphore, #tpu.memory_space<semaphore_mem>>
    %120 = tpu.memref_squeeze %119 : memref<1x!tpu.dma_semaphore, #tpu.memory_space<semaphore_mem>> -> memref<!tpu.dma_semaphore, #tpu.memory_space<semaphore_mem>>
    tpu.enqueue_dma source(%117 : memref<1x32xf32, #tpu.memory_space<any>>) target(%118 : memref<1x32xf32, #tpu.memory_space<vmem>>) target_semaphore(%120 : memref<!tpu.dma_semaphore, #tpu.memory_space<semaphore_mem>>)
    %c12_i32_81 = arith.constant 12 : i32
    %121 = arith.muli %0, %c12_i32_81 : i32
    %c7_i32_82 = arith.constant 7 : i32
    %122 = arith.addi %121, %c7_i32_82 : i32
    %123 = arith.index_cast %122 : i32 to index
    %124 = memref.load %arg2[%123] : memref<24xi32, #tpu.memory_space<smem>>
    %c7_i32_83 = arith.constant 7 : i32
    %c0_i32_84 = arith.constant 0 : i32
    %125 = tpu.memref_slice %arg5[%124, %c0_i32_84] : memref<50x32xf32, #tpu.memory_space<any>> -> memref<1x32xf32, #tpu.memory_space<any>>
    %c7_i32_85 = arith.constant 7 : i32
    %c0_i32_86 = arith.constant 0 : i32
    %126 = tpu.memref_slice %arg22[%c7_i32_85, %c0_i32_86] : memref<12x32xf32, #tpu.memory_space<vmem>> -> memref<1x32xf32, #tpu.memory_space<vmem>>
    %127 = tpu.memref_slice %arg24[%c7_i32_83] : memref<12x!tpu.dma_semaphore, #tpu.memory_space<semaphore_mem>> -> memref<1x!tpu.dma_semaphore, #tpu.memory_space<semaphore_mem>>
    %128 = tpu.memref_squeeze %127 : memref<1x!tpu.dma_semaphore, #tpu.memory_space<semaphore_mem>> -> memref<!tpu.dma_semaphore, #tpu.memory_space<semaphore_mem>>
    tpu.enqueue_dma source(%125 : memref<1x32xf32, #tpu.memory_space<any>>) target(%126 : memref<1x32xf32, #tpu.memory_space<vmem>>) target_semaphore(%128 : memref<!tpu.dma_semaphore, #tpu.memory_space<semaphore_mem>>)
    %c12_i32_87 = arith.constant 12 : i32
    %129 = arith.muli %0, %c12_i32_87 : i32
    %c8_i32_88 = arith.constant 8 : i32
    %130 = arith.addi %129, %c8_i32_88 : i32
    %131 = arith.index_cast %130 : i32 to index
    %132 = memref.load %arg2[%131] : memref<24xi32, #tpu.memory_space<smem>>
    %c8_i32_89 = arith.constant 8 : i32
    %c0_i32_90 = arith.constant 0 : i32
    %133 = tpu.memref_slice %arg5[%132, %c0_i32_90] : memref<50x32xf32, #tpu.memory_space<any>> -> memref<1x32xf32, #tpu.memory_space<any>>
    %c8_i32_91 = arith.constant 8 : i32
    %c0_i32_92 = arith.constant 0 : i32
    %134 = tpu.memref_slice %arg22[%c8_i32_91, %c0_i32_92] : memref<12x32xf32, #tpu.memory_space<vmem>> -> memref<1x32xf32, #tpu.memory_space<vmem>>
    %135 = tpu.memref_slice %arg24[%c8_i32_89] : memref<12x!tpu.dma_semaphore, #tpu.memory_space<semaphore_mem>> -> memref<1x!tpu.dma_semaphore, #tpu.memory_space<semaphore_mem>>
    %136 = tpu.memref_squeeze %135 : memref<1x!tpu.dma_semaphore, #tpu.memory_space<semaphore_mem>> -> memref<!tpu.dma_semaphore, #tpu.memory_space<semaphore_mem>>
    tpu.enqueue_dma source(%133 : memref<1x32xf32, #tpu.memory_space<any>>) target(%134 : memref<1x32xf32, #tpu.memory_space<vmem>>) target_semaphore(%136 : memref<!tpu.dma_semaphore, #tpu.memory_space<semaphore_mem>>)
    %c12_i32_93 = arith.constant 12 : i32
    %137 = arith.muli %0, %c12_i32_93 : i32
    %c9_i32 = arith.constant 9 : i32
    %138 = arith.addi %137, %c9_i32 : i32
    %139 = arith.index_cast %138 : i32 to index
    %140 = memref.load %arg2[%139] : memref<24xi32, #tpu.memory_space<smem>>
    %c9_i32_94 = arith.constant 9 : i32
    %c0_i32_95 = arith.constant 0 : i32
    %141 = tpu.memref_slice %arg5[%140, %c0_i32_95] : memref<50x32xf32, #tpu.memory_space<any>> -> memref<1x32xf32, #tpu.memory_space<any>>
    %c9_i32_96 = arith.constant 9 : i32
    %c0_i32_97 = arith.constant 0 : i32
    %142 = tpu.memref_slice %arg22[%c9_i32_96, %c0_i32_97] : memref<12x32xf32, #tpu.memory_space<vmem>> -> memref<1x32xf32, #tpu.memory_space<vmem>>
    %143 = tpu.memref_slice %arg24[%c9_i32_94] : memref<12x!tpu.dma_semaphore, #tpu.memory_space<semaphore_mem>> -> memref<1x!tpu.dma_semaphore, #tpu.memory_space<semaphore_mem>>
    %144 = tpu.memref_squeeze %143 : memref<1x!tpu.dma_semaphore, #tpu.memory_space<semaphore_mem>> -> memref<!tpu.dma_semaphore, #tpu.memory_space<semaphore_mem>>
    tpu.enqueue_dma source(%141 : memref<1x32xf32, #tpu.memory_space<any>>) target(%142 : memref<1x32xf32, #tpu.memory_space<vmem>>) target_semaphore(%144 : memref<!tpu.dma_semaphore, #tpu.memory_space<semaphore_mem>>)
    %c12_i32_98 = arith.constant 12 : i32
    %145 = arith.muli %0, %c12_i32_98 : i32
    %c10_i32 = arith.constant 10 : i32
    %146 = arith.addi %145, %c10_i32 : i32
    %147 = arith.index_cast %146 : i32 to index
    %148 = memref.load %arg2[%147] : memref<24xi32, #tpu.memory_space<smem>>
    %c10_i32_99 = arith.constant 10 : i32
    %c0_i32_100 = arith.constant 0 : i32
    %149 = tpu.memref_slice %arg5[%148, %c0_i32_100] : memref<50x32xf32, #tpu.memory_space<any>> -> memref<1x32xf32, #tpu.memory_space<any>>
    %c10_i32_101 = arith.constant 10 : i32
    %c0_i32_102 = arith.constant 0 : i32
    %150 = tpu.memref_slice %arg22[%c10_i32_101, %c0_i32_102] : memref<12x32xf32, #tpu.memory_space<vmem>> -> memref<1x32xf32, #tpu.memory_space<vmem>>
    %151 = tpu.memref_slice %arg24[%c10_i32_99] : memref<12x!tpu.dma_semaphore, #tpu.memory_space<semaphore_mem>> -> memref<1x!tpu.dma_semaphore, #tpu.memory_space<semaphore_mem>>
    %152 = tpu.memref_squeeze %151 : memref<1x!tpu.dma_semaphore, #tpu.memory_space<semaphore_mem>> -> memref<!tpu.dma_semaphore, #tpu.memory_space<semaphore_mem>>
    tpu.enqueue_dma source(%149 : memref<1x32xf32, #tpu.memory_space<any>>) target(%150 : memref<1x32xf32, #tpu.memory_space<vmem>>) target_semaphore(%152 : memref<!tpu.dma_semaphore, #tpu.memory_space<semaphore_mem>>)
    %c12_i32_103 = arith.constant 12 : i32
    %153 = arith.muli %0, %c12_i32_103 : i32
    %c11_i32 = arith.constant 11 : i32
    %154 = arith.addi %153, %c11_i32 : i32
    %155 = arith.index_cast %154 : i32 to index
    %156 = memref.load %arg2[%155] : memref<24xi32, #tpu.memory_space<smem>>
    %c11_i32_104 = arith.constant 11 : i32
    %c0_i32_105 = arith.constant 0 : i32
    %157 = tpu.memref_slice %arg5[%156, %c0_i32_105] : memref<50x32xf32, #tpu.memory_space<any>> -> memref<1x32xf32, #tpu.memory_space<any>>
    %c11_i32_106 = arith.constant 11 : i32
    %c0_i32_107 = arith.constant 0 : i32
    %158 = tpu.memref_slice %arg22[%c11_i32_106, %c0_i32_107] : memref<12x32xf32, #tpu.memory_space<vmem>> -> memref<1x32xf32, #tpu.memory_space<vmem>>
    %159 = tpu.memref_slice %arg24[%c11_i32_104] : memref<12x!tpu.dma_semaphore, #tpu.memory_space<semaphore_mem>> -> memref<1x!tpu.dma_semaphore, #tpu.memory_space<semaphore_mem>>
    %160 = tpu.memref_squeeze %159 : memref<1x!tpu.dma_semaphore, #tpu.memory_space<semaphore_mem>> -> memref<!tpu.dma_semaphore, #tpu.memory_space<semaphore_mem>>
    tpu.enqueue_dma source(%157 : memref<1x32xf32, #tpu.memory_space<any>>) target(%158 : memref<1x32xf32, #tpu.memory_space<vmem>>) target_semaphore(%160 : memref<!tpu.dma_semaphore, #tpu.memory_space<semaphore_mem>>)
    %c0_i32_108 = arith.constant 0 : i32
    %c0_i32_109 = arith.constant 0 : i32
    %c0_i32_110 = arith.constant 0 : i32
    %161 = tpu.memref_slice %arg4[%c0_i32_109, %c0_i32_110] : memref<50x32xf32, #tpu.memory_space<any>> -> memref<1x32xf32, #tpu.memory_space<any>>
    %c0_i32_111 = arith.constant 0 : i32
    %c0_i32_112 = arith.constant 0 : i32
    %162 = tpu.memref_slice %arg21[%c0_i32_111, %c0_i32_112] : memref<8x32xf32, #tpu.memory_space<vmem>> -> memref<1x32xf32, #tpu.memory_space<vmem>>
    %163 = tpu.memref_slice %arg23[%c0_i32_108] : memref<8x!tpu.dma_semaphore, #tpu.memory_space<semaphore_mem>> -> memref<1x!tpu.dma_semaphore, #tpu.memory_space<semaphore_mem>>
    %164 = tpu.memref_squeeze %163 : memref<1x!tpu.dma_semaphore, #tpu.memory_space<semaphore_mem>> -> memref<!tpu.dma_semaphore, #tpu.memory_space<semaphore_mem>>
    tpu.wait_dma2 semaphore(%164 : memref<!tpu.dma_semaphore, #tpu.memory_space<semaphore_mem>>) src(%161 : memref<1x32xf32, #tpu.memory_space<any>>) dst(%162 : memref<1x32xf32, #tpu.memory_space<vmem>>)
    %c1_i32_113 = arith.constant 1 : i32
    %c0_i32_114 = arith.constant 0 : i32
    %c0_i32_115 = arith.constant 0 : i32
    %165 = tpu.memref_slice %arg4[%c0_i32_114, %c0_i32_115] : memref<50x32xf32, #tpu.memory_space<any>> -> memref<1x32xf32, #tpu.memory_space<any>>
    %c1_i32_116 = arith.constant 1 : i32
    %c0_i32_117 = arith.constant 0 : i32
    %166 = tpu.memref_slice %arg21[%c1_i32_116, %c0_i32_117] : memref<8x32xf32, #tpu.memory_space<vmem>> -> memref<1x32xf32, #tpu.memory_space<vmem>>
    %167 = tpu.memref_slice %arg23[%c1_i32_113] : memref<8x!tpu.dma_semaphore, #tpu.memory_space<semaphore_mem>> -> memref<1x!tpu.dma_semaphore, #tpu.memory_space<semaphore_mem>>
    %168 = tpu.memref_squeeze %167 : memref<1x!tpu.dma_semaphore, #tpu.memory_space<semaphore_mem>> -> memref<!tpu.dma_semaphore, #tpu.memory_space<semaphore_mem>>
    tpu.wait_dma2 semaphore(%168 : memref<!tpu.dma_semaphore, #tpu.memory_space<semaphore_mem>>) src(%165 : memref<1x32xf32, #tpu.memory_space<any>>) dst(%166 : memref<1x32xf32, #tpu.memory_space<vmem>>)
    %c2_i32_118 = arith.constant 2 : i32
    %c0_i32_119 = arith.constant 0 : i32
    %c0_i32_120 = arith.constant 0 : i32
    %169 = tpu.memref_slice %arg4[%c0_i32_119, %c0_i32_120] : memref<50x32xf32, #tpu.memory_space<any>> -> memref<1x32xf32, #tpu.memory_space<any>>
    %c2_i32_121 = arith.constant 2 : i32
    %c0_i32_122 = arith.constant 0 : i32
    %170 = tpu.memref_slice %arg21[%c2_i32_121, %c0_i32_122] : memref<8x32xf32, #tpu.memory_space<vmem>> -> memref<1x32xf32, #tpu.memory_space<vmem>>
    %171 = tpu.memref_slice %arg23[%c2_i32_118] : memref<8x!tpu.dma_semaphore, #tpu.memory_space<semaphore_mem>> -> memref<1x!tpu.dma_semaphore, #tpu.memory_space<semaphore_mem>>
    %172 = tpu.memref_squeeze %171 : memref<1x!tpu.dma_semaphore, #tpu.memory_space<semaphore_mem>> -> memref<!tpu.dma_semaphore, #tpu.memory_space<semaphore_mem>>
    tpu.wait_dma2 semaphore(%172 : memref<!tpu.dma_semaphore, #tpu.memory_space<semaphore_mem>>) src(%169 : memref<1x32xf32, #tpu.memory_space<any>>) dst(%170 : memref<1x32xf32, #tpu.memory_space<vmem>>)
    %c3_i32_123 = arith.constant 3 : i32
    %c0_i32_124 = arith.constant 0 : i32
    %c0_i32_125 = arith.constant 0 : i32
    %173 = tpu.memref_slice %arg4[%c0_i32_124, %c0_i32_125] : memref<50x32xf32, #tpu.memory_space<any>> -> memref<1x32xf32, #tpu.memory_space<any>>
    %c3_i32_126 = arith.constant 3 : i32
    %c0_i32_127 = arith.constant 0 : i32
    %174 = tpu.memref_slice %arg21[%c3_i32_126, %c0_i32_127] : memref<8x32xf32, #tpu.memory_space<vmem>> -> memref<1x32xf32, #tpu.memory_space<vmem>>
    %175 = tpu.memref_slice %arg23[%c3_i32_123] : memref<8x!tpu.dma_semaphore, #tpu.memory_space<semaphore_mem>> -> memref<1x!tpu.dma_semaphore, #tpu.memory_space<semaphore_mem>>
    %176 = tpu.memref_squeeze %175 : memref<1x!tpu.dma_semaphore, #tpu.memory_space<semaphore_mem>> -> memref<!tpu.dma_semaphore, #tpu.memory_space<semaphore_mem>>
    tpu.wait_dma2 semaphore(%176 : memref<!tpu.dma_semaphore, #tpu.memory_space<semaphore_mem>>) src(%173 : memref<1x32xf32, #tpu.memory_space<any>>) dst(%174 : memref<1x32xf32, #tpu.memory_space<vmem>>)
    %c4_i32_128 = arith.constant 4 : i32
    %c0_i32_129 = arith.constant 0 : i32
    %c0_i32_130 = arith.constant 0 : i32
    %177 = tpu.memref_slice %arg4[%c0_i32_129, %c0_i32_130] : memref<50x32xf32, #tpu.memory_space<any>> -> memref<1x32xf32, #tpu.memory_space<any>>
    %c4_i32_131 = arith.constant 4 : i32
    %c0_i32_132 = arith.constant 0 : i32
    %178 = tpu.memref_slice %arg21[%c4_i32_131, %c0_i32_132] : memref<8x32xf32, #tpu.memory_space<vmem>> -> memref<1x32xf32, #tpu.memory_space<vmem>>
    %179 = tpu.memref_slice %arg23[%c4_i32_128] : memref<8x!tpu.dma_semaphore, #tpu.memory_space<semaphore_mem>> -> memref<1x!tpu.dma_semaphore, #tpu.memory_space<semaphore_mem>>
    %180 = tpu.memref_squeeze %179 : memref<1x!tpu.dma_semaphore, #tpu.memory_space<semaphore_mem>> -> memref<!tpu.dma_semaphore, #tpu.memory_space<semaphore_mem>>
    tpu.wait_dma2 semaphore(%180 : memref<!tpu.dma_semaphore, #tpu.memory_space<semaphore_mem>>) src(%177 : memref<1x32xf32, #tpu.memory_space<any>>) dst(%178 : memref<1x32xf32, #tpu.memory_space<vmem>>)
    %c5_i32_133 = arith.constant 5 : i32
    %c0_i32_134 = arith.constant 0 : i32
    %c0_i32_135 = arith.constant 0 : i32
    %181 = tpu.memref_slice %arg4[%c0_i32_134, %c0_i32_135] : memref<50x32xf32, #tpu.memory_space<any>> -> memref<1x32xf32, #tpu.memory_space<any>>
    %c5_i32_136 = arith.constant 5 : i32
    %c0_i32_137 = arith.constant 0 : i32
    %182 = tpu.memref_slice %arg21[%c5_i32_136, %c0_i32_137] : memref<8x32xf32, #tpu.memory_space<vmem>> -> memref<1x32xf32, #tpu.memory_space<vmem>>
    %183 = tpu.memref_slice %arg23[%c5_i32_133] : memref<8x!tpu.dma_semaphore, #tpu.memory_space<semaphore_mem>> -> memref<1x!tpu.dma_semaphore, #tpu.memory_space<semaphore_mem>>
    %184 = tpu.memref_squeeze %183 : memref<1x!tpu.dma_semaphore, #tpu.memory_space<semaphore_mem>> -> memref<!tpu.dma_semaphore, #tpu.memory_space<semaphore_mem>>
    tpu.wait_dma2 semaphore(%184 : memref<!tpu.dma_semaphore, #tpu.memory_space<semaphore_mem>>) src(%181 : memref<1x32xf32, #tpu.memory_space<any>>) dst(%182 : memref<1x32xf32, #tpu.memory_space<vmem>>)
    %c6_i32_138 = arith.constant 6 : i32
    %c0_i32_139 = arith.constant 0 : i32
    %c0_i32_140 = arith.constant 0 : i32
    %185 = tpu.memref_slice %arg4[%c0_i32_139, %c0_i32_140] : memref<50x32xf32, #tpu.memory_space<any>> -> memref<1x32xf32, #tpu.memory_space<any>>
    %c6_i32_141 = arith.constant 6 : i32
    %c0_i32_142 = arith.constant 0 : i32
    %186 = tpu.memref_slice %arg21[%c6_i32_141, %c0_i32_142] : memref<8x32xf32, #tpu.memory_space<vmem>> -> memref<1x32xf32, #tpu.memory_space<vmem>>
    %187 = tpu.memref_slice %arg23[%c6_i32_138] : memref<8x!tpu.dma_semaphore, #tpu.memory_space<semaphore_mem>> -> memref<1x!tpu.dma_semaphore, #tpu.memory_space<semaphore_mem>>
    %188 = tpu.memref_squeeze %187 : memref<1x!tpu.dma_semaphore, #tpu.memory_space<semaphore_mem>> -> memref<!tpu.dma_semaphore, #tpu.memory_space<semaphore_mem>>
    tpu.wait_dma2 semaphore(%188 : memref<!tpu.dma_semaphore, #tpu.memory_space<semaphore_mem>>) src(%185 : memref<1x32xf32, #tpu.memory_space<any>>) dst(%186 : memref<1x32xf32, #tpu.memory_space<vmem>>)
    %c7_i32_143 = arith.constant 7 : i32
    %c0_i32_144 = arith.constant 0 : i32
    %c0_i32_145 = arith.constant 0 : i32
    %189 = tpu.memref_slice %arg4[%c0_i32_144, %c0_i32_145] : memref<50x32xf32, #tpu.memory_space<any>> -> memref<1x32xf32, #tpu.memory_space<any>>
    %c7_i32_146 = arith.constant 7 : i32
    %c0_i32_147 = arith.constant 0 : i32
    %190 = tpu.memref_slice %arg21[%c7_i32_146, %c0_i32_147] : memref<8x32xf32, #tpu.memory_space<vmem>> -> memref<1x32xf32, #tpu.memory_space<vmem>>
    %191 = tpu.memref_slice %arg23[%c7_i32_143] : memref<8x!tpu.dma_semaphore, #tpu.memory_space<semaphore_mem>> -> memref<1x!tpu.dma_semaphore, #tpu.memory_space<semaphore_mem>>
    %192 = tpu.memref_squeeze %191 : memref<1x!tpu.dma_semaphore, #tpu.memory_space<semaphore_mem>> -> memref<!tpu.dma_semaphore, #tpu.memory_space<semaphore_mem>>
    tpu.wait_dma2 semaphore(%192 : memref<!tpu.dma_semaphore, #tpu.memory_space<semaphore_mem>>) src(%189 : memref<1x32xf32, #tpu.memory_space<any>>) dst(%190 : memref<1x32xf32, #tpu.memory_space<vmem>>)
    %c0 = arith.constant 0 : index
    %c0_148 = arith.constant 0 : index
    %193 = vector.load %arg21[%c0, %c0_148] : memref<8x32xf32, #tpu.memory_space<vmem>>, vector<8x32xf32>
    %194 = vector.shape_cast %193 : vector<8x32xf32> to vector<1x8x32xf32>
    %195 = vector.extract_strided_slice %194 {offsets = [0, 0, 0], sizes = [1, 7, 32], strides = [1, 1, 1]} : vector<1x8x32xf32> to vector<1x7x32xf32>
    %196 = vector.shape_cast %195 : vector<1x7x32xf32> to vector<7x32xf32>
    %197 = arith.truncf %196 : vector<7x32xf32> to vector<7x32xbf16>
    %198 = vector.extract_strided_slice %194 {offsets = [0, 1, 0], sizes = [1, 7, 32], strides = [1, 1, 1]} : vector<1x8x32xf32> to vector<1x7x32xf32>
    %199 = vector.shape_cast %198 : vector<1x7x32xf32> to vector<7x32xf32>
    %200 = arith.truncf %199 : vector<7x32xf32> to vector<7x32xbf16>
    %c0_149 = arith.constant 0 : index
    %c0_150 = arith.constant 0 : index
    %201 = vector.load %arg6[%c0_149, %c0_150] : memref<64x32xbf16, #tpu.memory_space<vmem>>, vector<32x32xbf16>
    %cst = arith.constant dense<0.000000e+00> : vector<7x32xf32>
    %202 = tpu.matmul %197, %201, %cst {dimension_numbers = #tpu.dot_dimension_numbers<[1], [0], [0], [1], [0, 0, 1, 1], [], []>} : vector<7x32xbf16>, vector<32x32xbf16>, vector<7x32xf32> -> vector<7x32xf32>
    %c32 = arith.constant 32 : index
    %c0_151 = arith.constant 0 : index
    %203 = vector.load %arg6[%c32, %c0_151] : memref<64x32xbf16, #tpu.memory_space<vmem>>, vector<32x32xbf16>
    %cst_152 = arith.constant dense<0.000000e+00> : vector<7x32xf32>
    %204 = tpu.matmul %200, %203, %cst_152 {dimension_numbers = #tpu.dot_dimension_numbers<[1], [0], [0], [1], [0, 0, 1, 1], [], []>} : vector<7x32xbf16>, vector<32x32xbf16>, vector<7x32xf32> -> vector<7x32xf32>
    %205 = arith.addf %202, %204 : vector<7x32xf32>
    %c0_153 = arith.constant 0 : index
    %c0_154 = arith.constant 0 : index
    %206 = vector.load %arg7[%c0_153, %c0_154] : memref<1x32xf32, #tpu.memory_space<vmem>>, vector<1x32xf32>
    %207 = vector.broadcast %206 : vector<1x32xf32> to vector<7x32xf32>
    %208 = arith.addf %205, %207 : vector<7x32xf32>
    %cst_155 = arith.constant 0.000000e+00 : f32
    %209 = vector.broadcast %cst_155 : f32 to vector<7x32xf32>
    %210 = arith.maximumf %208, %209 : vector<7x32xf32>
    %211 = vector.shape_cast %210 : vector<7x32xf32> to vector<1x7x32xf32>
    %212 = vector.extract_strided_slice %211 {offsets = [0, 0, 0], sizes = [1, 6, 32], strides = [1, 1, 1]} : vector<1x7x32xf32> to vector<1x6x32xf32>
    %213 = vector.shape_cast %212 : vector<1x6x32xf32> to vector<6x32xf32>
    %214 = arith.truncf %213 : vector<6x32xf32> to vector<6x32xbf16>
    %215 = vector.extract_strided_slice %211 {offsets = [0, 1, 0], sizes = [1, 6, 32], strides = [1, 1, 1]} : vector<1x7x32xf32> to vector<1x6x32xf32>
    %216 = vector.shape_cast %215 : vector<1x6x32xf32> to vector<6x32xf32>
    %217 = arith.truncf %216 : vector<6x32xf32> to vector<6x32xbf16>
    %c0_156 = arith.constant 0 : index
    %c0_157 = arith.constant 0 : index
    %218 = vector.load %arg8[%c0_156, %c0_157] : memref<64x32xbf16, #tpu.memory_space<vmem>>, vector<32x32xbf16>
    %cst_158 = arith.constant dense<0.000000e+00> : vector<6x32xf32>
    %219 = tpu.matmul %214, %218, %cst_158 {dimension_numbers = #tpu.dot_dimension_numbers<[1], [0], [0], [1], [0, 0, 1, 1], [], []>} : vector<6x32xbf16>, vector<32x32xbf16>, vector<6x32xf32> -> vector<6x32xf32>
    %c32_159 = arith.constant 32 : index
    %c0_160 = arith.constant 0 : index
    %220 = vector.load %arg8[%c32_159, %c0_160] : memref<64x32xbf16, #tpu.memory_space<vmem>>, vector<32x32xbf16>
    %cst_161 = arith.constant dense<0.000000e+00> : vector<6x32xf32>
    %221 = tpu.matmul %217, %220, %cst_161 {dimension_numbers = #tpu.dot_dimension_numbers<[1], [0], [0], [1], [0, 0, 1, 1], [], []>} : vector<6x32xbf16>, vector<32x32xbf16>, vector<6x32xf32> -> vector<6x32xf32>
    %222 = arith.addf %219, %221 : vector<6x32xf32>
    %c0_162 = arith.constant 0 : index
    %c0_163 = arith.constant 0 : index
    %223 = vector.load %arg9[%c0_162, %c0_163] : memref<1x32xf32, #tpu.memory_space<vmem>>, vector<1x32xf32>
    %224 = vector.broadcast %223 : vector<1x32xf32> to vector<6x32xf32>
    %225 = arith.addf %222, %224 : vector<6x32xf32>
    %cst_164 = arith.constant 0.000000e+00 : f32
    %226 = vector.broadcast %cst_164 : f32 to vector<6x32xf32>
    %227 = arith.maximumf %225, %226 : vector<6x32xf32>
    %228 = vector.shape_cast %227 : vector<6x32xf32> to vector<1x6x32xf32>
    %cst_165 = arith.constant dense<0.000000e+00> : vector<1x32xf32>
    %229 = vector.multi_reduction <add>, %228, %cst_165 [1] : vector<1x6x32xf32> to vector<1x32xf32>
    %cst_166 = arith.constant 6.000000e+00 : f32
    %230 = vector.broadcast %cst_166 : f32 to vector<1x32xf32>
    %231 = arith.divf %229, %230 : vector<1x32xf32>
    %c0_i32_167 = arith.constant 0 : i32
    %c0_i32_168 = arith.constant 0 : i32
    %c0_i32_169 = arith.constant 0 : i32
    %232 = tpu.memref_slice %arg5[%c0_i32_168, %c0_i32_169] : memref<50x32xf32, #tpu.memory_space<any>> -> memref<1x32xf32, #tpu.memory_space<any>>
    %c0_i32_170 = arith.constant 0 : i32
    %c0_i32_171 = arith.constant 0 : i32
    %233 = tpu.memref_slice %arg22[%c0_i32_170, %c0_i32_171] : memref<12x32xf32, #tpu.memory_space<vmem>> -> memref<1x32xf32, #tpu.memory_space<vmem>>
    %234 = tpu.memref_slice %arg24[%c0_i32_167] : memref<12x!tpu.dma_semaphore, #tpu.memory_space<semaphore_mem>> -> memref<1x!tpu.dma_semaphore, #tpu.memory_space<semaphore_mem>>
    %235 = tpu.memref_squeeze %234 : memref<1x!tpu.dma_semaphore, #tpu.memory_space<semaphore_mem>> -> memref<!tpu.dma_semaphore, #tpu.memory_space<semaphore_mem>>
    tpu.wait_dma2 semaphore(%235 : memref<!tpu.dma_semaphore, #tpu.memory_space<semaphore_mem>>) src(%232 : memref<1x32xf32, #tpu.memory_space<any>>) dst(%233 : memref<1x32xf32, #tpu.memory_space<vmem>>)
    %c1_i32_172 = arith.constant 1 : i32
    %c0_i32_173 = arith.constant 0 : i32
    %c0_i32_174 = arith.constant 0 : i32
    %236 = tpu.memref_slice %arg5[%c0_i32_173, %c0_i32_174] : memref<50x32xf32, #tpu.memory_space<any>> -> memref<1x32xf32, #tpu.memory_space<any>>
    %c1_i32_175 = arith.constant 1 : i32
    %c0_i32_176 = arith.constant 0 : i32
    %237 = tpu.memref_slice %arg22[%c1_i32_175, %c0_i32_176] : memref<12x32xf32, #tpu.memory_space<vmem>> -> memref<1x32xf32, #tpu.memory_space<vmem>>
    %238 = tpu.memref_slice %arg24[%c1_i32_172] : memref<12x!tpu.dma_semaphore, #tpu.memory_space<semaphore_mem>> -> memref<1x!tpu.dma_semaphore, #tpu.memory_space<semaphore_mem>>
    %239 = tpu.memref_squeeze %238 : memref<1x!tpu.dma_semaphore, #tpu.memory_space<semaphore_mem>> -> memref<!tpu.dma_semaphore, #tpu.memory_space<semaphore_mem>>
    tpu.wait_dma2 semaphore(%239 : memref<!tpu.dma_semaphore, #tpu.memory_space<semaphore_mem>>) src(%236 : memref<1x32xf32, #tpu.memory_space<any>>) dst(%237 : memref<1x32xf32, #tpu.memory_space<vmem>>)
    %c2_i32_177 = arith.constant 2 : i32
    %c0_i32_178 = arith.constant 0 : i32
    %c0_i32_179 = arith.constant 0 : i32
    %240 = tpu.memref_slice %arg5[%c0_i32_178, %c0_i32_179] : memref<50x32xf32, #tpu.memory_space<any>> -> memref<1x32xf32, #tpu.memory_space<any>>
    %c2_i32_180 = arith.constant 2 : i32
    %c0_i32_181 = arith.constant 0 : i32
    %241 = tpu.memref_slice %arg22[%c2_i32_180, %c0_i32_181] : memref<12x32xf32, #tpu.memory_space<vmem>> -> memref<1x32xf32, #tpu.memory_space<vmem>>
    %242 = tpu.memref_slice %arg24[%c2_i32_177] : memref<12x!tpu.dma_semaphore, #tpu.memory_space<semaphore_mem>> -> memref<1x!tpu.dma_semaphore, #tpu.memory_space<semaphore_mem>>
    %243 = tpu.memref_squeeze %242 : memref<1x!tpu.dma_semaphore, #tpu.memory_space<semaphore_mem>> -> memref<!tpu.dma_semaphore, #tpu.memory_space<semaphore_mem>>
    tpu.wait_dma2 semaphore(%243 : memref<!tpu.dma_semaphore, #tpu.memory_space<semaphore_mem>>) src(%240 : memref<1x32xf32, #tpu.memory_space<any>>) dst(%241 : memref<1x32xf32, #tpu.memory_space<vmem>>)
    %c3_i32_182 = arith.constant 3 : i32
    %c0_i32_183 = arith.constant 0 : i32
    %c0_i32_184 = arith.constant 0 : i32
    %244 = tpu.memref_slice %arg5[%c0_i32_183, %c0_i32_184] : memref<50x32xf32, #tpu.memory_space<any>> -> memref<1x32xf32, #tpu.memory_space<any>>
    %c3_i32_185 = arith.constant 3 : i32
    %c0_i32_186 = arith.constant 0 : i32
    %245 = tpu.memref_slice %arg22[%c3_i32_185, %c0_i32_186] : memref<12x32xf32, #tpu.memory_space<vmem>> -> memref<1x32xf32, #tpu.memory_space<vmem>>
    %246 = tpu.memref_slice %arg24[%c3_i32_182] : memref<12x!tpu.dma_semaphore, #tpu.memory_space<semaphore_mem>> -> memref<1x!tpu.dma_semaphore, #tpu.memory_space<semaphore_mem>>
    %247 = tpu.memref_squeeze %246 : memref<1x!tpu.dma_semaphore, #tpu.memory_space<semaphore_mem>> -> memref<!tpu.dma_semaphore, #tpu.memory_space<semaphore_mem>>
    tpu.wait_dma2 semaphore(%247 : memref<!tpu.dma_semaphore, #tpu.memory_space<semaphore_mem>>) src(%244 : memref<1x32xf32, #tpu.memory_space<any>>) dst(%245 : memref<1x32xf32, #tpu.memory_space<vmem>>)
    %c4_i32_187 = arith.constant 4 : i32
    %c0_i32_188 = arith.constant 0 : i32
    %c0_i32_189 = arith.constant 0 : i32
    %248 = tpu.memref_slice %arg5[%c0_i32_188, %c0_i32_189] : memref<50x32xf32, #tpu.memory_space<any>> -> memref<1x32xf32, #tpu.memory_space<any>>
    %c4_i32_190 = arith.constant 4 : i32
    %c0_i32_191 = arith.constant 0 : i32
    %249 = tpu.memref_slice %arg22[%c4_i32_190, %c0_i32_191] : memref<12x32xf32, #tpu.memory_space<vmem>> -> memref<1x32xf32, #tpu.memory_space<vmem>>
    %250 = tpu.memref_slice %arg24[%c4_i32_187] : memref<12x!tpu.dma_semaphore, #tpu.memory_space<semaphore_mem>> -> memref<1x!tpu.dma_semaphore, #tpu.memory_space<semaphore_mem>>
    %251 = tpu.memref_squeeze %250 : memref<1x!tpu.dma_semaphore, #tpu.memory_space<semaphore_mem>> -> memref<!tpu.dma_semaphore, #tpu.memory_space<semaphore_mem>>
    tpu.wait_dma2 semaphore(%251 : memref<!tpu.dma_semaphore, #tpu.memory_space<semaphore_mem>>) src(%248 : memref<1x32xf32, #tpu.memory_space<any>>) dst(%249 : memref<1x32xf32, #tpu.memory_space<vmem>>)
    %c5_i32_192 = arith.constant 5 : i32
    %c0_i32_193 = arith.constant 0 : i32
    %c0_i32_194 = arith.constant 0 : i32
    %252 = tpu.memref_slice %arg5[%c0_i32_193, %c0_i32_194] : memref<50x32xf32, #tpu.memory_space<any>> -> memref<1x32xf32, #tpu.memory_space<any>>
    %c5_i32_195 = arith.constant 5 : i32
    %c0_i32_196 = arith.constant 0 : i32
    %253 = tpu.memref_slice %arg22[%c5_i32_195, %c0_i32_196] : memref<12x32xf32, #tpu.memory_space<vmem>> -> memref<1x32xf32, #tpu.memory_space<vmem>>
    %254 = tpu.memref_slice %arg24[%c5_i32_192] : memref<12x!tpu.dma_semaphore, #tpu.memory_space<semaphore_mem>> -> memref<1x!tpu.dma_semaphore, #tpu.memory_space<semaphore_mem>>
    %255 = tpu.memref_squeeze %254 : memref<1x!tpu.dma_semaphore, #tpu.memory_space<semaphore_mem>> -> memref<!tpu.dma_semaphore, #tpu.memory_space<semaphore_mem>>
    tpu.wait_dma2 semaphore(%255 : memref<!tpu.dma_semaphore, #tpu.memory_space<semaphore_mem>>) src(%252 : memref<1x32xf32, #tpu.memory_space<any>>) dst(%253 : memref<1x32xf32, #tpu.memory_space<vmem>>)
    %c6_i32_197 = arith.constant 6 : i32
    %c0_i32_198 = arith.constant 0 : i32
    %c0_i32_199 = arith.constant 0 : i32
    %256 = tpu.memref_slice %arg5[%c0_i32_198, %c0_i32_199] : memref<50x32xf32, #tpu.memory_space<any>> -> memref<1x32xf32, #tpu.memory_space<any>>
    %c6_i32_200 = arith.constant 6 : i32
    %c0_i32_201 = arith.constant 0 : i32
    %257 = tpu.memref_slice %arg22[%c6_i32_200, %c0_i32_201] : memref<12x32xf32, #tpu.memory_space<vmem>> -> memref<1x32xf32, #tpu.memory_space<vmem>>
    %258 = tpu.memref_slice %arg24[%c6_i32_197] : memref<12x!tpu.dma_semaphore, #tpu.memory_space<semaphore_mem>> -> memref<1x!tpu.dma_semaphore, #tpu.memory_space<semaphore_mem>>
    %259 = tpu.memref_squeeze %258 : memref<1x!tpu.dma_semaphore, #tpu.memory_space<semaphore_mem>> -> memref<!tpu.dma_semaphore, #tpu.memory_space<semaphore_mem>>
    tpu.wait_dma2 semaphore(%259 : memref<!tpu.dma_semaphore, #tpu.memory_space<semaphore_mem>>) src(%256 : memref<1x32xf32, #tpu.memory_space<any>>) dst(%257 : memref<1x32xf32, #tpu.memory_space<vmem>>)
    %c7_i32_202 = arith.constant 7 : i32
    %c0_i32_203 = arith.constant 0 : i32
    %c0_i32_204 = arith.constant 0 : i32
    %260 = tpu.memref_slice %arg5[%c0_i32_203, %c0_i32_204] : memref<50x32xf32, #tpu.memory_space<any>> -> memref<1x32xf32, #tpu.memory_space<any>>
    %c7_i32_205 = arith.constant 7 : i32
    %c0_i32_206 = arith.constant 0 : i32
    %261 = tpu.memref_slice %arg22[%c7_i32_205, %c0_i32_206] : memref<12x32xf32, #tpu.memory_space<vmem>> -> memref<1x32xf32, #tpu.memory_space<vmem>>
    %262 = tpu.memref_slice %arg24[%c7_i32_202] : memref<12x!tpu.dma_semaphore, #tpu.memory_space<semaphore_mem>> -> memref<1x!tpu.dma_semaphore, #tpu.memory_space<semaphore_mem>>
    %263 = tpu.memref_squeeze %262 : memref<1x!tpu.dma_semaphore, #tpu.memory_space<semaphore_mem>> -> memref<!tpu.dma_semaphore, #tpu.memory_space<semaphore_mem>>
    tpu.wait_dma2 semaphore(%263 : memref<!tpu.dma_semaphore, #tpu.memory_space<semaphore_mem>>) src(%260 : memref<1x32xf32, #tpu.memory_space<any>>) dst(%261 : memref<1x32xf32, #tpu.memory_space<vmem>>)
    %c8_i32_207 = arith.constant 8 : i32
    %c0_i32_208 = arith.constant 0 : i32
    %c0_i32_209 = arith.constant 0 : i32
    %264 = tpu.memref_slice %arg5[%c0_i32_208, %c0_i32_209] : memref<50x32xf32, #tpu.memory_space<any>> -> memref<1x32xf32, #tpu.memory_space<any>>
    %c8_i32_210 = arith.constant 8 : i32
    %c0_i32_211 = arith.constant 0 : i32
    %265 = tpu.memref_slice %arg22[%c8_i32_210, %c0_i32_211] : memref<12x32xf32, #tpu.memory_space<vmem>> -> memref<1x32xf32, #tpu.memory_space<vmem>>
    %266 = tpu.memref_slice %arg24[%c8_i32_207] : memref<12x!tpu.dma_semaphore, #tpu.memory_space<semaphore_mem>> -> memref<1x!tpu.dma_semaphore, #tpu.memory_space<semaphore_mem>>
    %267 = tpu.memref_squeeze %266 : memref<1x!tpu.dma_semaphore, #tpu.memory_space<semaphore_mem>> -> memref<!tpu.dma_semaphore, #tpu.memory_space<semaphore_mem>>
    tpu.wait_dma2 semaphore(%267 : memref<!tpu.dma_semaphore, #tpu.memory_space<semaphore_mem>>) src(%264 : memref<1x32xf32, #tpu.memory_space<any>>) dst(%265 : memref<1x32xf32, #tpu.memory_space<vmem>>)
    %c9_i32_212 = arith.constant 9 : i32
    %c0_i32_213 = arith.constant 0 : i32
    %c0_i32_214 = arith.constant 0 : i32
    %268 = tpu.memref_slice %arg5[%c0_i32_213, %c0_i32_214] : memref<50x32xf32, #tpu.memory_space<any>> -> memref<1x32xf32, #tpu.memory_space<any>>
    %c9_i32_215 = arith.constant 9 : i32
    %c0_i32_216 = arith.constant 0 : i32
    %269 = tpu.memref_slice %arg22[%c9_i32_215, %c0_i32_216] : memref<12x32xf32, #tpu.memory_space<vmem>> -> memref<1x32xf32, #tpu.memory_space<vmem>>
    %270 = tpu.memref_slice %arg24[%c9_i32_212] : memref<12x!tpu.dma_semaphore, #tpu.memory_space<semaphore_mem>> -> memref<1x!tpu.dma_semaphore, #tpu.memory_space<semaphore_mem>>
    %271 = tpu.memref_squeeze %270 : memref<1x!tpu.dma_semaphore, #tpu.memory_space<semaphore_mem>> -> memref<!tpu.dma_semaphore, #tpu.memory_space<semaphore_mem>>
    tpu.wait_dma2 semaphore(%271 : memref<!tpu.dma_semaphore, #tpu.memory_space<semaphore_mem>>) src(%268 : memref<1x32xf32, #tpu.memory_space<any>>) dst(%269 : memref<1x32xf32, #tpu.memory_space<vmem>>)
    %c10_i32_217 = arith.constant 10 : i32
    %c0_i32_218 = arith.constant 0 : i32
    %c0_i32_219 = arith.constant 0 : i32
    %272 = tpu.memref_slice %arg5[%c0_i32_218, %c0_i32_219] : memref<50x32xf32, #tpu.memory_space<any>> -> memref<1x32xf32, #tpu.memory_space<any>>
    %c10_i32_220 = arith.constant 10 : i32
    %c0_i32_221 = arith.constant 0 : i32
    %273 = tpu.memref_slice %arg22[%c10_i32_220, %c0_i32_221] : memref<12x32xf32, #tpu.memory_space<vmem>> -> memref<1x32xf32, #tpu.memory_space<vmem>>
    %274 = tpu.memref_slice %arg24[%c10_i32_217] : memref<12x!tpu.dma_semaphore, #tpu.memory_space<semaphore_mem>> -> memref<1x!tpu.dma_semaphore, #tpu.memory_space<semaphore_mem>>
    %275 = tpu.memref_squeeze %274 : memref<1x!tpu.dma_semaphore, #tpu.memory_space<semaphore_mem>> -> memref<!tpu.dma_semaphore, #tpu.memory_space<semaphore_mem>>
    tpu.wait_dma2 semaphore(%275 : memref<!tpu.dma_semaphore, #tpu.memory_space<semaphore_mem>>) src(%272 : memref<1x32xf32, #tpu.memory_space<any>>) dst(%273 : memref<1x32xf32, #tpu.memory_space<vmem>>)
    %c11_i32_222 = arith.constant 11 : i32
    %c0_i32_223 = arith.constant 0 : i32
    %c0_i32_224 = arith.constant 0 : i32
    %276 = tpu.memref_slice %arg5[%c0_i32_223, %c0_i32_224] : memref<50x32xf32, #tpu.memory_space<any>> -> memref<1x32xf32, #tpu.memory_space<any>>
    %c11_i32_225 = arith.constant 11 : i32
    %c0_i32_226 = arith.constant 0 : i32
    %277 = tpu.memref_slice %arg22[%c11_i32_225, %c0_i32_226] : memref<12x32xf32, #tpu.memory_space<vmem>> -> memref<1x32xf32, #tpu.memory_space<vmem>>
    %278 = tpu.memref_slice %arg24[%c11_i32_222] : memref<12x!tpu.dma_semaphore, #tpu.memory_space<semaphore_mem>> -> memref<1x!tpu.dma_semaphore, #tpu.memory_space<semaphore_mem>>
    %279 = tpu.memref_squeeze %278 : memref<1x!tpu.dma_semaphore, #tpu.memory_space<semaphore_mem>> -> memref<!tpu.dma_semaphore, #tpu.memory_space<semaphore_mem>>
    tpu.wait_dma2 semaphore(%279 : memref<!tpu.dma_semaphore, #tpu.memory_space<semaphore_mem>>) src(%276 : memref<1x32xf32, #tpu.memory_space<any>>) dst(%277 : memref<1x32xf32, #tpu.memory_space<vmem>>)
    %c0_227 = arith.constant 0 : index
    %c0_228 = arith.constant 0 : index
    %280 = vector.load %arg22[%c0_227, %c0_228] : memref<12x32xf32, #tpu.memory_space<vmem>>, vector<12x32xf32>
    %281 = vector.shape_cast %280 : vector<12x32xf32> to vector<1x12x32xf32>
    %282 = vector.extract_strided_slice %281 {offsets = [0, 0, 0], sizes = [1, 11, 32], strides = [1, 1, 1]} : vector<1x12x32xf32> to vector<1x11x32xf32>
    %283 = vector.shape_cast %282 : vector<1x11x32xf32> to vector<11x32xf32>
    %284 = arith.truncf %283 : vector<11x32xf32> to vector<11x32xbf16>
    %285 = vector.extract_strided_slice %281 {offsets = [0, 1, 0], sizes = [1, 11, 32], strides = [1, 1, 1]} : vector<1x12x32xf32> to vector<1x11x32xf32>
    %286 = vector.shape_cast %285 : vector<1x11x32xf32> to vector<11x32xf32>
    %287 = arith.truncf %286 : vector<11x32xf32> to vector<11x32xbf16>
    %c0_229 = arith.constant 0 : index
    %c0_230 = arith.constant 0 : index
    %288 = vector.load %arg10[%c0_229, %c0_230] : memref<64x32xbf16, #tpu.memory_space<vmem>>, vector<32x32xbf16>
    %cst_231 = arith.constant dense<0.000000e+00> : vector<11x32xf32>
    %289 = tpu.matmul %284, %288, %cst_231 {dimension_numbers = #tpu.dot_dimension_numbers<[1], [0], [0], [1], [0, 0, 1, 1], [], []>} : vector<11x32xbf16>, vector<32x32xbf16>, vector<11x32xf32> -> vector<11x32xf32>
    %c32_232 = arith.constant 32 : index
    %c0_233 = arith.constant 0 : index
    %290 = vector.load %arg10[%c32_232, %c0_233] : memref<64x32xbf16, #tpu.memory_space<vmem>>, vector<32x32xbf16>
    %cst_234 = arith.constant dense<0.000000e+00> : vector<11x32xf32>
    %291 = tpu.matmul %287, %290, %cst_234 {dimension_numbers = #tpu.dot_dimension_numbers<[1], [0], [0], [1], [0, 0, 1, 1], [], []>} : vector<11x32xbf16>, vector<32x32xbf16>, vector<11x32xf32> -> vector<11x32xf32>
    %292 = arith.addf %289, %291 : vector<11x32xf32>
    %c0_235 = arith.constant 0 : index
    %c0_236 = arith.constant 0 : index
    %293 = vector.load %arg11[%c0_235, %c0_236] : memref<1x32xf32, #tpu.memory_space<vmem>>, vector<1x32xf32>
    %294 = vector.broadcast %293 : vector<1x32xf32> to vector<11x32xf32>
    %295 = arith.addf %292, %294 : vector<11x32xf32>
    %cst_237 = arith.constant 0.000000e+00 : f32
    %296 = vector.broadcast %cst_237 : f32 to vector<11x32xf32>
    %297 = arith.maximumf %295, %296 : vector<11x32xf32>
    %298 = vector.shape_cast %297 : vector<11x32xf32> to vector<1x11x32xf32>
    %299 = vector.extract_strided_slice %298 {offsets = [0, 0, 0], sizes = [1, 10, 32], strides = [1, 1, 1]} : vector<1x11x32xf32> to vector<1x10x32xf32>
    %300 = vector.shape_cast %299 : vector<1x10x32xf32> to vector<10x32xf32>
    %301 = arith.truncf %300 : vector<10x32xf32> to vector<10x32xbf16>
    %302 = vector.extract_strided_slice %298 {offsets = [0, 1, 0], sizes = [1, 10, 32], strides = [1, 1, 1]} : vector<1x11x32xf32> to vector<1x10x32xf32>
    %303 = vector.shape_cast %302 : vector<1x10x32xf32> to vector<10x32xf32>
    %304 = arith.truncf %303 : vector<10x32xf32> to vector<10x32xbf16>
    %c0_238 = arith.constant 0 : index
    %c0_239 = arith.constant 0 : index
    %305 = vector.load %arg12[%c0_238, %c0_239] : memref<64x32xbf16, #tpu.memory_space<vmem>>, vector<32x32xbf16>
    %cst_240 = arith.constant dense<0.000000e+00> : vector<10x32xf32>
    %306 = tpu.matmul %301, %305, %cst_240 {dimension_numbers = #tpu.dot_dimension_numbers<[1], [0], [0], [1], [0, 0, 1, 1], [], []>} : vector<10x32xbf16>, vector<32x32xbf16>, vector<10x32xf32> -> vector<10x32xf32>
    %c32_241 = arith.constant 32 : index
    %c0_242 = arith.constant 0 : index
    %307 = vector.load %arg12[%c32_241, %c0_242] : memref<64x32xbf16, #tpu.memory_space<vmem>>, vector<32x32xbf16>
    %cst_243 = arith.constant dense<0.000000e+00> : vector<10x32xf32>
    %308 = tpu.matmul %304, %307, %cst_243 {dimension_numbers = #tpu.dot_dimension_numbers<[1], [0], [0], [1], [0, 0, 1, 1], [], []>} : vector<10x32xbf16>, vector<32x32xbf16>, vector<10x32xf32> -> vector<10x32xf32>
    %309 = arith.addf %306, %308 : vector<10x32xf32>
    %c0_244 = arith.constant 0 : index
    %c0_245 = arith.constant 0 : index
    %310 = vector.load %arg13[%c0_244, %c0_245] : memref<1x32xf32, #tpu.memory_space<vmem>>, vector<1x32xf32>
    %311 = vector.broadcast %310 : vector<1x32xf32> to vector<10x32xf32>
    %312 = arith.addf %309, %311 : vector<10x32xf32>
    %cst_246 = arith.constant 0.000000e+00 : f32
    %313 = vector.broadcast %cst_246 : f32 to vector<10x32xf32>
    %314 = arith.maximumf %312, %313 : vector<10x32xf32>
    %315 = vector.shape_cast %314 : vector<10x32xf32> to vector<1x10x32xf32>
    %cst_247 = arith.constant dense<0.000000e+00> : vector<1x32xf32>
    %316 = vector.multi_reduction <add>, %315, %cst_247 [1] : vector<1x10x32xf32> to vector<1x32xf32>
    %cst_248 = arith.constant 1.000000e+01 : f32
    %317 = vector.broadcast %cst_248 : f32 to vector<1x32xf32>
    %318 = arith.divf %316, %317 : vector<1x32xf32>
    %c0_249 = arith.constant 0 : index
    %c0_250 = arith.constant 0 : index
    %c0_251 = arith.constant 0 : index
    %319 = vector.load %arg3[%c0_249, %c0_250, %c0_251] : memref<1x1x16xbf16, #tpu.memory_space<vmem>>, vector<1x1x16xbf16>
    %320 = vector.shape_cast %319 : vector<1x1x16xbf16> to vector<1x16xbf16>
    %c0_252 = arith.constant 0 : index
    %c0_253 = arith.constant 0 : index
    %321 = vector.load %arg14[%c0_252, %c0_253] : memref<16x32xbf16, #tpu.memory_space<vmem>>, vector<16x32xbf16>
    %cst_254 = arith.constant dense<0.000000e+00> : vector<1x32xf32>
    %322 = tpu.matmul %320, %321, %cst_254 {dimension_numbers = #tpu.dot_dimension_numbers<[1], [0], [0], [1], [0, 0, 1, 1], [], []>} : vector<1x16xbf16>, vector<16x32xbf16>, vector<1x32xf32> -> vector<1x32xf32>
    %c0_255 = arith.constant 0 : index
    %c0_256 = arith.constant 0 : index
    %323 = vector.load %arg15[%c0_255, %c0_256] : memref<1x32xf32, #tpu.memory_space<vmem>>, vector<1x32xf32>
    %324 = arith.addf %322, %323 : vector<1x32xf32>
    %325 = tpu.concatenate %231, %318, %324 in 1 : vector<1x32xf32>, vector<1x32xf32>, vector<1x32xf32> -> vector<1x96xf32>
    %326 = arith.truncf %325 : vector<1x96xf32> to vector<1x96xbf16>
    %c0_257 = arith.constant 0 : index
    %c0_258 = arith.constant 0 : index
    %327 = vector.load %arg16[%c0_257, %c0_258] : memref<96x64xbf16, #tpu.memory_space<vmem>>, vector<96x64xbf16>
    %cst_259 = arith.constant dense<0.000000e+00> : vector<1x64xf32>
    %328 = tpu.matmul %326, %327, %cst_259 {dimension_numbers = #tpu.dot_dimension_numbers<[1], [0], [0], [1], [0, 0, 1, 1], [], []>} : vector<1x96xbf16>, vector<96x64xbf16>, vector<1x64xf32> -> vector<1x64xf32>
    %c0_260 = arith.constant 0 : index
    %c0_261 = arith.constant 0 : index
    %329 = vector.load %arg17[%c0_260, %c0_261] : memref<1x64xf32, #tpu.memory_space<vmem>>, vector<1x64xf32>
    %330 = arith.addf %328, %329 : vector<1x64xf32>
    %cst_262 = arith.constant 0.000000e+00 : f32
    %331 = vector.broadcast %cst_262 : f32 to vector<1x64xf32>
    %332 = arith.maximumf %330, %331 : vector<1x64xf32>
    %333 = arith.truncf %332 : vector<1x64xf32> to vector<1x64xbf16>
    %c0_263 = arith.constant 0 : index
    %c0_264 = arith.constant 0 : index
    %334 = vector.load %arg18[%c0_263, %c0_264] : memref<64x128xbf16, #tpu.memory_space<vmem>>, vector<64x128xbf16>
    %cst_265 = arith.constant dense<0.000000e+00> : vector<1x128xf32>
    %335 = tpu.matmul %333, %334, %cst_265 {dimension_numbers = #tpu.dot_dimension_numbers<[1], [0], [0], [1], [0, 0, 1, 1], [], []>} : vector<1x64xbf16>, vector<64x128xbf16>, vector<1x128xf32> -> vector<1x128xf32>
    %c0_266 = arith.constant 0 : index
    %c0_267 = arith.constant 0 : index
    %336 = vector.load %arg19[%c0_266, %c0_267] : memref<1x128xf32, #tpu.memory_space<vmem>>, vector<1x128xf32>
    %337 = arith.addf %335, %336 : vector<1x128xf32>
    %338 = vector.shape_cast %337 : vector<1x128xf32> to vector<1x1x128xf32>
    %c0_268 = arith.constant 0 : index
    %c0_269 = arith.constant 0 : index
    %c0_270 = arith.constant 0 : index
    %339 = vector.load %arg20[%c0_268, %c0_269, %c0_270] : memref<1x1x128xf32, #tpu.memory_space<vmem>>, vector<1x1x128xf32>
    tpu.vector_store %arg20[%c0_268, %c0_269, %c0_270], %338 {strides = array<i32>} : memref<1x1x128xf32, #tpu.memory_space<vmem>>, vector<1x1x128xf32>,
    return
  }
  func.func @transform_0(%arg0: i32, %arg1: memref<16xi32, #tpu.memory_space<smem>>, %arg2: memref<24xi32, #tpu.memory_space<smem>>) -> (i32, i32, i32) {
    %c0_i32 = arith.constant 0 : i32
    %c0_i32_0 = arith.constant 0 : i32
    %c0_i32_1 = arith.constant 0 : i32
    return %arg0, %c0_i32, %c0_i32_0 : i32, i32, i32
  }
  func.func @transform_3(%arg0: i32, %arg1: memref<16xi32, #tpu.memory_space<smem>>, %arg2: memref<24xi32, #tpu.memory_space<smem>>) -> (i32, i32) {
    %c0_i32 = arith.constant 0 : i32
    %c0_i32_0 = arith.constant 0 : i32
    %c0_i32_1 = arith.constant 0 : i32
    return %c0_i32, %c0_i32_0 : i32, i32
  }
  func.func @transform_4(%arg0: i32, %arg1: memref<16xi32, #tpu.memory_space<smem>>, %arg2: memref<24xi32, #tpu.memory_space<smem>>) -> (i32, i32) {
    %c0_i32 = arith.constant 0 : i32
    %c0_i32_0 = arith.constant 0 : i32
    %c0_i32_1 = arith.constant 0 : i32
    return %c0_i32, %c0_i32_0 : i32, i32
  }
  func.func @transform_5(%arg0: i32, %arg1: memref<16xi32, #tpu.memory_space<smem>>, %arg2: memref<24xi32, #tpu.memory_space<smem>>) -> (i32, i32) {
    %c0_i32 = arith.constant 0 : i32
    %c0_i32_0 = arith.constant 0 : i32
    %c0_i32_1 = arith.constant 0 : i32
    return %c0_i32, %c0_i32_0 : i32, i32
  }
  func.func @transform_6(%arg0: i32, %arg1: memref<16xi32, #tpu.memory_space<smem>>, %arg2: memref<24xi32, #tpu.memory_space<smem>>) -> (i32, i32) {
    %c0_i32 = arith.constant 0 : i32
    %c0_i32_0 = arith.constant 0 : i32
    %c0_i32_1 = arith.constant 0 : i32
    return %c0_i32, %c0_i32_0 : i32, i32
  }
  func.func @transform_7(%arg0: i32, %arg1: memref<16xi32, #tpu.memory_space<smem>>, %arg2: memref<24xi32, #tpu.memory_space<smem>>) -> (i32, i32) {
    %c0_i32 = arith.constant 0 : i32
    %c0_i32_0 = arith.constant 0 : i32
    %c0_i32_1 = arith.constant 0 : i32
    return %c0_i32, %c0_i32_0 : i32, i32
  }
  func.func @transform_8(%arg0: i32, %arg1: memref<16xi32, #tpu.memory_space<smem>>, %arg2: memref<24xi32, #tpu.memory_space<smem>>) -> (i32, i32) {
    %c0_i32 = arith.constant 0 : i32
    %c0_i32_0 = arith.constant 0 : i32
    %c0_i32_1 = arith.constant 0 : i32
    return %c0_i32, %c0_i32_0 : i32, i32
  }
  func.func @transform_9(%arg0: i32, %arg1: memref<16xi32, #tpu.memory_space<smem>>, %arg2: memref<24xi32, #tpu.memory_space<smem>>) -> (i32, i32) {
    %c0_i32 = arith.constant 0 : i32
    %c0_i32_0 = arith.constant 0 : i32
    %c0_i32_1 = arith.constant 0 : i32
    return %c0_i32, %c0_i32_0 : i32, i32
  }
  func.func @transform_10(%arg0: i32, %arg1: memref<16xi32, #tpu.memory_space<smem>>, %arg2: memref<24xi32, #tpu.memory_space<smem>>) -> (i32, i32) {
    %c0_i32 = arith.constant 0 : i32
    %c0_i32_0 = arith.constant 0 : i32
    %c0_i32_1 = arith.constant 0 : i32
    return %c0_i32, %c0_i32_0 : i32, i32
  }
  func.func @transform_11(%arg0: i32, %arg1: memref<16xi32, #tpu.memory_space<smem>>, %arg2: memref<24xi32, #tpu.memory_space<smem>>) -> (i32, i32) {
    %c0_i32 = arith.constant 0 : i32
    %c0_i32_0 = arith.constant 0 : i32
    %c0_i32_1 = arith.constant 0 : i32
    return %c0_i32, %c0_i32_0 : i32, i32
  }
  func.func @transform_12(%arg0: i32, %arg1: memref<16xi32, #tpu.memory_space<smem>>, %arg2: memref<24xi32, #tpu.memory_space<smem>>) -> (i32, i32) {
    %c0_i32 = arith.constant 0 : i32
    %c0_i32_0 = arith.constant 0 : i32
    %c0_i32_1 = arith.constant 0 : i32
    return %c0_i32, %c0_i32_0 : i32, i32
  }
  func.func @transform_13(%arg0: i32, %arg1: memref<16xi32, #tpu.memory_space<smem>>, %arg2: memref<24xi32, #tpu.memory_space<smem>>) -> (i32, i32) {
    %c0_i32 = arith.constant 0 : i32
    %c0_i32_0 = arith.constant 0 : i32
    %c0_i32_1 = arith.constant 0 : i32
    return %c0_i32, %c0_i32_0 : i32, i32
  }
  func.func @transform_14(%arg0: i32, %arg1: memref<16xi32, #tpu.memory_space<smem>>, %arg2: memref<24xi32, #tpu.memory_space<smem>>) -> (i32, i32) {
    %c0_i32 = arith.constant 0 : i32
    %c0_i32_0 = arith.constant 0 : i32
    %c0_i32_1 = arith.constant 0 : i32
    return %c0_i32, %c0_i32_0 : i32, i32
  }
  func.func @transform_15(%arg0: i32, %arg1: memref<16xi32, #tpu.memory_space<smem>>, %arg2: memref<24xi32, #tpu.memory_space<smem>>) -> (i32, i32) {
    %c0_i32 = arith.constant 0 : i32
    %c0_i32_0 = arith.constant 0 : i32
    %c0_i32_1 = arith.constant 0 : i32
    return %c0_i32, %c0_i32_0 : i32, i32
  }
  func.func @transform_16(%arg0: i32, %arg1: memref<16xi32, #tpu.memory_space<smem>>, %arg2: memref<24xi32, #tpu.memory_space<smem>>) -> (i32, i32) {
    %c0_i32 = arith.constant 0 : i32
    %c0_i32_0 = arith.constant 0 : i32
    %c0_i32_1 = arith.constant 0 : i32
    return %c0_i32, %c0_i32_0 : i32, i32
  }
  func.func @transform_17(%arg0: i32, %arg1: memref<16xi32, #tpu.memory_space<smem>>, %arg2: memref<24xi32, #tpu.memory_space<smem>>) -> (i32, i32, i32) {
    %c0_i32 = arith.constant 0 : i32
    %c0_i32_0 = arith.constant 0 : i32
    %c0_i32_1 = arith.constant 0 : i32
    return %arg0, %c0_i32, %c0_i32_0 : i32, i32, i32
  }
}

</mosaic_0001>

<llo_original>
// kernel: three_inputs_net.1
$region0: #{three_inputs_net.1}
  #allocation0 [shape = 'u32[]', space=smem, size = 0x4, offset = 0x4, fixed_abs, tag = 'smem constant byte address 0x4 - core index']
  #allocation1 [shape = 'u32[144,128]{1,0:T(1,128)}', space=vmem, size = 0x12000, scoped, tag = 'internal scratch']
  #allocation2 [shape = 'f32[8,32]{1,0:T(8,128)}', space=vmem, size = 0x1000, scoped, tag = 'scratch operand']
  #allocation3 [shape = 'f32[12,32]{1,0:T(8,128)}', space=vmem, size = 0x2000, scoped, tag = 'scratch operand']
  #allocation4 [shape = 's32[8]{0}', space=sflag, size = 0x20, scoped, tag = 'scratch operand']
  #allocation5 [shape = 's32[12]{0}', space=sflag, size = 0x30, scoped, tag = 'scratch operand']
  #allocation6 [shape = 's32[1]{0}', space=sflag, size = 0x4, scoped, tag = 'scoped memory for three_inputs_net.1']
  #allocation7 [shape = 'u8[512]{0}', space=smem, size = 0x200, scoped, tag = 'prefetched SMEM operand 0']
  #allocation8 [shape = 'u8[512]{0}', space=smem, size = 0x200, scoped, tag = 'prefetched SMEM operand 1']
  #allocation9 [shape = 's32[]', space=sflag, size = 0x4, offset = 0, fixed_abs, tag = 'sflag constant byte address 0x0 - dummy sync flag']
  #allocation10 [shape = 's32[]', space=sflag, size = 0x4, offset = 0, fixed_abs, tag = 'sflag constant byte address 0x0 - dummy sync flag']
  #allocation11 [shape = 's32[]', space=sflag, size = 0x4, offset = 0, fixed_abs, tag = 'sflag constant byte address 0x0 - dummy sync flag']
  #allocation12 [shape = 's32[]', space=sflag, size = 0x4, offset = 0, fixed_abs, tag = 'sflag constant byte address 0x0 - dummy sync flag']
  #allocation13 [shape = 's32[]', space=sflag, size = 0x4, offset = 0, fixed_abs, tag = 'sflag constant byte address 0x0 - dummy sync flag']
  #allocation14 [shape = 's32[]', space=sflag, size = 0x4, offset = 0, fixed_abs, tag = 'sflag constant byte address 0x0 - dummy sync flag']
  #allocation15 [shape = 's32[]', space=sflag, size = 0x4, offset = 0, fixed_abs, tag = 'sflag constant byte address 0x0 - dummy sync flag']
  #allocation16 [shape = 's32[]', space=sflag, size = 0x4, offset = 0, fixed_abs, tag = 'sflag constant byte address 0x0 - dummy sync flag']
  #allocation17 [shape = 's32[]', space=sflag, size = 0x4, offset = 0, fixed_abs, tag = 'sflag constant byte address 0x0 - dummy sync flag']
  #allocation18 [shape = 's32[]', space=sflag, size = 0x4, offset = 0, fixed_abs, tag = 'sflag constant byte address 0x0 - dummy sync flag']
  #allocation19 [shape = 's32[]', space=sflag, size = 0x4, offset = 0, fixed_abs, tag = 'sflag constant byte address 0x0 - dummy sync flag']
  #allocation20 [shape = 's32[]', space=sflag, size = 0x4, offset = 0, fixed_abs, tag = 'sflag constant byte address 0x0 - dummy sync flag']
  #allocation21 [shape = 's32[]', space=sflag, size = 0x4, offset = 0, fixed_abs, tag = 'sflag constant byte address 0x0 - dummy sync flag']
  #allocation22 [shape = 's32[]', space=sflag, size = 0x4, offset = 0, fixed_abs, tag = 'sflag constant byte address 0x0 - dummy sync flag']
  #allocation23 [shape = 's32[]', space=sflag, size = 0x4, offset = 0, fixed_abs, tag = 'sflag constant byte address 0x0 - dummy sync flag']
  #allocation24 [shape = 's32[]', space=sflag, size = 0x4, offset = 0, fixed_abs, tag = 'sflag constant byte address 0x0 - dummy sync flag']
  #allocation25 [shape = 's32[]', space=sflag, size = 0x4, offset = 0, fixed_abs, tag = 'sflag constant byte address 0x0 - dummy sync flag']
  #allocation26 [shape = 's32[]', space=sflag, size = 0x4, offset = 0, fixed_abs, tag = 'sflag constant byte address 0x0 - dummy sync flag']
  #allocation27 [shape = 's32[]', space=sflag, size = 0x4, offset = 0, fixed_abs, tag = 'sflag constant byte address 0x0 - dummy sync flag']
  #allocation28 [shape = 's32[]', space=sflag, size = 0x4, offset = 0, fixed_abs, tag = 'sflag constant byte address 0x0 - dummy sync flag']
  %s0 = inlined_call_operand.vmem [shape: s32[16], index: 0, kind: input, shape index: {}]
  %s1 = inlined_call_operand.vmem [shape: s32[24], index: 1, kind: input, shape index: {}]
  %s2 = inlined_call_operand.vmem [shape: bf16[2,1,16], index: 2, kind: input, shape index: {}]
  %s3 = inlined_call_operand.vmem [shape: f32[50,32], index: 3, kind: input, shape index: {}]
  %s4 = inlined_call_operand.vmem [shape: f32[50,32], index: 4, kind: input, shape index: {}]
  %s5 = inlined_call_operand.vmem [shape: bf16[64,32], index: 5, kind: input, shape index: {}]
  %s6 = inlined_call_operand.vmem [shape: f32[1,32], index: 6, kind: input, shape index: {}]
  %s7 = inlined_call_operand.vmem [shape: bf16[64,32], index: 7, kind: input, shape index: {}]
  %s8 = inlined_call_operand.vmem [shape: f32[1,32], index: 8, kind: input, shape index: {}]
  %s9 = inlined_call_operand.vmem [shape: bf16[64,32], index: 9, kind: input, shape index: {}]
  %s10 = inlined_call_operand.vmem [shape: f32[1,32], index: 10, kind: input, shape index: {}]
  %s11 = inlined_call_operand.vmem [shape: bf16[64,32], index: 11, kind: input, shape index: {}]
  %s12 = inlined_call_operand.vmem [shape: f32[1,32], index: 12, kind: input, shape index: {}]
  %s13 = inlined_call_operand.vmem [shape: bf16[16,32], index: 13, kind: input, shape index: {}]
  %s14 = inlined_call_operand.vmem [shape: f32[1,32], index: 14, kind: input, shape index: {}]
  %s15 = inlined_call_operand.vmem [shape: bf16[96,64], index: 15, kind: input, shape index: {}]
  %s16 = inlined_call_operand.vmem [shape: f32[1,64], index: 16, kind: input, shape index: {}]
  %s17 = inlined_call_operand.vmem [shape: bf16[64,128], index: 17, kind: input, shape index: {}]
  %s18 = inlined_call_operand.vmem [shape: f32[1,128], index: 18, kind: input, shape index: {}]
  %s19 = inlined_call_operand.vmem [shape: f32[2,1,128], index: 19, kind: output, shape index: {}]
  %s20 = sld [smem:[#allocation0]]
  $region693: #{three_inputs_net.1} parent=0
    _
  %s22 = ssub.s32 1, %s20
  %s23 = scalar_select 0, %s22, %s20
  %s24 = sshll.u32 %s0, 4
  %s25 = int_to_ptr.vmem [resolvable:$true] %s24
  %27 = dma.vmem_to_smem %s25, 16, [#allocation7], [#allocation6]
  %s28 = sshll.u32 %s1, 4
  %s29 = int_to_ptr.vmem [resolvable:$true] %s28
  %31 = dma.vmem_to_smem %s29, 16, [#allocation8], [#allocation6]
  %32 = dma.done [#allocation6], 32
  %33 = sfence
  loop: start=0, step=1, limit=4
  $region2: #{three_inputs_net.1} parent=0 // loop_pre_header
    _
  $region3: #{three_inputs_net.1} parent=0 // loop_header
    %s35 = sphi 0, %s39
    %p36 = scmp.ge.s32.totalorder %s35, 4
    %s45 = sphi 0, %s47
    %s48 = sphi 0, %s45
    %s49 = sphi 0, %s48
    %s65 = sphi 0, %s49
    %s69 = sphi 0, %s69
    %s71 = sphi 0, %s69
    %s72 = sphi 0, %s71
    %s86 = sphi 0, %s72
    %s90 = sphi 0, %s90
    %s92 = sphi 0, %s90
    %s93 = sphi 0, %s92
    %s107 = sphi 0, %s93
    %s111 = sphi 0, %s111
    %s113 = sphi 0, %s111
    %s114 = sphi 0, %s113
    %s128 = sphi 0, %s114
    %s132 = sphi 0, %s132
    %s134 = sphi 0, %s132
    %s135 = sphi 0, %s134
    %s149 = sphi 0, %s135
    %s153 = sphi 0, %s153
    %s155 = sphi 0, %s153
    %s156 = sphi 0, %s155
    %s170 = sphi 0, %s156
    %s174 = sphi 0, %s174
    %s176 = sphi 0, %s174
    %s177 = sphi 0, %s176
    %s191 = sphi 0, %s177
    %s195 = sphi 0, %s195
    %s197 = sphi 0, %s195
    %s198 = sphi 0, %s197
    %s212 = sphi 0, %s198
    %s216 = sphi 0, %s216
    %s218 = sphi 0, %s216
    %s219 = sphi 0, %s218
    %s233 = sphi 0, %s219
    %s237 = sphi 0, %s237
    %s239 = sphi 0, %s237
    %s240 = sphi 0, %s239
    %s254 = sphi 0, %s240
    %s258 = sphi 0, %s258
    %s260 = sphi 0, %s258
    %s261 = sphi 0, %s260
    %s275 = sphi 0, %s261
    %s279 = sphi 0, %s279
    %s281 = sphi 0, %s279
    %s282 = sphi 0, %s281
    %s296 = sphi 0, %s282
    %s300 = sphi 0, %s300
    %s302 = sphi 0, %s300
    %s303 = sphi 0, %s302
    %s317 = sphi 0, %s303
    %s321 = sphi 0, %s321
    %s323 = sphi 0, %s321
    %s324 = sphi 0, %s323
    %s338 = sphi 0, %s324
    %s342 = sphi 0, %s342
    %s344 = sphi 0, %s342
    %s345 = sphi 0, %s344
    %s359 = sphi 0, %s345
    %s365 = sphi 0, %s367
    %s368 = sphi 0, %s365
    %s369 = sphi 0, %s368
    %s385 = sphi 0, %s369
  $region4: #{three_inputs_net.1} parent=0 // loop_header_branch
    %38 = sbr.rel (%p36) target = $region8
  $region5: #{three_inputs_net.1} parent=0 // loop_body
    %s40 = ssub.s32 %s35, 1
    %s41 = ssub.s32 %s35, 2
    %s42 = sadd.s32 %s35, 1
    %s43 = ssub.s32 %s35, %s42
    %p44 = scmp.eq.s32.totalorder %s43, 0
    %s46 = sadd.s32 %s45, 1
    %s47 = scalar_select %p44, %s45, %s46
    %p50 = pneg %p44
    %p51 = scmp.eq.s32.totalorder %s35, 1
    %p52 = por %p50, %p51
    %p53 = scmp.ne.s32.totalorder %s45, %s48
    %p54 = scmp.eq.s32.totalorder %s35, 0
    %p55 = por %p53, %p54
    %p56 = scmp.ne.s32.totalorder %s45, %s48
    %p57 = scmp.eq.s32.totalorder %s40, 1
    %p58 = por %p56, %p57
    %p59 = scmp.ne.s32.totalorder %s48, %s49
    %p60 = scmp.eq.s32.totalorder %s40, 0
    %p61 = por %p59, %p60
    %p62 = scmp.ne.s32.totalorder %s48, %s49
    %p63 = scmp.eq.s32.totalorder %s41, 1
    %p64 = por %p62, %p63
    %p66 = scmp.ne.s32.totalorder %s49, %s65
    %p67 = scmp.eq.s32.totalorder %s41, 0
    %p68 = por %p66, %p67
    %s70 = sadd.s32 %s69, 1
    %p73 = scmp.eq.s32.totalorder %s35, 1
    %p74 = scmp.ne.s32.totalorder %s69, %s71
    %p75 = scmp.eq.s32.totalorder %s35, 0
    %p76 = por %p74, %p75
    %p77 = scmp.ne.s32.totalorder %s69, %s71
    %p78 = scmp.eq.s32.totalorder %s40, 1
    %p79 = por %p77, %p78
    %p80 = scmp.ne.s32.totalorder %s71, %s72
    %p81 = scmp.eq.s32.totalorder %s40, 0
    %p82 = por %p80, %p81
    %p83 = scmp.ne.s32.totalorder %s71, %s72
    %p84 = scmp.eq.s32.totalorder %s41, 1
    %p85 = por %p83, %p84
    %p87 = scmp.ne.s32.totalorder %s72, %s86
    %p88 = scmp.eq.s32.totalorder %s41, 0
    %p89 = por %p87, %p88
    %s91 = sadd.s32 %s90, 1
    %p94 = scmp.eq.s32.totalorder %s35, 1
    %p95 = scmp.ne.s32.totalorder %s90, %s92
    %p96 = scmp.eq.s32.totalorder %s35, 0
    %p97 = por %p95, %p96
    %p98 = scmp.ne.s32.totalorder %s90, %s92
    %p99 = scmp.eq.s32.totalorder %s40, 1
    %p100 = por %p98, %p99
    %p101 = scmp.ne.s32.totalorder %s92, %s93
    %p102 = scmp.eq.s32.totalorder %s40, 0
    %p103 = por %p101, %p102
    %p104 = scmp.ne.s32.totalorder %s92, %s93
    %p105 = scmp.eq.s32.totalorder %s41, 1
    %p106 = por %p104, %p105
    %p108 = scmp.ne.s32.totalorder %s93, %s107
    %p109 = scmp.eq.s32.totalorder %s41, 0
    %p110 = por %p108, %p109
    %s112 = sadd.s32 %s111, 1
    %p115 = scmp.eq.s32.totalorder %s35, 1
    %p116 = scmp.ne.s32.totalorder %s111, %s113
    %p117 = scmp.eq.s32.totalorder %s35, 0
    %p118 = por %p116, %p117
    %p119 = scmp.ne.s32.totalorder %s111, %s113
    %p120 = scmp.eq.s32.totalorder %s40, 1
    %p121 = por %p119, %p120
    %p122 = scmp.ne.s32.totalorder %s113, %s114
    %p123 = scmp.eq.s32.totalorder %s40, 0
    %p124 = por %p122, %p123
    %p125 = scmp.ne.s32.totalorder %s113, %s114
    %p126 = scmp.eq.s32.totalorder %s41, 1
    %p127 = por %p125, %p126
    %p129 = scmp.ne.s32.totalorder %s114, %s128
    %p130 = scmp.eq.s32.totalorder %s41, 0
    %p131 = por %p129, %p130
    %s133 = sadd.s32 %s132, 1
    %p136 = scmp.eq.s32.totalorder %s35, 1
    %p137 = scmp.ne.s32.totalorder %s132, %s134
    %p138 = scmp.eq.s32.totalorder %s35, 0
    %p139 = por %p137, %p138
    %p140 = scmp.ne.s32.totalorder %s132, %s134
    %p141 = scmp.eq.s32.totalorder %s40, 1
    %p142 = por %p140, %p141
    %p143 = scmp.ne.s32.totalorder %s134, %s135
    %p144 = scmp.eq.s32.totalorder %s40, 0
    %p145 = por %p143, %p144
    %p146 = scmp.ne.s32.totalorder %s134, %s135
    %p147 = scmp.eq.s32.totalorder %s41, 1
    %p148 = por %p146, %p147
    %p150 = scmp.ne.s32.totalorder %s135, %s149
    %p151 = scmp.eq.s32.totalorder %s41, 0
    %p152 = por %p150, %p151
    %s154 = sadd.s32 %s153, 1
    %p157 = scmp.eq.s32.totalorder %s35, 1
    %p158 = scmp.ne.s32.totalorder %s153, %s155
    %p159 = scmp.eq.s32.totalorder %s35, 0
    %p160 = por %p158, %p159
    %p161 = scmp.ne.s32.totalorder %s153, %s155
    %p162 = scmp.eq.s32.totalorder %s40, 1
    %p163 = por %p161, %p162
    %p164 = scmp.ne.s32.totalorder %s155, %s156
    %p165 = scmp.eq.s32.totalorder %s40, 0
    %p166 = por %p164, %p165
    %p167 = scmp.ne.s32.totalorder %s155, %s156
    %p168 = scmp.eq.s32.totalorder %s41, 1
    %p169 = por %p167, %p168
    %p171 = scmp.ne.s32.totalorder %s156, %s170
    %p172 = scmp.eq.s32.totalorder %s41, 0
    %p173 = por %p171, %p172
    %s175 = sadd.s32 %s174, 1
    %p178 = scmp.eq.s32.totalorder %s35, 1
    %p179 = scmp.ne.s32.totalorder %s174, %s176
    %p180 = scmp.eq.s32.totalorder %s35, 0
    %p181 = por %p179, %p180
    %p182 = scmp.ne.s32.totalorder %s174, %s176
    %p183 = scmp.eq.s32.totalorder %s40, 1
    %p184 = por %p182, %p183
    %p185 = scmp.ne.s32.totalorder %s176, %s177
    %p186 = scmp.eq.s32.totalorder %s40, 0
    %p187 = por %p185, %p186
    %p188 = scmp.ne.s32.totalorder %s176, %s177
    %p189 = scmp.eq.s32.totalorder %s41, 1
    %p190 = por %p188, %p189
    %p192 = scmp.ne.s32.totalorder %s177, %s191
    %p193 = scmp.eq.s32.totalorder %s41, 0
    %p194 = por %p192, %p193
    %s196 = sadd.s32 %s195, 1
    %p199 = scmp.eq.s32.totalorder %s35, 1
    %p200 = scmp.ne.s32.totalorder %s195, %s197
    %p201 = scmp.eq.s32.totalorder %s35, 0
    %p202 = por %p200, %p201
    %p203 = scmp.ne.s32.totalorder %s195, %s197
    %p204 = scmp.eq.s32.totalorder %s40, 1
    %p205 = por %p203, %p204
    %p206 = scmp.ne.s32.totalorder %s197, %s198
    %p207 = scmp.eq.s32.totalorder %s40, 0
    %p208 = por %p206, %p207
    %p209 = scmp.ne.s32.totalorder %s197, %s198
    %p210 = scmp.eq.s32.totalorder %s41, 1
    %p211 = por %p209, %p210
    %p213 = scmp.ne.s32.totalorder %s198, %s212
    %p214 = scmp.eq.s32.totalorder %s41, 0
    %p215 = por %p213, %p214
    %s217 = sadd.s32 %s216, 1
    %p220 = scmp.eq.s32.totalorder %s35, 1
    %p221 = scmp.ne.s32.totalorder %s216, %s218
    %p222 = scmp.eq.s32.totalorder %s35, 0
    %p223 = por %p221, %p222
    %p224 = scmp.ne.s32.totalorder %s216, %s218
    %p225 = scmp.eq.s32.totalorder %s40, 1
    %p226 = por %p224, %p225
    %p227 = scmp.ne.s32.totalorder %s218, %s219
    %p228 = scmp.eq.s32.totalorder %s40, 0
    %p229 = por %p227, %p228
    %p230 = scmp.ne.s32.totalorder %s218, %s219
    %p231 = scmp.eq.s32.totalorder %s41, 1
    %p232 = por %p230, %p231
    %p234 = scmp.ne.s32.totalorder %s219, %s233
    %p235 = scmp.eq.s32.totalorder %s41, 0
    %p236 = por %p234, %p235
    %s238 = sadd.s32 %s237, 1
    %p241 = scmp.eq.s32.totalorder %s35, 1
    %p242 = scmp.ne.s32.totalorder %s237, %s239
    %p243 = scmp.eq.s32.totalorder %s35, 0
    %p244 = por %p242, %p243
    %p245 = scmp.ne.s32.totalorder %s237, %s239
    %p246 = scmp.eq.s32.totalorder %s40, 1
    %p247 = por %p245, %p246
    %p248 = scmp.ne.s32.totalorder %s239, %s240
    %p249 = scmp.eq.s32.totalorder %s40, 0
    %p250 = por %p248, %p249
    %p251 = scmp.ne.s32.totalorder %s239, %s240
    %p252 = scmp.eq.s32.totalorder %s41, 1
    %p253 = por %p251, %p252
    %p255 = scmp.ne.s32.totalorder %s240, %s254
    %p256 = scmp.eq.s32.totalorder %s41, 0
    %p257 = por %p255, %p256
    %s259 = sadd.s32 %s258, 1
    %p262 = scmp.eq.s32.totalorder %s35, 1
    %p263 = scmp.ne.s32.totalorder %s258, %s260
    %p264 = scmp.eq.s32.totalorder %s35, 0
    %p265 = por %p263, %p264
    %p266 = scmp.ne.s32.totalorder %s258, %s260
    %p267 = scmp.eq.s32.totalorder %s40, 1
    %p268 = por %p266, %p267
    %p269 = scmp.ne.s32.totalorder %s260, %s261
    %p270 = scmp.eq.s32.totalorder %s40, 0
    %p271 = por %p269, %p270
    %p272 = scmp.ne.s32.totalorder %s260, %s261
    %p273 = scmp.eq.s32.totalorder %s41, 1
    %p274 = por %p272, %p273
    %p276 = scmp.ne.s32.totalorder %s261, %s275
    %p277 = scmp.eq.s32.totalorder %s41, 0
    %p278 = por %p276, %p277
    %s280 = sadd.s32 %s279, 1
    %p283 = scmp.eq.s32.totalorder %s35, 1
    %p284 = scmp.ne.s32.totalorder %s279, %s281
    %p285 = scmp.eq.s32.totalorder %s35, 0
    %p286 = por %p284, %p285
    %p287 = scmp.ne.s32.totalorder %s279, %s281
    %p288 = scmp.eq.s32.totalorder %s40, 1
    %p289 = por %p287, %p288
    %p290 = scmp.ne.s32.totalorder %s281, %s282
    %p291 = scmp.eq.s32.totalorder %s40, 0
    %p292 = por %p290, %p291
    %p293 = scmp.ne.s32.totalorder %s281, %s282
    %p294 = scmp.eq.s32.totalorder %s41, 1
    %p295 = por %p293, %p294
    %p297 = scmp.ne.s32.totalorder %s282, %s296
    %p298 = scmp.eq.s32.totalorder %s41, 0
    %p299 = por %p297, %p298
    %s301 = sadd.s32 %s300, 1
    %p304 = scmp.eq.s32.totalorder %s35, 1
    %p305 = scmp.ne.s32.totalorder %s300, %s302
    %p306 = scmp.eq.s32.totalorder %s35, 0
    %p307 = por %p305, %p306
    %p308 = scmp.ne.s32.totalorder %s300, %s302
    %p309 = scmp.eq.s32.totalorder %s40, 1
    %p310 = por %p308, %p309
    %p311 = scmp.ne.s32.totalorder %s302, %s303
    %p312 = scmp.eq.s32.totalorder %s40, 0
    %p313 = por %p311, %p312
    %p314 = scmp.ne.s32.totalorder %s302, %s303
    %p315 = scmp.eq.s32.totalorder %s41, 1
    %p316 = por %p314, %p315
    %p318 = scmp.ne.s32.totalorder %s303, %s317
    %p319 = scmp.eq.s32.totalorder %s41, 0
    %p320 = por %p318, %p319
    %s322 = sadd.s32 %s321, 1
    %p325 = scmp.eq.s32.totalorder %s35, 1
    %p326 = scmp.ne.s32.totalorder %s321, %s323
    %p327 = scmp.eq.s32.totalorder %s35, 0
    %p328 = por %p326, %p327
    %p329 = scmp.ne.s32.totalorder %s321, %s323
    %p330 = scmp.eq.s32.totalorder %s40, 1
    %p331 = por %p329, %p330
    %p332 = scmp.ne.s32.totalorder %s323, %s324
    %p333 = scmp.eq.s32.totalorder %s40, 0
    %p334 = por %p332, %p333
    %p335 = scmp.ne.s32.totalorder %s323, %s324
    %p336 = scmp.eq.s32.totalorder %s41, 1
    %p337 = por %p335, %p336
    %p339 = scmp.ne.s32.totalorder %s324, %s338
    %p340 = scmp.eq.s32.totalorder %s41, 0
    %p341 = por %p339, %p340
    %s343 = sadd.s32 %s342, 1
    %p346 = scmp.eq.s32.totalorder %s35, 1
    %p347 = scmp.ne.s32.totalorder %s342, %s344
    %p348 = scmp.eq.s32.totalorder %s35, 0
    %p349 = por %p347, %p348
    %p350 = scmp.ne.s32.totalorder %s342, %s344
    %p351 = scmp.eq.s32.totalorder %s40, 1
    %p352 = por %p350, %p351
    %p353 = scmp.ne.s32.totalorder %s344, %s345
    %p354 = scmp.eq.s32.totalorder %s40, 0
    %p355 = por %p353, %p354
    %p356 = scmp.ne.s32.totalorder %s344, %s345
    %p357 = scmp.eq.s32.totalorder %s41, 1
    %p358 = por %p356, %p357
    %p360 = scmp.ne.s32.totalorder %s345, %s359
    %p361 = scmp.eq.s32.totalorder %s41, 0
    %p362 = por %p360, %p361
    %s363 = ssub.s32 %s35, %s42
    %p364 = scmp.eq.s32.totalorder %s363, 0
    %s366 = sadd.s32 %s365, 1
    %s367 = scalar_select %p364, %s365, %s366
    %p370 = pneg %p364
    %p371 = scmp.eq.s32.totalorder %s35, 1
    %p372 = por %p370, %p371
    %p373 = scmp.ne.s32.totalorder %s365, %s368
    %p374 = scmp.eq.s32.totalorder %s35, 0
    %p375 = por %p373, %p374
    %p376 = scmp.ne.s32.totalorder %s365, %s368
    %p377 = scmp.eq.s32.totalorder %s40, 1
    %p378 = por %p376, %p377
    %p379 = scmp.ne.s32.totalorder %s368, %s369
    %p380 = scmp.eq.s32.totalorder %s40, 0
    %p381 = por %p379, %p380
    %p382 = scmp.ne.s32.totalorder %s368, %s369
    %p383 = scmp.eq.s32.totalorder %s41, 1
    %p384 = por %p382, %p383
    %p386 = scmp.ne.s32.totalorder %s369, %s385
    %p387 = scmp.eq.s32.totalorder %s41, 0
    %p388 = por %p386, %p387
    %p389 = scmp.le.s32.totalorder 1, %s35
    %p390 = scmp.lt.s32.totalorder %s35, 3
    %p391 = pnand %p389, %p390
    %p392 = pneg %p391
    // Predicated region
    $region9: #{three_inputs_net.1} parent=5 // pred_check
      _
    $region10: #{three_inputs_net.1} parent=5 // pred_check_branch
      %394 = sbr.rel (%p391) target = $region12
    $region11: #{three_inputs_net.1} parent=5 // pred_region
      %s395 = ssub.s32 %s35, 1
      // Predicated region
      $region13: #{three_inputs_net.1} parent=11 // pred_check
        %p396 = pneg %p82
      $region14: #{three_inputs_net.1} parent=11 // pred_check_branch
        %398 = sbr.rel (%p396) target = $region16
      $region15: #{three_inputs_net.1} parent=11 // pred_region
        _
      $region16: #{three_inputs_net.1} parent=11 // pred_fallthru
        _
      // Predicated region
      $region17: #{three_inputs_net.1} parent=11 // pred_check
        %p399 = pneg %p103
      $region18: #{three_inputs_net.1} parent=11 // pred_check_branch
        %401 = sbr.rel (%p399) target = $region20
      $region19: #{three_inputs_net.1} parent=11 // pred_region
        _
      $region20: #{three_inputs_net.1} parent=11 // pred_fallthru
        _
      // Predicated region
      $region21: #{three_inputs_net.1} parent=11 // pred_check
        %p402 = pneg %p124
      $region22: #{three_inputs_net.1} parent=11 // pred_check_branch
        %404 = sbr.rel (%p402) target = $region24
      $region23: #{three_inputs_net.1} parent=11 // pred_region
        _
      $region24: #{three_inputs_net.1} parent=11 // pred_fallthru
        _
      // Predicated region
      $region25: #{three_inputs_net.1} parent=11 // pred_check
        %p405 = pneg %p145
      $region26: #{three_inputs_net.1} parent=11 // pred_check_branch
        %407 = sbr.rel (%p405) target = $region28
      $region27: #{three_inputs_net.1} parent=11 // pred_region
        _
      $region28: #{three_inputs_net.1} parent=11 // pred_fallthru
        _
      // Predicated region
      $region29: #{three_inputs_net.1} parent=11 // pred_check
        %p408 = pneg %p166
      $region30: #{three_inputs_net.1} parent=11 // pred_check_branch
        %410 = sbr.rel (%p408) target = $region32
      $region31: #{three_inputs_net.1} parent=11 // pred_region
        _
      $region32: #{three_inputs_net.1} parent=11 // pred_fallthru
        _
      // Predicated region
      $region33: #{three_inputs_net.1} parent=11 // pred_check
        %p411 = pneg %p187
      $region34: #{three_inputs_net.1} parent=11 // pred_check_branch
        %413 = sbr.rel (%p411) target = $region36
      $region35: #{three_inputs_net.1} parent=11 // pred_region
        _
      $region36: #{three_inputs_net.1} parent=11 // pred_fallthru
        _
      // Predicated region
      $region37: #{three_inputs_net.1} parent=11 // pred_check
        %p414 = pneg %p208
      $region38: #{three_inputs_net.1} parent=11 // pred_check_branch
        %416 = sbr.rel (%p414) target = $region40
      $region39: #{three_inputs_net.1} parent=11 // pred_region
        _
      $region40: #{three_inputs_net.1} parent=11 // pred_fallthru
        _
      // Predicated region
      $region41: #{three_inputs_net.1} parent=11 // pred_check
        %p417 = pneg %p229
      $region42: #{three_inputs_net.1} parent=11 // pred_check_branch
        %419 = sbr.rel (%p417) target = $region44
      $region43: #{three_inputs_net.1} parent=11 // pred_region
        _
      $region44: #{three_inputs_net.1} parent=11 // pred_fallthru
        _
      // Predicated region
      $region45: #{three_inputs_net.1} parent=11 // pred_check
        %p420 = pneg %p250
      $region46: #{three_inputs_net.1} parent=11 // pred_check_branch
        %422 = sbr.rel (%p420) target = $region48
      $region47: #{three_inputs_net.1} parent=11 // pred_region
        _
      $region48: #{three_inputs_net.1} parent=11 // pred_fallthru
        _
      // Predicated region
      $region49: #{three_inputs_net.1} parent=11 // pred_check
        %p423 = pneg %p271
      $region50: #{three_inputs_net.1} parent=11 // pred_check_branch
        %425 = sbr.rel (%p423) target = $region52
      $region51: #{three_inputs_net.1} parent=11 // pred_region
        _
      $region52: #{three_inputs_net.1} parent=11 // pred_fallthru
        _
      // Predicated region
      $region53: #{three_inputs_net.1} parent=11 // pred_check
        %p426 = pneg %p292
      $region54: #{three_inputs_net.1} parent=11 // pred_check_branch
        %428 = sbr.rel (%p426) target = $region56
      $region55: #{three_inputs_net.1} parent=11 // pred_region
        _
      $region56: #{three_inputs_net.1} parent=11 // pred_fallthru
        _
      // Predicated region
      $region57: #{three_inputs_net.1} parent=11 // pred_check
        %p429 = pneg %p313
      $region58: #{three_inputs_net.1} parent=11 // pred_check_branch
        %431 = sbr.rel (%p429) target = $region60
      $region59: #{three_inputs_net.1} parent=11 // pred_region
        _
      $region60: #{three_inputs_net.1} parent=11 // pred_fallthru
        _
      // Predicated region
      $region61: #{three_inputs_net.1} parent=11 // pred_check
        %p432 = pneg %p334
      $region62: #{three_inputs_net.1} parent=11 // pred_check_branch
        %434 = sbr.rel (%p432) target = $region64
      $region63: #{three_inputs_net.1} parent=11 // pred_region
        _
      $region64: #{three_inputs_net.1} parent=11 // pred_fallthru
        _
      // Predicated region
      $region65: #{three_inputs_net.1} parent=11 // pred_check
        %p435 = pneg %p355
      $region66: #{three_inputs_net.1} parent=11 // pred_check_branch
        %437 = sbr.rel (%p435) target = $region68
      $region67: #{three_inputs_net.1} parent=11 // pred_region
        _
      $region68: #{three_inputs_net.1} parent=11 // pred_fallthru
        _
    $region12: #{three_inputs_net.1} parent=5 // pred_fallthru
      _
    %p438 = scmp.lt.s32.totalorder %s35, 2
    // Predicated region
    $region69: #{three_inputs_net.1} parent=5 // pred_check
      %p439 = pneg %p438
    $region70: #{three_inputs_net.1} parent=5 // pred_check_branch
      %441 = sbr.rel (%p439) target = $region72
    $region71: #{three_inputs_net.1} parent=5 // pred_region
      // Predicated region
      $region73: #{three_inputs_net.1} parent=71 // pred_check
        %p442 = pneg %p55
      $region74: #{three_inputs_net.1} parent=71 // pred_check_branch
        %444 = sbr.rel (%p442) target = $region76
      $region75: #{three_inputs_net.1} parent=71 // pred_region
        %p445 = scmp.lt.s32.totalorder %s35, 1
        %s446 = scalar_select %p445, %s35, 1
        %s447 = scalar_lea.vmem %s2, %s446
      $region76: #{three_inputs_net.1} parent=71 // pred_fallthru
        _
    $region72: #{three_inputs_net.1} parent=5 // pred_fallthru
      _
    %p448 = scmp.le.s32.totalorder 1, %s35
    %p449 = scmp.lt.s32.totalorder %s35, 3
    %p450 = pnand %p448, %p449
    %p451 = pneg %p450
    // Predicated region
    $region77: #{three_inputs_net.1} parent=5 // pred_check
      _
    $region78: #{three_inputs_net.1} parent=5 // pred_check_branch
      %453 = sbr.rel (%p450) target = $region80
    $region79: #{three_inputs_net.1} parent=5 // pred_region
      %s454 = ssub.s32 %s35, 1
      %p455 = scmp.lt.s32.totalorder %s40, 1
      %s456 = scalar_select %p455, %s40, 1
      %s457 = scalar_lea.vmem %s2, %s456
      %p458 = pneg %p61
      %p459 = pneg %p58
      %p460 = pneg %p82
      %p461 = pneg %p79
      %p462 = pneg %p103
      %p463 = pneg %p100
      %p464 = pneg %p124
      %p465 = pneg %p121
      %p466 = pneg %p145
      %p467 = pneg %p142
      %p468 = pneg %p166
      %p469 = pneg %p163
      %p470 = pneg %p187
      %p471 = pneg %p184
      %p472 = pneg %p208
      %p473 = pneg %p205
      %p474 = pneg %p229
      %p475 = pneg %p226
      %p476 = pneg %p250
      %p477 = pneg %p247
      %p478 = pneg %p271
      %p479 = pneg %p268
      %p480 = pneg %p292
      %p481 = pneg %p289
      %p482 = pneg %p313
      %p483 = pneg %p310
      %p484 = pneg %p334
      %p485 = pneg %p331
      %p486 = pneg %p355
      %p487 = pneg %p352
      %p488 = pneg %p381
      %p489 = pneg %p378
      %p490 = scmp.lt.s32.totalorder %s40, 1
      %s491 = scalar_select %p490, %s40, 1
      %s492 = scalar_lea.vmem %s19, %s491
      %p493 = scmp.lt.s32.totalorder %s40, 1
      %s494 = scalar_select %p493, %s40, 1
      %s495 = scalar_lea.vmem %s2, %s494
      %p496 = scmp.lt.s32.totalorder %s40, 1
      %s497 = scalar_select %p496, %s40, 1
      %s498 = scalar_lea.vmem %s19, %s497
      %s500 = smul.u32 %s40, 8
      %s501 = sld [smem:[#allocation7 + %s500]]
      %s502 = scalar_lea.vmem %s3, %s501
      %p504 = scmp.lt.u32.totalorder 1, 8
      %p505 = pneg %p504
      // Predicated region
      $region81: #{three_inputs_net.1} parent=79 // pred_check
        _
      $region82: #{three_inputs_net.1} parent=79 // pred_check_branch
        %507 = sbr.rel (%p504) target = $region84
      $region83: #{three_inputs_net.1} parent=79 // pred_region
        %s522 = sand.u32 1, 7
        %p523 = scmp.eq.s32.totalorder %s522, 0
        %p524 = pneg %p523
        // Predicated region
        $region96: #{three_inputs_net.1} parent=83 // pred_check
          _
        $region97: #{three_inputs_net.1} parent=83 // pred_check_branch
          %526 = sbr.rel (%p523) target = $region99
        $region98: #{three_inputs_net.1} parent=83 // pred_region
          %s527 = sand.u32 1, 7
          %s528 = ssub.s32 1, %s527
          %s529 = scalar_lea.vmem %s502, %s528
          %s530 = ssub.s32 1, %s527
          %s531 = scalar_lea.vmem [#allocation2], %s530
          %s532 = sshllo.u32 0, %s527
          loop: start=0, step=1, limit=1
          $region100: #{three_inputs_net.1} parent=98 // loop_pre_header
            _
          $region101: #{three_inputs_net.1} parent=98 // loop_header
            %s534 = sphi 0, %s538
            %p535 = scmp.ge.s32.totalorder %s534, 1
            %s539 = sphi %s529, %s529
            %s540 = sphi %s531, %s531
          $region102: #{three_inputs_net.1} parent=98 // loop_header_branch
            %537 = sbr.rel (%p535) target = $region106
          $region103: #{three_inputs_net.1} parent=98 // loop_body
            %v541 = vld [vmem:[%s539] sm:%s532]
            %542 = vst [vmem:[%s540] sm:%s532] %v541
          $region104: #{three_inputs_net.1} parent=98 // loop_footer
            %s538 = sadd.s32 1, %s534
          $region105: #{three_inputs_net.1} parent=98 // loop_footer_branch
            %533 = sbr.rel target = $region101
          $region106: #{three_inputs_net.1} parent=98 // loop_exit
            _
        $region99: #{three_inputs_net.1} parent=83 // pred_fallthru
          _
      $region84: #{three_inputs_net.1} parent=79 // pred_fallthru
        _
      // Predicated region
      $region85: #{three_inputs_net.1} parent=79 // pred_check
        %p508 = pneg %p504
      $region86: #{three_inputs_net.1} parent=79 // pred_check_branch
        %510 = sbr.rel (%p508) target = $region88
      $region87: #{three_inputs_net.1} parent=79 // pred_region
        %s511 = sshllo.u32 0, 1
        loop: start=0, step=1, limit=1
        $region89: #{three_inputs_net.1} parent=87 // loop_pre_header
          _
        $region90: #{three_inputs_net.1} parent=87 // loop_header
          %s513 = sphi 0, %s517
          %p514 = scmp.ge.s32.totalorder %s513, 1
          %s518 = sphi %s502, %s502
          %s519 = sphi [#allocation2], [#allocation2]
        $region91: #{three_inputs_net.1} parent=87 // loop_header_branch
          %516 = sbr.rel (%p514) target = $region95
        $region92: #{three_inputs_net.1} parent=87 // loop_body
          %v520 = vld [vmem:[%s518] sm:%s511]
          %521 = vst [vmem:[%s519] sm:%s511] %v520
        $region93: #{three_inputs_net.1} parent=87 // loop_footer
          %s517 = sadd.s32 1, %s513
        $region94: #{three_inputs_net.1} parent=87 // loop_footer_branch
          %512 = sbr.rel target = $region90
        $region95: #{three_inputs_net.1} parent=87 // loop_exit
          _
      $region88: #{three_inputs_net.1} parent=79 // pred_fallthru
        _
      // Predicated region
      $region107: #{three_inputs_net.1} parent=79 // pred_check
        _
      $region108: #{three_inputs_net.1} parent=79 // pred_check_branch
        %545 = sbr.rel (0) target = $region110
      $region109: #{three_inputs_net.1} parent=79 // pred_region
        %546 = vsyncadd [#allocation4], 16
      $region110: #{three_inputs_net.1} parent=79 // pred_fallthru
        _
      %s547 = sadd.s32 %s500, 1
      %s548 = sld [smem:[#allocation7 + %s547]]
      %s549 = scalar_lea.vmem %s3, %s548
      %s550 = scalar_lea.vmem [#allocation2], 1
      %s551 = scalar_lea.sflag [#allocation4], 1
      %p553 = scmp.lt.u32.totalorder 1, 8
      %p554 = pneg %p553
      // Predicated region
      $region111: #{three_inputs_net.1} parent=79 // pred_check
        _
      $region112: #{three_inputs_net.1} parent=79 // pred_check_branch
        %556 = sbr.rel (%p553) target = $region114
      $region113: #{three_inputs_net.1} parent=79 // pred_region
        %s571 = sand.u32 1, 7
        %p572 = scmp.eq.s32.totalorder %s571, 0
        %p573 = pneg %p572
        // Predicated region
        $region126: #{three_inputs_net.1} parent=113 // pred_check
          _
        $region127: #{three_inputs_net.1} parent=113 // pred_check_branch
          %575 = sbr.rel (%p572) target = $region129
        $region128: #{three_inputs_net.1} parent=113 // pred_region
          %s576 = sand.u32 1, 7
          %s577 = ssub.s32 1, %s576
          %s578 = scalar_lea.vmem %s549, %s577
          %s579 = ssub.s32 1, %s576
          %s580 = scalar_lea.vmem %s550, %s579 [#allocation2]
          %s581 = sshllo.u32 0, %s576
          loop: start=0, step=1, limit=1
          $region130: #{three_inputs_net.1} parent=128 // loop_pre_header
            _
          $region131: #{three_inputs_net.1} parent=128 // loop_header
            %s583 = sphi 0, %s587
            %p584 = scmp.ge.s32.totalorder %s583, 1
            %s588 = sphi %s578, %s578
            %s589 = sphi %s580, %s580
          $region132: #{three_inputs_net.1} parent=128 // loop_header_branch
            %586 = sbr.rel (%p584) target = $region136
          $region133: #{three_inputs_net.1} parent=128 // loop_body
            %v590 = vld [vmem:[%s588] sm:%s581]
            %591 = vst [vmem:[%s589] sm:%s581] %v590
          $region134: #{three_inputs_net.1} parent=128 // loop_footer
            %s587 = sadd.s32 1, %s583
          $region135: #{three_inputs_net.1} parent=128 // loop_footer_branch
            %582 = sbr.rel target = $region131
          $region136: #{three_inputs_net.1} parent=128 // loop_exit
            _
        $region129: #{three_inputs_net.1} parent=113 // pred_fallthru
          _
      $region114: #{three_inputs_net.1} parent=79 // pred_fallthru
        _
      // Predicated region
      $region115: #{three_inputs_net.1} parent=79 // pred_check
        %p557 = pneg %p553
      $region116: #{three_inputs_net.1} parent=79 // pred_check_branch
        %559 = sbr.rel (%p557) target = $region118
      $region117: #{three_inputs_net.1} parent=79 // pred_region
        %s560 = sshllo.u32 0, 1
        loop: start=0, step=1, limit=1
        $region119: #{three_inputs_net.1} parent=117 // loop_pre_header
          _
        $region120: #{three_inputs_net.1} parent=117 // loop_header
          %s562 = sphi 0, %s566
          %p563 = scmp.ge.s32.totalorder %s562, 1
          %s567 = sphi %s549, %s549
          %s568 = sphi %s550, %s550
        $region121: #{three_inputs_net.1} parent=117 // loop_header_branch
          %565 = sbr.rel (%p563) target = $region125
        $region122: #{three_inputs_net.1} parent=117 // loop_body
          %v569 = vld [vmem:[%s567] sm:%s560]
          %570 = vst [vmem:[%s568] sm:%s560] %v569
        $region123: #{three_inputs_net.1} parent=117 // loop_footer
          %s566 = sadd.s32 1, %s562
        $region124: #{three_inputs_net.1} parent=117 // loop_footer_branch
          %561 = sbr.rel target = $region120
        $region125: #{three_inputs_net.1} parent=117 // loop_exit
          _
      $region118: #{three_inputs_net.1} parent=79 // pred_fallthru
        _
      // Predicated region
      $region137: #{three_inputs_net.1} parent=79 // pred_check
        _
      $region138: #{three_inputs_net.1} parent=79 // pred_check_branch
        %594 = sbr.rel (0) target = $region140
      $region139: #{three_inputs_net.1} parent=79 // pred_region
        %595 = vsyncadd %s551, 16
      $region140: #{three_inputs_net.1} parent=79 // pred_fallthru
        _
      %s596 = sadd.s32 %s500, 2
      %s597 = sld [smem:[#allocation7 + %s596]]
      %s598 = scalar_lea.vmem %s3, %s597
      %s599 = scalar_lea.vmem [#allocation2], 2
      %s600 = scalar_lea.sflag [#allocation4], 2
      %p602 = scmp.lt.u32.totalorder 1, 8
      %p603 = pneg %p602
      // Predicated region
      $region141: #{three_inputs_net.1} parent=79 // pred_check
        _
      $region142: #{three_inputs_net.1} parent=79 // pred_check_branch
        %605 = sbr.rel (%p602) target = $region144
      $region143: #{three_inputs_net.1} parent=79 // pred_region
        %s620 = sand.u32 1, 7
        %p621 = scmp.eq.s32.totalorder %s620, 0
        %p622 = pneg %p621
        // Predicated region
        $region156: #{three_inputs_net.1} parent=143 // pred_check
          _
        $region157: #{three_inputs_net.1} parent=143 // pred_check_branch
          %624 = sbr.rel (%p621) target = $region159
        $region158: #{three_inputs_net.1} parent=143 // pred_region
          %s625 = sand.u32 1, 7
          %s626 = ssub.s32 1, %s625
          %s627 = scalar_lea.vmem %s598, %s626
          %s628 = ssub.s32 1, %s625
          %s629 = scalar_lea.vmem %s599, %s628 [#allocation2]
          %s630 = sshllo.u32 0, %s625
          loop: start=0, step=1, limit=1
          $region160: #{three_inputs_net.1} parent=158 // loop_pre_header
            _
          $region161: #{three_inputs_net.1} parent=158 // loop_header
            %s632 = sphi 0, %s636
            %p633 = scmp.ge.s32.totalorder %s632, 1
            %s637 = sphi %s627, %s627
            %s638 = sphi %s629, %s629
          $region162: #{three_inputs_net.1} parent=158 // loop_header_branch
            %635 = sbr.rel (%p633) target = $region166
          $region163: #{three_inputs_net.1} parent=158 // loop_body
            %v639 = vld [vmem:[%s637] sm:%s630]
            %640 = vst [vmem:[%s638] sm:%s630] %v639
          $region164: #{three_inputs_net.1} parent=158 // loop_footer
            %s636 = sadd.s32 1, %s632
          $region165: #{three_inputs_net.1} parent=158 // loop_footer_branch
            %631 = sbr.rel target = $region161
          $region166: #{three_inputs_net.1} parent=158 // loop_exit
            _
        $region159: #{three_inputs_net.1} parent=143 // pred_fallthru
          _
      $region144: #{three_inputs_net.1} parent=79 // pred_fallthru
        _
      // Predicated region
      $region145: #{three_inputs_net.1} parent=79 // pred_check
        %p606 = pneg %p602
      $region146: #{three_inputs_net.1} parent=79 // pred_check_branch
        %608 = sbr.rel (%p606) target = $region148
      $region147: #{three_inputs_net.1} parent=79 // pred_region
        %s609 = sshllo.u32 0, 1
        loop: start=0, step=1, limit=1
        $region149: #{three_inputs_net.1} parent=147 // loop_pre_header
          _
        $region150: #{three_inputs_net.1} parent=147 // loop_header
          %s611 = sphi 0, %s615
          %p612 = scmp.ge.s32.totalorder %s611, 1
          %s616 = sphi %s598, %s598
          %s617 = sphi %s599, %s599
        $region151: #{three_inputs_net.1} parent=147 // loop_header_branch
          %614 = sbr.rel (%p612) target = $region155
        $region152: #{three_inputs_net.1} parent=147 // loop_body
          %v618 = vld [vmem:[%s616] sm:%s609]
          %619 = vst [vmem:[%s617] sm:%s609] %v618
        $region153: #{three_inputs_net.1} parent=147 // loop_footer
          %s615 = sadd.s32 1, %s611
        $region154: #{three_inputs_net.1} parent=147 // loop_footer_branch
          %610 = sbr.rel target = $region150
        $region155: #{three_inputs_net.1} parent=147 // loop_exit
          _
      $region148: #{three_inputs_net.1} parent=79 // pred_fallthru
        _
      // Predicated region
      $region167: #{three_inputs_net.1} parent=79 // pred_check
        _
      $region168: #{three_inputs_net.1} parent=79 // pred_check_branch
        %643 = sbr.rel (0) target = $region170
      $region169: #{three_inputs_net.1} parent=79 // pred_region
        %644 = vsyncadd %s600, 16
      $region170: #{three_inputs_net.1} parent=79 // pred_fallthru
        _
      %s645 = sadd.s32 %s500, 3
      %s646 = sld [smem:[#allocation7 + %s645]]
      %s647 = scalar_lea.vmem %s3, %s646
      %s648 = scalar_lea.vmem [#allocation2], 3
      %s649 = scalar_lea.sflag [#allocation4], 3
      %p651 = scmp.lt.u32.totalorder 1, 8
      %p652 = pneg %p651
      // Predicated region
      $region171: #{three_inputs_net.1} parent=79 // pred_check
        _
      $region172: #{three_inputs_net.1} parent=79 // pred_check_branch
        %654 = sbr.rel (%p651) target = $region174
      $region173: #{three_inputs_net.1} parent=79 // pred_region
        %s669 = sand.u32 1, 7
        %p670 = scmp.eq.s32.totalorder %s669, 0
        %p671 = pneg %p670
        // Predicated region
        $region186: #{three_inputs_net.1} parent=173 // pred_check
          _
        $region187: #{three_inputs_net.1} parent=173 // pred_check_branch
          %673 = sbr.rel (%p670) target = $region189
        $region188: #{three_inputs_net.1} parent=173 // pred_region
          %s674 = sand.u32 1, 7
          %s675 = ssub.s32 1, %s674
          %s676 = scalar_lea.vmem %s647, %s675
          %s677 = ssub.s32 1, %s674
          %s678 = scalar_lea.vmem %s648, %s677 [#allocation2]
          %s679 = sshllo.u32 0, %s674
          loop: start=0, step=1, limit=1
          $region190: #{three_inputs_net.1} parent=188 // loop_pre_header
            _
          $region191: #{three_inputs_net.1} parent=188 // loop_header
            %s681 = sphi 0, %s685
            %p682 = scmp.ge.s32.totalorder %s681, 1
            %s686 = sphi %s676, %s676
            %s687 = sphi %s678, %s678
          $region192: #{three_inputs_net.1} parent=188 // loop_header_branch
            %684 = sbr.rel (%p682) target = $region196
          $region193: #{three_inputs_net.1} parent=188 // loop_body
            %v688 = vld [vmem:[%s686] sm:%s679]
            %689 = vst [vmem:[%s687] sm:%s679] %v688
          $region194: #{three_inputs_net.1} parent=188 // loop_footer
            %s685 = sadd.s32 1, %s681
          $region195: #{three_inputs_net.1} parent=188 // loop_footer_branch
            %680 = sbr.rel target = $region191
          $region196: #{three_inputs_net.1} parent=188 // loop_exit
            _
        $region189: #{three_inputs_net.1} parent=173 // pred_fallthru
          _
      $region174: #{three_inputs_net.1} parent=79 // pred_fallthru
        _
      // Predicated region
      $region175: #{three_inputs_net.1} parent=79 // pred_check
        %p655 = pneg %p651
      $region176: #{three_inputs_net.1} parent=79 // pred_check_branch
        %657 = sbr.rel (%p655) target = $region178
      $region177: #{three_inputs_net.1} parent=79 // pred_region
        %s658 = sshllo.u32 0, 1
        loop: start=0, step=1, limit=1
        $region179: #{three_inputs_net.1} parent=177 // loop_pre_header
          _
        $region180: #{three_inputs_net.1} parent=177 // loop_header
          %s660 = sphi 0, %s664
          %p661 = scmp.ge.s32.totalorder %s660, 1
          %s665 = sphi %s647, %s647
          %s666 = sphi %s648, %s648
        $region181: #{three_inputs_net.1} parent=177 // loop_header_branch
          %663 = sbr.rel (%p661) target = $region185
        $region182: #{three_inputs_net.1} parent=177 // loop_body
          %v667 = vld [vmem:[%s665] sm:%s658]
          %668 = vst [vmem:[%s666] sm:%s658] %v667
        $region183: #{three_inputs_net.1} parent=177 // loop_footer
          %s664 = sadd.s32 1, %s660
        $region184: #{three_inputs_net.1} parent=177 // loop_footer_branch
          %659 = sbr.rel target = $region180
        $region185: #{three_inputs_net.1} parent=177 // loop_exit
          _
      $region178: #{three_inputs_net.1} parent=79 // pred_fallthru
        _
      // Predicated region
      $region197: #{three_inputs_net.1} parent=79 // pred_check
        _
      $region198: #{three_inputs_net.1} parent=79 // pred_check_branch
        %692 = sbr.rel (0) target = $region200
      $region199: #{three_inputs_net.1} parent=79 // pred_region
        %693 = vsyncadd %s649, 16
      $region200: #{three_inputs_net.1} parent=79 // pred_fallthru
        _
      %s694 = sadd.s32 %s500, 4
      %s695 = sld [smem:[#allocation7 + %s694]]
      %s696 = scalar_lea.vmem %s3, %s695
      %s697 = scalar_lea.vmem [#allocation2], 4
      %s698 = scalar_lea.sflag [#allocation4], 4
      %p700 = scmp.lt.u32.totalorder 1, 8
      %p701 = pneg %p700
      // Predicated region
      $region201: #{three_inputs_net.1} parent=79 // pred_check
        _
      $region202: #{three_inputs_net.1} parent=79 // pred_check_branch
        %703 = sbr.rel (%p700) target = $region204
      $region203: #{three_inputs_net.1} parent=79 // pred_region
        %s718 = sand.u32 1, 7
        %p719 = scmp.eq.s32.totalorder %s718, 0
        %p720 = pneg %p719
        // Predicated region
        $region216: #{three_inputs_net.1} parent=203 // pred_check
          _
        $region217: #{three_inputs_net.1} parent=203 // pred_check_branch
          %722 = sbr.rel (%p719) target = $region219
        $region218: #{three_inputs_net.1} parent=203 // pred_region
          %s723 = sand.u32 1, 7
          %s724 = ssub.s32 1, %s723
          %s725 = scalar_lea.vmem %s696, %s724
          %s726 = ssub.s32 1, %s723
          %s727 = scalar_lea.vmem %s697, %s726 [#allocation2]
          %s728 = sshllo.u32 0, %s723
          loop: start=0, step=1, limit=1
          $region220: #{three_inputs_net.1} parent=218 // loop_pre_header
            _
          $region221: #{three_inputs_net.1} parent=218 // loop_header
            %s730 = sphi 0, %s734
            %p731 = scmp.ge.s32.totalorder %s730, 1
            %s735 = sphi %s725, %s725
            %s736 = sphi %s727, %s727
          $region222: #{three_inputs_net.1} parent=218 // loop_header_branch
            %733 = sbr.rel (%p731) target = $region226
          $region223: #{three_inputs_net.1} parent=218 // loop_body
            %v737 = vld [vmem:[%s735] sm:%s728]
            %738 = vst [vmem:[%s736] sm:%s728] %v737
          $region224: #{three_inputs_net.1} parent=218 // loop_footer
            %s734 = sadd.s32 1, %s730
          $region225: #{three_inputs_net.1} parent=218 // loop_footer_branch
            %729 = sbr.rel target = $region221
          $region226: #{three_inputs_net.1} parent=218 // loop_exit
            _
        $region219: #{three_inputs_net.1} parent=203 // pred_fallthru
          _
      $region204: #{three_inputs_net.1} parent=79 // pred_fallthru
        _
      // Predicated region
      $region205: #{three_inputs_net.1} parent=79 // pred_check
        %p704 = pneg %p700
      $region206: #{three_inputs_net.1} parent=79 // pred_check_branch
        %706 = sbr.rel (%p704) target = $region208
      $region207: #{three_inputs_net.1} parent=79 // pred_region
        %s707 = sshllo.u32 0, 1
        loop: start=0, step=1, limit=1
        $region209: #{three_inputs_net.1} parent=207 // loop_pre_header
          _
        $region210: #{three_inputs_net.1} parent=207 // loop_header
          %s709 = sphi 0, %s713
          %p710 = scmp.ge.s32.totalorder %s709, 1
          %s714 = sphi %s696, %s696
          %s715 = sphi %s697, %s697
        $region211: #{three_inputs_net.1} parent=207 // loop_header_branch
          %712 = sbr.rel (%p710) target = $region215
        $region212: #{three_inputs_net.1} parent=207 // loop_body
          %v716 = vld [vmem:[%s714] sm:%s707]
          %717 = vst [vmem:[%s715] sm:%s707] %v716
        $region213: #{three_inputs_net.1} parent=207 // loop_footer
          %s713 = sadd.s32 1, %s709
        $region214: #{three_inputs_net.1} parent=207 // loop_footer_branch
          %708 = sbr.rel target = $region210
        $region215: #{three_inputs_net.1} parent=207 // loop_exit
          _
      $region208: #{three_inputs_net.1} parent=79 // pred_fallthru
        _
      // Predicated region
      $region227: #{three_inputs_net.1} parent=79 // pred_check
        _
      $region228: #{three_inputs_net.1} parent=79 // pred_check_branch
        %741 = sbr.rel (0) target = $region230
      $region229: #{three_inputs_net.1} parent=79 // pred_region
        %742 = vsyncadd %s698, 16
      $region230: #{three_inputs_net.1} parent=79 // pred_fallthru
        _
      %s743 = sadd.s32 %s500, 5
      %s744 = sld [smem:[#allocation7 + %s743]]
      %s745 = scalar_lea.vmem %s3, %s744
      %s746 = scalar_lea.vmem [#allocation2], 5
      %s747 = scalar_lea.sflag [#allocation4], 5
      %p749 = scmp.lt.u32.totalorder 1, 8
      %p750 = pneg %p749
      // Predicated region
      $region231: #{three_inputs_net.1} parent=79 // pred_check
        _
      $region232: #{three_inputs_net.1} parent=79 // pred_check_branch
        %752 = sbr.rel (%p749) target = $region234
      $region233: #{three_inputs_net.1} parent=79 // pred_region
        %s767 = sand.u32 1, 7
        %p768 = scmp.eq.s32.totalorder %s767, 0
        %p769 = pneg %p768
        // Predicated region
        $region246: #{three_inputs_net.1} parent=233 // pred_check
          _
        $region247: #{three_inputs_net.1} parent=233 // pred_check_branch
          %771 = sbr.rel (%p768) target = $region249
        $region248: #{three_inputs_net.1} parent=233 // pred_region
          %s772 = sand.u32 1, 7
          %s773 = ssub.s32 1, %s772
          %s774 = scalar_lea.vmem %s745, %s773
          %s775 = ssub.s32 1, %s772
          %s776 = scalar_lea.vmem %s746, %s775 [#allocation2]
          %s777 = sshllo.u32 0, %s772
          loop: start=0, step=1, limit=1
          $region250: #{three_inputs_net.1} parent=248 // loop_pre_header
            _
          $region251: #{three_inputs_net.1} parent=248 // loop_header
            %s779 = sphi 0, %s783
            %p780 = scmp.ge.s32.totalorder %s779, 1
            %s784 = sphi %s774, %s774
            %s785 = sphi %s776, %s776
          $region252: #{three_inputs_net.1} parent=248 // loop_header_branch
            %782 = sbr.rel (%p780) target = $region256
          $region253: #{three_inputs_net.1} parent=248 // loop_body
            %v786 = vld [vmem:[%s784] sm:%s777]
            %787 = vst [vmem:[%s785] sm:%s777] %v786
          $region254: #{three_inputs_net.1} parent=248 // loop_footer
            %s783 = sadd.s32 1, %s779
          $region255: #{three_inputs_net.1} parent=248 // loop_footer_branch
            %778 = sbr.rel target = $region251
          $region256: #{three_inputs_net.1} parent=248 // loop_exit
            _
        $region249: #{three_inputs_net.1} parent=233 // pred_fallthru
          _
      $region234: #{three_inputs_net.1} parent=79 // pred_fallthru
        _
      // Predicated region
      $region235: #{three_inputs_net.1} parent=79 // pred_check
        %p753 = pneg %p749
      $region236: #{three_inputs_net.1} parent=79 // pred_check_branch
        %755 = sbr.rel (%p753) target = $region238
      $region237: #{three_inputs_net.1} parent=79 // pred_region
        %s756 = sshllo.u32 0, 1
        loop: start=0, step=1, limit=1
        $region239: #{three_inputs_net.1} parent=237 // loop_pre_header
          _
        $region240: #{three_inputs_net.1} parent=237 // loop_header
          %s758 = sphi 0, %s762
          %p759 = scmp.ge.s32.totalorder %s758, 1
          %s763 = sphi %s745, %s745
          %s764 = sphi %s746, %s746
        $region241: #{three_inputs_net.1} parent=237 // loop_header_branch
          %761 = sbr.rel (%p759) target = $region245
        $region242: #{three_inputs_net.1} parent=237 // loop_body
          %v765 = vld [vmem:[%s763] sm:%s756]
          %766 = vst [vmem:[%s764] sm:%s756] %v765
        $region243: #{three_inputs_net.1} parent=237 // loop_footer
          %s762 = sadd.s32 1, %s758
        $region244: #{three_inputs_net.1} parent=237 // loop_footer_branch
          %757 = sbr.rel target = $region240
        $region245: #{three_inputs_net.1} parent=237 // loop_exit
          _
      $region238: #{three_inputs_net.1} parent=79 // pred_fallthru
        _
      // Predicated region
      $region257: #{three_inputs_net.1} parent=79 // pred_check
        _
      $region258: #{three_inputs_net.1} parent=79 // pred_check_branch
        %790 = sbr.rel (0) target = $region260
      $region259: #{three_inputs_net.1} parent=79 // pred_region
        %791 = vsyncadd %s747, 16
      $region260: #{three_inputs_net.1} parent=79 // pred_fallthru
        _
      %s792 = sadd.s32 %s500, 6
      %s793 = sld [smem:[#allocation7 + %s792]]
      %s794 = scalar_lea.vmem %s3, %s793
      %s795 = scalar_lea.vmem [#allocation2], 6
      %s796 = scalar_lea.sflag [#allocation4], 6
      %p798 = scmp.lt.u32.totalorder 1, 8
      %p799 = pneg %p798
      // Predicated region
      $region261: #{three_inputs_net.1} parent=79 // pred_check
        _
      $region262: #{three_inputs_net.1} parent=79 // pred_check_branch
        %801 = sbr.rel (%p798) target = $region264
      $region263: #{three_inputs_net.1} parent=79 // pred_region
        %s816 = sand.u32 1, 7
        %p817 = scmp.eq.s32.totalorder %s816, 0
        %p818 = pneg %p817
        // Predicated region
        $region276: #{three_inputs_net.1} parent=263 // pred_check
          _
        $region277: #{three_inputs_net.1} parent=263 // pred_check_branch
          %820 = sbr.rel (%p817) target = $region279
        $region278: #{three_inputs_net.1} parent=263 // pred_region
          %s821 = sand.u32 1, 7
          %s822 = ssub.s32 1, %s821
          %s823 = scalar_lea.vmem %s794, %s822
          %s824 = ssub.s32 1, %s821
          %s825 = scalar_lea.vmem %s795, %s824 [#allocation2]
          %s826 = sshllo.u32 0, %s821
          loop: start=0, step=1, limit=1
          $region280: #{three_inputs_net.1} parent=278 // loop_pre_header
            _
          $region281: #{three_inputs_net.1} parent=278 // loop_header
            %s828 = sphi 0, %s832
            %p829 = scmp.ge.s32.totalorder %s828, 1
            %s833 = sphi %s823, %s823
            %s834 = sphi %s825, %s825
          $region282: #{three_inputs_net.1} parent=278 // loop_header_branch
            %831 = sbr.rel (%p829) target = $region286
          $region283: #{three_inputs_net.1} parent=278 // loop_body
            %v835 = vld [vmem:[%s833] sm:%s826]
            %836 = vst [vmem:[%s834] sm:%s826] %v835
          $region284: #{three_inputs_net.1} parent=278 // loop_footer
            %s832 = sadd.s32 1, %s828
          $region285: #{three_inputs_net.1} parent=278 // loop_footer_branch
            %827 = sbr.rel target = $region281
          $region286: #{three_inputs_net.1} parent=278 // loop_exit
            _
        $region279: #{three_inputs_net.1} parent=263 // pred_fallthru
          _
      $region264: #{three_inputs_net.1} parent=79 // pred_fallthru
        _
      // Predicated region
      $region265: #{three_inputs_net.1} parent=79 // pred_check
        %p802 = pneg %p798
      $region266: #{three_inputs_net.1} parent=79 // pred_check_branch
        %804 = sbr.rel (%p802) target = $region268
      $region267: #{three_inputs_net.1} parent=79 // pred_region
        %s805 = sshllo.u32 0, 1
        loop: start=0, step=1, limit=1
        $region269: #{three_inputs_net.1} parent=267 // loop_pre_header
          _
        $region270: #{three_inputs_net.1} parent=267 // loop_header
          %s807 = sphi 0, %s811
          %p808 = scmp.ge.s32.totalorder %s807, 1
          %s812 = sphi %s794, %s794
          %s813 = sphi %s795, %s795
        $region271: #{three_inputs_net.1} parent=267 // loop_header_branch
          %810 = sbr.rel (%p808) target = $region275
        $region272: #{three_inputs_net.1} parent=267 // loop_body
          %v814 = vld [vmem:[%s812] sm:%s805]
          %815 = vst [vmem:[%s813] sm:%s805] %v814
        $region273: #{three_inputs_net.1} parent=267 // loop_footer
          %s811 = sadd.s32 1, %s807
        $region274: #{three_inputs_net.1} parent=267 // loop_footer_branch
          %806 = sbr.rel target = $region270
        $region275: #{three_inputs_net.1} parent=267 // loop_exit
          _
      $region268: #{three_inputs_net.1} parent=79 // pred_fallthru
        _
      // Predicated region
      $region287: #{three_inputs_net.1} parent=79 // pred_check
        _
      $region288: #{three_inputs_net.1} parent=79 // pred_check_branch
        %839 = sbr.rel (0) target = $region290
      $region289: #{three_inputs_net.1} parent=79 // pred_region
        %840 = vsyncadd %s796, 16
      $region290: #{three_inputs_net.1} parent=79 // pred_fallthru
        _
      %s841 = sadd.s32 %s500, 7
      %s842 = sld [smem:[#allocation7 + %s841]]
      %s843 = scalar_lea.vmem %s3, %s842
      %s844 = scalar_lea.vmem [#allocation2], 7
      %s845 = scalar_lea.sflag [#allocation4], 7
      %p847 = scmp.lt.u32.totalorder 1, 8
      %p848 = pneg %p847
      // Predicated region
      $region291: #{three_inputs_net.1} parent=79 // pred_check
        _
      $region292: #{three_inputs_net.1} parent=79 // pred_check_branch
        %850 = sbr.rel (%p847) target = $region294
      $region293: #{three_inputs_net.1} parent=79 // pred_region
        %s865 = sand.u32 1, 7
        %p866 = scmp.eq.s32.totalorder %s865, 0
        %p867 = pneg %p866
        // Predicated region
        $region306: #{three_inputs_net.1} parent=293 // pred_check
          _
        $region307: #{three_inputs_net.1} parent=293 // pred_check_branch
          %869 = sbr.rel (%p866) target = $region309
        $region308: #{three_inputs_net.1} parent=293 // pred_region
          %s870 = sand.u32 1, 7
          %s871 = ssub.s32 1, %s870
          %s872 = scalar_lea.vmem %s843, %s871
          %s873 = ssub.s32 1, %s870
          %s874 = scalar_lea.vmem %s844, %s873 [#allocation2]
          %s875 = sshllo.u32 0, %s870
          loop: start=0, step=1, limit=1
          $region310: #{three_inputs_net.1} parent=308 // loop_pre_header
            _
          $region311: #{three_inputs_net.1} parent=308 // loop_header
            %s877 = sphi 0, %s881
            %p878 = scmp.ge.s32.totalorder %s877, 1
            %s882 = sphi %s872, %s872
            %s883 = sphi %s874, %s874
          $region312: #{three_inputs_net.1} parent=308 // loop_header_branch
            %880 = sbr.rel (%p878) target = $region316
          $region313: #{three_inputs_net.1} parent=308 // loop_body
            %v884 = vld [vmem:[%s882] sm:%s875]
            %885 = vst [vmem:[%s883] sm:%s875] %v884
          $region314: #{three_inputs_net.1} parent=308 // loop_footer
            %s881 = sadd.s32 1, %s877
          $region315: #{three_inputs_net.1} parent=308 // loop_footer_branch
            %876 = sbr.rel target = $region311
          $region316: #{three_inputs_net.1} parent=308 // loop_exit
            _
        $region309: #{three_inputs_net.1} parent=293 // pred_fallthru
          _
      $region294: #{three_inputs_net.1} parent=79 // pred_fallthru
        _
      // Predicated region
      $region295: #{three_inputs_net.1} parent=79 // pred_check
        %p851 = pneg %p847
      $region296: #{three_inputs_net.1} parent=79 // pred_check_branch
        %853 = sbr.rel (%p851) target = $region298
      $region297: #{three_inputs_net.1} parent=79 // pred_region
        %s854 = sshllo.u32 0, 1
        loop: start=0, step=1, limit=1
        $region299: #{three_inputs_net.1} parent=297 // loop_pre_header
          _
        $region300: #{three_inputs_net.1} parent=297 // loop_header
          %s856 = sphi 0, %s860
          %p857 = scmp.ge.s32.totalorder %s856, 1
          %s861 = sphi %s843, %s843
          %s862 = sphi %s844, %s844
        $region301: #{three_inputs_net.1} parent=297 // loop_header_branch
          %859 = sbr.rel (%p857) target = $region305
        $region302: #{three_inputs_net.1} parent=297 // loop_body
          %v863 = vld [vmem:[%s861] sm:%s854]
          %864 = vst [vmem:[%s862] sm:%s854] %v863
        $region303: #{three_inputs_net.1} parent=297 // loop_footer
          %s860 = sadd.s32 1, %s856
        $region304: #{three_inputs_net.1} parent=297 // loop_footer_branch
          %855 = sbr.rel target = $region300
        $region305: #{three_inputs_net.1} parent=297 // loop_exit
          _
      $region298: #{three_inputs_net.1} parent=79 // pred_fallthru
        _
      // Predicated region
      $region317: #{three_inputs_net.1} parent=79 // pred_check
        _
      $region318: #{three_inputs_net.1} parent=79 // pred_check_branch
        %888 = sbr.rel (0) target = $region320
      $region319: #{three_inputs_net.1} parent=79 // pred_region
        %889 = vsyncadd %s845, 16
      $region320: #{three_inputs_net.1} parent=79 // pred_fallthru
        _
      %s890 = smul.u32 %s40, 12
      %s891 = sld [smem:[#allocation8 + %s890]]
      %s892 = scalar_lea.vmem %s4, %s891
      %p894 = scmp.lt.u32.totalorder 1, 8
      %p895 = pneg %p894
      // Predicated region
      $region321: #{three_inputs_net.1} parent=79 // pred_check
        _
      $region322: #{three_inputs_net.1} parent=79 // pred_check_branch
        %897 = sbr.rel (%p894) target = $region324
      $region323: #{three_inputs_net.1} parent=79 // pred_region
        %s912 = sand.u32 1, 7
        %p913 = scmp.eq.s32.totalorder %s912, 0
        %p914 = pneg %p913
        // Predicated region
        $region336: #{three_inputs_net.1} parent=323 // pred_check
          _
        $region337: #{three_inputs_net.1} parent=323 // pred_check_branch
          %916 = sbr.rel (%p913) target = $region339
        $region338: #{three_inputs_net.1} parent=323 // pred_region
          %s917 = sand.u32 1, 7
          %s918 = ssub.s32 1, %s917
          %s919 = scalar_lea.vmem %s892, %s918
          %s920 = ssub.s32 1, %s917
          %s921 = scalar_lea.vmem [#allocation3], %s920
          %s922 = sshllo.u32 0, %s917
          loop: start=0, step=1, limit=1
          $region340: #{three_inputs_net.1} parent=338 // loop_pre_header
            _
          $region341: #{three_inputs_net.1} parent=338 // loop_header
            %s924 = sphi 0, %s928
            %p925 = scmp.ge.s32.totalorder %s924, 1
            %s929 = sphi %s919, %s919
            %s930 = sphi %s921, %s921
          $region342: #{three_inputs_net.1} parent=338 // loop_header_branch
            %927 = sbr.rel (%p925) target = $region346
          $region343: #{three_inputs_net.1} parent=338 // loop_body
            %v931 = vld [vmem:[%s929] sm:%s922]
            %932 = vst [vmem:[%s930] sm:%s922] %v931
          $region344: #{three_inputs_net.1} parent=338 // loop_footer
            %s928 = sadd.s32 1, %s924
          $region345: #{three_inputs_net.1} parent=338 // loop_footer_branch
            %923 = sbr.rel target = $region341
          $region346: #{three_inputs_net.1} parent=338 // loop_exit
            _
        $region339: #{three_inputs_net.1} parent=323 // pred_fallthru
          _
      $region324: #{three_inputs_net.1} parent=79 // pred_fallthru
        _
      // Predicated region
      $region325: #{three_inputs_net.1} parent=79 // pred_check
        %p898 = pneg %p894
      $region326: #{three_inputs_net.1} parent=79 // pred_check_branch
        %900 = sbr.rel (%p898) target = $region328
      $region327: #{three_inputs_net.1} parent=79 // pred_region
        %s901 = sshllo.u32 0, 1
        loop: start=0, step=1, limit=1
        $region329: #{three_inputs_net.1} parent=327 // loop_pre_header
          _
        $region330: #{three_inputs_net.1} parent=327 // loop_header
          %s903 = sphi 0, %s907
          %p904 = scmp.ge.s32.totalorder %s903, 1
          %s908 = sphi %s892, %s892
          %s909 = sphi [#allocation3], [#allocation3]
        $region331: #{three_inputs_net.1} parent=327 // loop_header_branch
          %906 = sbr.rel (%p904) target = $region335
        $region332: #{three_inputs_net.1} parent=327 // loop_body
          %v910 = vld [vmem:[%s908] sm:%s901]
          %911 = vst [vmem:[%s909] sm:%s901] %v910
        $region333: #{three_inputs_net.1} parent=327 // loop_footer
          %s907 = sadd.s32 1, %s903
        $region334: #{three_inputs_net.1} parent=327 // loop_footer_branch
          %902 = sbr.rel target = $region330
        $region335: #{three_inputs_net.1} parent=327 // loop_exit
          _
      $region328: #{three_inputs_net.1} parent=79 // pred_fallthru
        _
      // Predicated region
      $region347: #{three_inputs_net.1} parent=79 // pred_check
        _
      $region348: #{three_inputs_net.1} parent=79 // pred_check_branch
        %935 = sbr.rel (0) target = $region350
      $region349: #{three_inputs_net.1} parent=79 // pred_region
        %936 = vsyncadd [#allocation5], 16
      $region350: #{three_inputs_net.1} parent=79 // pred_fallthru
        _
      %s937 = sadd.s32 %s890, 1
      %s938 = sld [smem:[#allocation8 + %s937]]
      %s939 = scalar_lea.vmem %s4, %s938
      %s940 = scalar_lea.vmem [#allocation3], 1
      %s941 = scalar_lea.sflag [#allocation5], 1
      %p943 = scmp.lt.u32.totalorder 1, 8
      %p944 = pneg %p943
      // Predicated region
      $region351: #{three_inputs_net.1} parent=79 // pred_check
        _
      $region352: #{three_inputs_net.1} parent=79 // pred_check_branch
        %946 = sbr.rel (%p943) target = $region354
      $region353: #{three_inputs_net.1} parent=79 // pred_region
        %s961 = sand.u32 1, 7
        %p962 = scmp.eq.s32.totalorder %s961, 0
        %p963 = pneg %p962
        // Predicated region
        $region366: #{three_inputs_net.1} parent=353 // pred_check
          _
        $region367: #{three_inputs_net.1} parent=353 // pred_check_branch
          %965 = sbr.rel (%p962) target = $region369
        $region368: #{three_inputs_net.1} parent=353 // pred_region
          %s966 = sand.u32 1, 7
          %s967 = ssub.s32 1, %s966
          %s968 = scalar_lea.vmem %s939, %s967
          %s969 = ssub.s32 1, %s966
          %s970 = scalar_lea.vmem %s940, %s969 [#allocation3]
          %s971 = sshllo.u32 0, %s966
          loop: start=0, step=1, limit=1
          $region370: #{three_inputs_net.1} parent=368 // loop_pre_header
            _
          $region371: #{three_inputs_net.1} parent=368 // loop_header
            %s973 = sphi 0, %s977
            %p974 = scmp.ge.s32.totalorder %s973, 1
            %s978 = sphi %s968, %s968
            %s979 = sphi %s970, %s970
          $region372: #{three_inputs_net.1} parent=368 // loop_header_branch
            %976 = sbr.rel (%p974) target = $region376
          $region373: #{three_inputs_net.1} parent=368 // loop_body
            %v980 = vld [vmem:[%s978] sm:%s971]
            %981 = vst [vmem:[%s979] sm:%s971] %v980
          $region374: #{three_inputs_net.1} parent=368 // loop_footer
            %s977 = sadd.s32 1, %s973
          $region375: #{three_inputs_net.1} parent=368 // loop_footer_branch
            %972 = sbr.rel target = $region371
          $region376: #{three_inputs_net.1} parent=368 // loop_exit
            _
        $region369: #{three_inputs_net.1} parent=353 // pred_fallthru
          _
      $region354: #{three_inputs_net.1} parent=79 // pred_fallthru
        _
      // Predicated region
      $region355: #{three_inputs_net.1} parent=79 // pred_check
        %p947 = pneg %p943
      $region356: #{three_inputs_net.1} parent=79 // pred_check_branch
        %949 = sbr.rel (%p947) target = $region358
      $region357: #{three_inputs_net.1} parent=79 // pred_region
        %s950 = sshllo.u32 0, 1
        loop: start=0, step=1, limit=1
        $region359: #{three_inputs_net.1} parent=357 // loop_pre_header
          _
        $region360: #{three_inputs_net.1} parent=357 // loop_header
          %s952 = sphi 0, %s956
          %p953 = scmp.ge.s32.totalorder %s952, 1
          %s957 = sphi %s939, %s939
          %s958 = sphi %s940, %s940
        $region361: #{three_inputs_net.1} parent=357 // loop_header_branch
          %955 = sbr.rel (%p953) target = $region365
        $region362: #{three_inputs_net.1} parent=357 // loop_body
          %v959 = vld [vmem:[%s957] sm:%s950]
          %960 = vst [vmem:[%s958] sm:%s950] %v959
        $region363: #{three_inputs_net.1} parent=357 // loop_footer
          %s956 = sadd.s32 1, %s952
        $region364: #{three_inputs_net.1} parent=357 // loop_footer_branch
          %951 = sbr.rel target = $region360
        $region365: #{three_inputs_net.1} parent=357 // loop_exit
          _
      $region358: #{three_inputs_net.1} parent=79 // pred_fallthru
        _
      // Predicated region
      $region377: #{three_inputs_net.1} parent=79 // pred_check
        _
      $region378: #{three_inputs_net.1} parent=79 // pred_check_branch
        %984 = sbr.rel (0) target = $region380
      $region379: #{three_inputs_net.1} parent=79 // pred_region
        %985 = vsyncadd %s941, 16
      $region380: #{three_inputs_net.1} parent=79 // pred_fallthru
        _
      %s986 = sadd.s32 %s890, 2
      %s987 = sld [smem:[#allocation8 + %s986]]
      %s988 = scalar_lea.vmem %s4, %s987
      %s989 = scalar_lea.vmem [#allocation3], 2
      %s990 = scalar_lea.sflag [#allocation5], 2
      %p992 = scmp.lt.u32.totalorder 1, 8
      %p993 = pneg %p992
      // Predicated region
      $region381: #{three_inputs_net.1} parent=79 // pred_check
        _
      $region382: #{three_inputs_net.1} parent=79 // pred_check_branch
        %995 = sbr.rel (%p992) target = $region384
      $region383: #{three_inputs_net.1} parent=79 // pred_region
        %s1010 = sand.u32 1, 7
        %p1011 = scmp.eq.s32.totalorder %s1010, 0
        %p1012 = pneg %p1011
        // Predicated region
        $region396: #{three_inputs_net.1} parent=383 // pred_check
          _
        $region397: #{three_inputs_net.1} parent=383 // pred_check_branch
          %1014 = sbr.rel (%p1011) target = $region399
        $region398: #{three_inputs_net.1} parent=383 // pred_region
          %s1015 = sand.u32 1, 7
          %s1016 = ssub.s32 1, %s1015
          %s1017 = scalar_lea.vmem %s988, %s1016
          %s1018 = ssub.s32 1, %s1015
          %s1019 = scalar_lea.vmem %s989, %s1018 [#allocation3]
          %s1020 = sshllo.u32 0, %s1015
          loop: start=0, step=1, limit=1
          $region400: #{three_inputs_net.1} parent=398 // loop_pre_header
            _
          $region401: #{three_inputs_net.1} parent=398 // loop_header
            %s1022 = sphi 0, %s1026
            %p1023 = scmp.ge.s32.totalorder %s1022, 1
            %s1027 = sphi %s1017, %s1017
            %s1028 = sphi %s1019, %s1019
          $region402: #{three_inputs_net.1} parent=398 // loop_header_branch
            %1025 = sbr.rel (%p1023) target = $region406
          $region403: #{three_inputs_net.1} parent=398 // loop_body
            %v1029 = vld [vmem:[%s1027] sm:%s1020]
            %1030 = vst [vmem:[%s1028] sm:%s1020] %v1029
          $region404: #{three_inputs_net.1} parent=398 // loop_footer
            %s1026 = sadd.s32 1, %s1022
          $region405: #{three_inputs_net.1} parent=398 // loop_footer_branch
            %1021 = sbr.rel target = $region401
          $region406: #{three_inputs_net.1} parent=398 // loop_exit
            _
        $region399: #{three_inputs_net.1} parent=383 // pred_fallthru
          _
      $region384: #{three_inputs_net.1} parent=79 // pred_fallthru
        _
      // Predicated region
      $region385: #{three_inputs_net.1} parent=79 // pred_check
        %p996 = pneg %p992
      $region386: #{three_inputs_net.1} parent=79 // pred_check_branch
        %998 = sbr.rel (%p996) target = $region388
      $region387: #{three_inputs_net.1} parent=79 // pred_region
        %s999 = sshllo.u32 0, 1
        loop: start=0, step=1, limit=1
        $region389: #{three_inputs_net.1} parent=387 // loop_pre_header
          _
        $region390: #{three_inputs_net.1} parent=387 // loop_header
          %s1001 = sphi 0, %s1005
          %p1002 = scmp.ge.s32.totalorder %s1001, 1
          %s1006 = sphi %s988, %s988
          %s1007 = sphi %s989, %s989
        $region391: #{three_inputs_net.1} parent=387 // loop_header_branch
          %1004 = sbr.rel (%p1002) target = $region395
        $region392: #{three_inputs_net.1} parent=387 // loop_body
          %v1008 = vld [vmem:[%s1006] sm:%s999]
          %1009 = vst [vmem:[%s1007] sm:%s999] %v1008
        $region393: #{three_inputs_net.1} parent=387 // loop_footer
          %s1005 = sadd.s32 1, %s1001
        $region394: #{three_inputs_net.1} parent=387 // loop_footer_branch
          %1000 = sbr.rel target = $region390
        $region395: #{three_inputs_net.1} parent=387 // loop_exit
          _
      $region388: #{three_inputs_net.1} parent=79 // pred_fallthru
        _
      // Predicated region
      $region407: #{three_inputs_net.1} parent=79 // pred_check
        _
      $region408: #{three_inputs_net.1} parent=79 // pred_check_branch
        %1033 = sbr.rel (0) target = $region410
      $region409: #{three_inputs_net.1} parent=79 // pred_region
        %1034 = vsyncadd %s990, 16
      $region410: #{three_inputs_net.1} parent=79 // pred_fallthru
        _
      %s1035 = sadd.s32 %s890, 3
      %s1036 = sld [smem:[#allocation8 + %s1035]]
      %s1037 = scalar_lea.vmem %s4, %s1036
      %s1038 = scalar_lea.vmem [#allocation3], 3
      %s1039 = scalar_lea.sflag [#allocation5], 3
      %p1041 = scmp.lt.u32.totalorder 1, 8
      %p1042 = pneg %p1041
      // Predicated region
      $region411: #{three_inputs_net.1} parent=79 // pred_check
        _
      $region412: #{three_inputs_net.1} parent=79 // pred_check_branch
        %1044 = sbr.rel (%p1041) target = $region414
      $region413: #{three_inputs_net.1} parent=79 // pred_region
        %s1059 = sand.u32 1, 7
        %p1060 = scmp.eq.s32.totalorder %s1059, 0
        %p1061 = pneg %p1060
        // Predicated region
        $region426: #{three_inputs_net.1} parent=413 // pred_check
          _
        $region427: #{three_inputs_net.1} parent=413 // pred_check_branch
          %1063 = sbr.rel (%p1060) target = $region429
        $region428: #{three_inputs_net.1} parent=413 // pred_region
          %s1064 = sand.u32 1, 7
          %s1065 = ssub.s32 1, %s1064
          %s1066 = scalar_lea.vmem %s1037, %s1065
          %s1067 = ssub.s32 1, %s1064
          %s1068 = scalar_lea.vmem %s1038, %s1067 [#allocation3]
          %s1069 = sshllo.u32 0, %s1064
          loop: start=0, step=1, limit=1
          $region430: #{three_inputs_net.1} parent=428 // loop_pre_header
            _
          $region431: #{three_inputs_net.1} parent=428 // loop_header
            %s1071 = sphi 0, %s1075
            %p1072 = scmp.ge.s32.totalorder %s1071, 1
            %s1076 = sphi %s1066, %s1066
            %s1077 = sphi %s1068, %s1068
          $region432: #{three_inputs_net.1} parent=428 // loop_header_branch
            %1074 = sbr.rel (%p1072) target = $region436
          $region433: #{three_inputs_net.1} parent=428 // loop_body
            %v1078 = vld [vmem:[%s1076] sm:%s1069]
            %1079 = vst [vmem:[%s1077] sm:%s1069] %v1078
          $region434: #{three_inputs_net.1} parent=428 // loop_footer
            %s1075 = sadd.s32 1, %s1071
          $region435: #{three_inputs_net.1} parent=428 // loop_footer_branch
            %1070 = sbr.rel target = $region431
          $region436: #{three_inputs_net.1} parent=428 // loop_exit
            _
        $region429: #{three_inputs_net.1} parent=413 // pred_fallthru
          _
      $region414: #{three_inputs_net.1} parent=79 // pred_fallthru
        _
      // Predicated region
      $region415: #{three_inputs_net.1} parent=79 // pred_check
        %p1045 = pneg %p1041
      $region416: #{three_inputs_net.1} parent=79 // pred_check_branch
        %1047 = sbr.rel (%p1045) target = $region418
      $region417: #{three_inputs_net.1} parent=79 // pred_region
        %s1048 = sshllo.u32 0, 1
        loop: start=0, step=1, limit=1
        $region419: #{three_inputs_net.1} parent=417 // loop_pre_header
          _
        $region420: #{three_inputs_net.1} parent=417 // loop_header
          %s1050 = sphi 0, %s1054
          %p1051 = scmp.ge.s32.totalorder %s1050, 1
          %s1055 = sphi %s1037, %s1037
          %s1056 = sphi %s1038, %s1038
        $region421: #{three_inputs_net.1} parent=417 // loop_header_branch
          %1053 = sbr.rel (%p1051) target = $region425
        $region422: #{three_inputs_net.1} parent=417 // loop_body
          %v1057 = vld [vmem:[%s1055] sm:%s1048]
          %1058 = vst [vmem:[%s1056] sm:%s1048] %v1057
        $region423: #{three_inputs_net.1} parent=417 // loop_footer
          %s1054 = sadd.s32 1, %s1050
        $region424: #{three_inputs_net.1} parent=417 // loop_footer_branch
          %1049 = sbr.rel target = $region420
        $region425: #{three_inputs_net.1} parent=417 // loop_exit
          _
      $region418: #{three_inputs_net.1} parent=79 // pred_fallthru
        _
      // Predicated region
      $region437: #{three_inputs_net.1} parent=79 // pred_check
        _
      $region438: #{three_inputs_net.1} parent=79 // pred_check_branch
        %1082 = sbr.rel (0) target = $region440
      $region439: #{three_inputs_net.1} parent=79 // pred_region
        %1083 = vsyncadd %s1039, 16
      $region440: #{three_inputs_net.1} parent=79 // pred_fallthru
        _
      %s1084 = sadd.s32 %s890, 4
      %s1085 = sld [smem:[#allocation8 + %s1084]]
      %s1086 = scalar_lea.vmem %s4, %s1085
      %s1087 = scalar_lea.vmem [#allocation3], 4
      %s1088 = scalar_lea.sflag [#allocation5], 4
      %p1090 = scmp.lt.u32.totalorder 1, 8
      %p1091 = pneg %p1090
      // Predicated region
      $region441: #{three_inputs_net.1} parent=79 // pred_check
        _
      $region442: #{three_inputs_net.1} parent=79 // pred_check_branch
        %1093 = sbr.rel (%p1090) target = $region444
      $region443: #{three_inputs_net.1} parent=79 // pred_region
        %s1108 = sand.u32 1, 7
        %p1109 = scmp.eq.s32.totalorder %s1108, 0
        %p1110 = pneg %p1109
        // Predicated region
        $region456: #{three_inputs_net.1} parent=443 // pred_check
          _
        $region457: #{three_inputs_net.1} parent=443 // pred_check_branch
          %1112 = sbr.rel (%p1109) target = $region459
        $region458: #{three_inputs_net.1} parent=443 // pred_region
          %s1113 = sand.u32 1, 7
          %s1114 = ssub.s32 1, %s1113
          %s1115 = scalar_lea.vmem %s1086, %s1114
          %s1116 = ssub.s32 1, %s1113
          %s1117 = scalar_lea.vmem %s1087, %s1116 [#allocation3]
          %s1118 = sshllo.u32 0, %s1113
          loop: start=0, step=1, limit=1
          $region460: #{three_inputs_net.1} parent=458 // loop_pre_header
            _
          $region461: #{three_inputs_net.1} parent=458 // loop_header
            %s1120 = sphi 0, %s1124
            %p1121 = scmp.ge.s32.totalorder %s1120, 1
            %s1125 = sphi %s1115, %s1115
            %s1126 = sphi %s1117, %s1117
          $region462: #{three_inputs_net.1} parent=458 // loop_header_branch
            %1123 = sbr.rel (%p1121) target = $region466
          $region463: #{three_inputs_net.1} parent=458 // loop_body
            %v1127 = vld [vmem:[%s1125] sm:%s1118]
            %1128 = vst [vmem:[%s1126] sm:%s1118] %v1127
          $region464: #{three_inputs_net.1} parent=458 // loop_footer
            %s1124 = sadd.s32 1, %s1120
          $region465: #{three_inputs_net.1} parent=458 // loop_footer_branch
            %1119 = sbr.rel target = $region461
          $region466: #{three_inputs_net.1} parent=458 // loop_exit
            _
        $region459: #{three_inputs_net.1} parent=443 // pred_fallthru
          _
      $region444: #{three_inputs_net.1} parent=79 // pred_fallthru
        _
      // Predicated region
      $region445: #{three_inputs_net.1} parent=79 // pred_check
        %p1094 = pneg %p1090
      $region446: #{three_inputs_net.1} parent=79 // pred_check_branch
        %1096 = sbr.rel (%p1094) target = $region448
      $region447: #{three_inputs_net.1} parent=79 // pred_region
        %s1097 = sshllo.u32 0, 1
        loop: start=0, step=1, limit=1
        $region449: #{three_inputs_net.1} parent=447 // loop_pre_header
          _
        $region450: #{three_inputs_net.1} parent=447 // loop_header
          %s1099 = sphi 0, %s1103
          %p1100 = scmp.ge.s32.totalorder %s1099, 1
          %s1104 = sphi %s1086, %s1086
          %s1105 = sphi %s1087, %s1087
        $region451: #{three_inputs_net.1} parent=447 // loop_header_branch
          %1102 = sbr.rel (%p1100) target = $region455
        $region452: #{three_inputs_net.1} parent=447 // loop_body
          %v1106 = vld [vmem:[%s1104] sm:%s1097]
          %1107 = vst [vmem:[%s1105] sm:%s1097] %v1106
        $region453: #{three_inputs_net.1} parent=447 // loop_footer
          %s1103 = sadd.s32 1, %s1099
        $region454: #{three_inputs_net.1} parent=447 // loop_footer_branch
          %1098 = sbr.rel target = $region450
        $region455: #{three_inputs_net.1} parent=447 // loop_exit
          _
      $region448: #{three_inputs_net.1} parent=79 // pred_fallthru
        _
      // Predicated region
      $region467: #{three_inputs_net.1} parent=79 // pred_check
        _
      $region468: #{three_inputs_net.1} parent=79 // pred_check_branch
        %1131 = sbr.rel (0) target = $region470
      $region469: #{three_inputs_net.1} parent=79 // pred_region
        %1132 = vsyncadd %s1088, 16
      $region470: #{three_inputs_net.1} parent=79 // pred_fallthru
        _
      %s1133 = sadd.s32 %s890, 5
      %s1134 = sld [smem:[#allocation8 + %s1133]]
      %s1135 = scalar_lea.vmem %s4, %s1134
      %s1136 = scalar_lea.vmem [#allocation3], 5
      %s1137 = scalar_lea.sflag [#allocation5], 5
      %p1139 = scmp.lt.u32.totalorder 1, 8
      %p1140 = pneg %p1139
      // Predicated region
      $region471: #{three_inputs_net.1} parent=79 // pred_check
        _
      $region472: #{three_inputs_net.1} parent=79 // pred_check_branch
        %1142 = sbr.rel (%p1139) target = $region474
      $region473: #{three_inputs_net.1} parent=79 // pred_region
        %s1157 = sand.u32 1, 7
        %p1158 = scmp.eq.s32.totalorder %s1157, 0
        %p1159 = pneg %p1158
        // Predicated region
        $region486: #{three_inputs_net.1} parent=473 // pred_check
          _
        $region487: #{three_inputs_net.1} parent=473 // pred_check_branch
          %1161 = sbr.rel (%p1158) target = $region489
        $region488: #{three_inputs_net.1} parent=473 // pred_region
          %s1162 = sand.u32 1, 7
          %s1163 = ssub.s32 1, %s1162
          %s1164 = scalar_lea.vmem %s1135, %s1163
          %s1165 = ssub.s32 1, %s1162
          %s1166 = scalar_lea.vmem %s1136, %s1165 [#allocation3]
          %s1167 = sshllo.u32 0, %s1162
          loop: start=0, step=1, limit=1
          $region490: #{three_inputs_net.1} parent=488 // loop_pre_header
            _
          $region491: #{three_inputs_net.1} parent=488 // loop_header
            %s1169 = sphi 0, %s1173
            %p1170 = scmp.ge.s32.totalorder %s1169, 1
            %s1174 = sphi %s1164, %s1164
            %s1175 = sphi %s1166, %s1166
          $region492: #{three_inputs_net.1} parent=488 // loop_header_branch
            %1172 = sbr.rel (%p1170) target = $region496
          $region493: #{three_inputs_net.1} parent=488 // loop_body
            %v1176 = vld [vmem:[%s1174] sm:%s1167]
            %1177 = vst [vmem:[%s1175] sm:%s1167] %v1176
          $region494: #{three_inputs_net.1} parent=488 // loop_footer
            %s1173 = sadd.s32 1, %s1169
          $region495: #{three_inputs_net.1} parent=488 // loop_footer_branch
            %1168 = sbr.rel target = $region491
          $region496: #{three_inputs_net.1} parent=488 // loop_exit
            _
        $region489: #{three_inputs_net.1} parent=473 // pred_fallthru
          _
      $region474: #{three_inputs_net.1} parent=79 // pred_fallthru
        _
      // Predicated region
      $region475: #{three_inputs_net.1} parent=79 // pred_check
        %p1143 = pneg %p1139
      $region476: #{three_inputs_net.1} parent=79 // pred_check_branch
        %1145 = sbr.rel (%p1143) target = $region478
      $region477: #{three_inputs_net.1} parent=79 // pred_region
        %s1146 = sshllo.u32 0, 1
        loop: start=0, step=1, limit=1
        $region479: #{three_inputs_net.1} parent=477 // loop_pre_header
          _
        $region480: #{three_inputs_net.1} parent=477 // loop_header
          %s1148 = sphi 0, %s1152
          %p1149 = scmp.ge.s32.totalorder %s1148, 1
          %s1153 = sphi %s1135, %s1135
          %s1154 = sphi %s1136, %s1136
        $region481: #{three_inputs_net.1} parent=477 // loop_header_branch
          %1151 = sbr.rel (%p1149) target = $region485
        $region482: #{three_inputs_net.1} parent=477 // loop_body
          %v1155 = vld [vmem:[%s1153] sm:%s1146]
          %1156 = vst [vmem:[%s1154] sm:%s1146] %v1155
        $region483: #{three_inputs_net.1} parent=477 // loop_footer
          %s1152 = sadd.s32 1, %s1148
        $region484: #{three_inputs_net.1} parent=477 // loop_footer_branch
          %1147 = sbr.rel target = $region480
        $region485: #{three_inputs_net.1} parent=477 // loop_exit
          _
      $region478: #{three_inputs_net.1} parent=79 // pred_fallthru
        _
      // Predicated region
      $region497: #{three_inputs_net.1} parent=79 // pred_check
        _
      $region498: #{three_inputs_net.1} parent=79 // pred_check_branch
        %1180 = sbr.rel (0) target = $region500
      $region499: #{three_inputs_net.1} parent=79 // pred_region
        %1181 = vsyncadd %s1137, 16
      $region500: #{three_inputs_net.1} parent=79 // pred_fallthru
        _
      %s1182 = sadd.s32 %s890, 6
      %s1183 = sld [smem:[#allocation8 + %s1182]]
      %s1184 = scalar_lea.vmem %s4, %s1183
      %s1185 = scalar_lea.vmem [#allocation3], 6
      %s1186 = scalar_lea.sflag [#allocation5], 6
      %p1188 = scmp.lt.u32.totalorder 1, 8
      %p1189 = pneg %p1188
      // Predicated region
      $region501: #{three_inputs_net.1} parent=79 // pred_check
        _
      $region502: #{three_inputs_net.1} parent=79 // pred_check_branch
        %1191 = sbr.rel (%p1188) target = $region504
      $region503: #{three_inputs_net.1} parent=79 // pred_region
        %s1206 = sand.u32 1, 7
        %p1207 = scmp.eq.s32.totalorder %s1206, 0
        %p1208 = pneg %p1207
        // Predicated region
        $region516: #{three_inputs_net.1} parent=503 // pred_check
          _
        $region517: #{three_inputs_net.1} parent=503 // pred_check_branch
          %1210 = sbr.rel (%p1207) target = $region519
        $region518: #{three_inputs_net.1} parent=503 // pred_region
          %s1211 = sand.u32 1, 7
          %s1212 = ssub.s32 1, %s1211
          %s1213 = scalar_lea.vmem %s1184, %s1212
          %s1214 = ssub.s32 1, %s1211
          %s1215 = scalar_lea.vmem %s1185, %s1214 [#allocation3]
          %s1216 = sshllo.u32 0, %s1211
          loop: start=0, step=1, limit=1
          $region520: #{three_inputs_net.1} parent=518 // loop_pre_header
            _
          $region521: #{three_inputs_net.1} parent=518 // loop_header
            %s1218 = sphi 0, %s1222
            %p1219 = scmp.ge.s32.totalorder %s1218, 1
            %s1223 = sphi %s1213, %s1213
            %s1224 = sphi %s1215, %s1215
          $region522: #{three_inputs_net.1} parent=518 // loop_header_branch
            %1221 = sbr.rel (%p1219) target = $region526
          $region523: #{three_inputs_net.1} parent=518 // loop_body
            %v1225 = vld [vmem:[%s1223] sm:%s1216]
            %1226 = vst [vmem:[%s1224] sm:%s1216] %v1225
          $region524: #{three_inputs_net.1} parent=518 // loop_footer
            %s1222 = sadd.s32 1, %s1218
          $region525: #{three_inputs_net.1} parent=518 // loop_footer_branch
            %1217 = sbr.rel target = $region521
          $region526: #{three_inputs_net.1} parent=518 // loop_exit
            _
        $region519: #{three_inputs_net.1} parent=503 // pred_fallthru
          _
      $region504: #{three_inputs_net.1} parent=79 // pred_fallthru
        _
      // Predicated region
      $region505: #{three_inputs_net.1} parent=79 // pred_check
        %p1192 = pneg %p1188
      $region506: #{three_inputs_net.1} parent=79 // pred_check_branch
        %1194 = sbr.rel (%p1192) target = $region508
      $region507: #{three_inputs_net.1} parent=79 // pred_region
        %s1195 = sshllo.u32 0, 1
        loop: start=0, step=1, limit=1
        $region509: #{three_inputs_net.1} parent=507 // loop_pre_header
          _
        $region510: #{three_inputs_net.1} parent=507 // loop_header
          %s1197 = sphi 0, %s1201
          %p1198 = scmp.ge.s32.totalorder %s1197, 1
          %s1202 = sphi %s1184, %s1184
          %s1203 = sphi %s1185, %s1185
        $region511: #{three_inputs_net.1} parent=507 // loop_header_branch
          %1200 = sbr.rel (%p1198) target = $region515
        $region512: #{three_inputs_net.1} parent=507 // loop_body
          %v1204 = vld [vmem:[%s1202] sm:%s1195]
          %1205 = vst [vmem:[%s1203] sm:%s1195] %v1204
        $region513: #{three_inputs_net.1} parent=507 // loop_footer
          %s1201 = sadd.s32 1, %s1197
        $region514: #{three_inputs_net.1} parent=507 // loop_footer_branch
          %1196 = sbr.rel target = $region510
        $region515: #{three_inputs_net.1} parent=507 // loop_exit
          _
      $region508: #{three_inputs_net.1} parent=79 // pred_fallthru
        _
      // Predicated region
      $region527: #{three_inputs_net.1} parent=79 // pred_check
        _
      $region528: #{three_inputs_net.1} parent=79 // pred_check_branch
        %1229 = sbr.rel (0) target = $region530
      $region529: #{three_inputs_net.1} parent=79 // pred_region
        %1230 = vsyncadd %s1186, 16
      $region530: #{three_inputs_net.1} parent=79 // pred_fallthru
        _
      %s1231 = sadd.s32 %s890, 7
      %s1232 = sld [smem:[#allocation8 + %s1231]]
      %s1233 = scalar_lea.vmem %s4, %s1232
      %s1234 = scalar_lea.vmem [#allocation3], 7
      %s1235 = scalar_lea.sflag [#allocation5], 7
      %p1237 = scmp.lt.u32.totalorder 1, 8
      %p1238 = pneg %p1237
      // Predicated region
      $region531: #{three_inputs_net.1} parent=79 // pred_check
        _
      $region532: #{three_inputs_net.1} parent=79 // pred_check_branch
        %1240 = sbr.rel (%p1237) target = $region534
      $region533: #{three_inputs_net.1} parent=79 // pred_region
        %s1255 = sand.u32 1, 7
        %p1256 = scmp.eq.s32.totalorder %s1255, 0
        %p1257 = pneg %p1256
        // Predicated region
        $region546: #{three_inputs_net.1} parent=533 // pred_check
          _
        $region547: #{three_inputs_net.1} parent=533 // pred_check_branch
          %1259 = sbr.rel (%p1256) target = $region549
        $region548: #{three_inputs_net.1} parent=533 // pred_region
          %s1260 = sand.u32 1, 7
          %s1261 = ssub.s32 1, %s1260
          %s1262 = scalar_lea.vmem %s1233, %s1261
          %s1263 = ssub.s32 1, %s1260
          %s1264 = scalar_lea.vmem %s1234, %s1263 [#allocation3]
          %s1265 = sshllo.u32 0, %s1260
          loop: start=0, step=1, limit=1
          $region550: #{three_inputs_net.1} parent=548 // loop_pre_header
            _
          $region551: #{three_inputs_net.1} parent=548 // loop_header
            %s1267 = sphi 0, %s1271
            %p1268 = scmp.ge.s32.totalorder %s1267, 1
            %s1272 = sphi %s1262, %s1262
            %s1273 = sphi %s1264, %s1264
          $region552: #{three_inputs_net.1} parent=548 // loop_header_branch
            %1270 = sbr.rel (%p1268) target = $region556
          $region553: #{three_inputs_net.1} parent=548 // loop_body
            %v1274 = vld [vmem:[%s1272] sm:%s1265]
            %1275 = vst [vmem:[%s1273] sm:%s1265] %v1274
          $region554: #{three_inputs_net.1} parent=548 // loop_footer
            %s1271 = sadd.s32 1, %s1267
          $region555: #{three_inputs_net.1} parent=548 // loop_footer_branch
            %1266 = sbr.rel target = $region551
          $region556: #{three_inputs_net.1} parent=548 // loop_exit
            _
        $region549: #{three_inputs_net.1} parent=533 // pred_fallthru
          _
      $region534: #{three_inputs_net.1} parent=79 // pred_fallthru
        _
      // Predicated region
      $region535: #{three_inputs_net.1} parent=79 // pred_check
        %p1241 = pneg %p1237
      $region536: #{three_inputs_net.1} parent=79 // pred_check_branch
        %1243 = sbr.rel (%p1241) target = $region538
      $region537: #{three_inputs_net.1} parent=79 // pred_region
        %s1244 = sshllo.u32 0, 1
        loop: start=0, step=1, limit=1
        $region539: #{three_inputs_net.1} parent=537 // loop_pre_header
          _
        $region540: #{three_inputs_net.1} parent=537 // loop_header
          %s1246 = sphi 0, %s1250
          %p1247 = scmp.ge.s32.totalorder %s1246, 1
          %s1251 = sphi %s1233, %s1233
          %s1252 = sphi %s1234, %s1234
        $region541: #{three_inputs_net.1} parent=537 // loop_header_branch
          %1249 = sbr.rel (%p1247) target = $region545
        $region542: #{three_inputs_net.1} parent=537 // loop_body
          %v1253 = vld [vmem:[%s1251] sm:%s1244]
          %1254 = vst [vmem:[%s1252] sm:%s1244] %v1253
        $region543: #{three_inputs_net.1} parent=537 // loop_footer
          %s1250 = sadd.s32 1, %s1246
        $region544: #{three_inputs_net.1} parent=537 // loop_footer_branch
          %1245 = sbr.rel target = $region540
        $region545: #{three_inputs_net.1} parent=537 // loop_exit
          _
      $region538: #{three_inputs_net.1} parent=79 // pred_fallthru
        _
      // Predicated region
      $region557: #{three_inputs_net.1} parent=79 // pred_check
        _
      $region558: #{three_inputs_net.1} parent=79 // pred_check_branch
        %1278 = sbr.rel (0) target = $region560
      $region559: #{three_inputs_net.1} parent=79 // pred_region
        %1279 = vsyncadd %s1235, 16
      $region560: #{three_inputs_net.1} parent=79 // pred_fallthru
        _
      %s1280 = sadd.s32 %s890, 8
      %s1281 = sld [smem:[#allocation8 + %s1280]]
      %s1282 = scalar_lea.vmem %s4, %s1281
      %s1283 = scalar_lea.vmem [#allocation3], 8
      %s1284 = scalar_lea.sflag [#allocation5], 8
      %p1286 = scmp.lt.u32.totalorder 1, 8
      %p1287 = pneg %p1286
      // Predicated region
      $region561: #{three_inputs_net.1} parent=79 // pred_check
        _
      $region562: #{three_inputs_net.1} parent=79 // pred_check_branch
        %1289 = sbr.rel (%p1286) target = $region564
      $region563: #{three_inputs_net.1} parent=79 // pred_region
        %s1304 = sand.u32 1, 7
        %p1305 = scmp.eq.s32.totalorder %s1304, 0
        %p1306 = pneg %p1305
        // Predicated region
        $region576: #{three_inputs_net.1} parent=563 // pred_check
          _
        $region577: #{three_inputs_net.1} parent=563 // pred_check_branch
          %1308 = sbr.rel (%p1305) target = $region579
        $region578: #{three_inputs_net.1} parent=563 // pred_region
          %s1309 = sand.u32 1, 7
          %s1310 = ssub.s32 1, %s1309
          %s1311 = scalar_lea.vmem %s1282, %s1310
          %s1312 = ssub.s32 1, %s1309
          %s1313 = scalar_lea.vmem %s1283, %s1312 [#allocation3]
          %s1314 = sshllo.u32 0, %s1309
          loop: start=0, step=1, limit=1
          $region580: #{three_inputs_net.1} parent=578 // loop_pre_header
            _
          $region581: #{three_inputs_net.1} parent=578 // loop_header
            %s1316 = sphi 0, %s1320
            %p1317 = scmp.ge.s32.totalorder %s1316, 1
            %s1321 = sphi %s1311, %s1311
            %s1322 = sphi %s1313, %s1313
          $region582: #{three_inputs_net.1} parent=578 // loop_header_branch
            %1319 = sbr.rel (%p1317) target = $region586
          $region583: #{three_inputs_net.1} parent=578 // loop_body
            %v1323 = vld [vmem:[%s1321] sm:%s1314]
            %1324 = vst [vmem:[%s1322] sm:%s1314] %v1323
          $region584: #{three_inputs_net.1} parent=578 // loop_footer
            %s1320 = sadd.s32 1, %s1316
          $region585: #{three_inputs_net.1} parent=578 // loop_footer_branch
            %1315 = sbr.rel target = $region581
          $region586: #{three_inputs_net.1} parent=578 // loop_exit
            _
        $region579: #{three_inputs_net.1} parent=563 // pred_fallthru
          _
      $region564: #{three_inputs_net.1} parent=79 // pred_fallthru
        _
      // Predicated region
      $region565: #{three_inputs_net.1} parent=79 // pred_check
        %p1290 = pneg %p1286
      $region566: #{three_inputs_net.1} parent=79 // pred_check_branch
        %1292 = sbr.rel (%p1290) target = $region568
      $region567: #{three_inputs_net.1} parent=79 // pred_region
        %s1293 = sshllo.u32 0, 1
        loop: start=0, step=1, limit=1
        $region569: #{three_inputs_net.1} parent=567 // loop_pre_header
          _
        $region570: #{three_inputs_net.1} parent=567 // loop_header
          %s1295 = sphi 0, %s1299
          %p1296 = scmp.ge.s32.totalorder %s1295, 1
          %s1300 = sphi %s1282, %s1282
          %s1301 = sphi %s1283, %s1283
        $region571: #{three_inputs_net.1} parent=567 // loop_header_branch
          %1298 = sbr.rel (%p1296) target = $region575
        $region572: #{three_inputs_net.1} parent=567 // loop_body
          %v1302 = vld [vmem:[%s1300] sm:%s1293]
          %1303 = vst [vmem:[%s1301] sm:%s1293] %v1302
        $region573: #{three_inputs_net.1} parent=567 // loop_footer
          %s1299 = sadd.s32 1, %s1295
        $region574: #{three_inputs_net.1} parent=567 // loop_footer_branch
          %1294 = sbr.rel target = $region570
        $region575: #{three_inputs_net.1} parent=567 // loop_exit
          _
      $region568: #{three_inputs_net.1} parent=79 // pred_fallthru
        _
      // Predicated region
      $region587: #{three_inputs_net.1} parent=79 // pred_check
        _
      $region588: #{three_inputs_net.1} parent=79 // pred_check_branch
        %1327 = sbr.rel (0) target = $region590
      $region589: #{three_inputs_net.1} parent=79 // pred_region
        %1328 = vsyncadd %s1284, 16
      $region590: #{three_inputs_net.1} parent=79 // pred_fallthru
        _
      %s1329 = sadd.s32 %s890, 9
      %s1330 = sld [smem:[#allocation8 + %s1329]]
      %s1331 = scalar_lea.vmem %s4, %s1330
      %s1332 = scalar_lea.vmem [#allocation3], 9
      %s1333 = scalar_lea.sflag [#allocation5], 9
      %p1335 = scmp.lt.u32.totalorder 1, 8
      %p1336 = pneg %p1335
      // Predicated region
      $region591: #{three_inputs_net.1} parent=79 // pred_check
        _
      $region592: #{three_inputs_net.1} parent=79 // pred_check_branch
        %1338 = sbr.rel (%p1335) target = $region594
      $region593: #{three_inputs_net.1} parent=79 // pred_region
        %s1353 = sand.u32 1, 7
        %p1354 = scmp.eq.s32.totalorder %s1353, 0
        %p1355 = pneg %p1354
        // Predicated region
        $region606: #{three_inputs_net.1} parent=593 // pred_check
          _
        $region607: #{three_inputs_net.1} parent=593 // pred_check_branch
          %1357 = sbr.rel (%p1354) target = $region609
        $region608: #{three_inputs_net.1} parent=593 // pred_region
          %s1358 = sand.u32 1, 7
          %s1359 = ssub.s32 1, %s1358
          %s1360 = scalar_lea.vmem %s1331, %s1359
          %s1361 = ssub.s32 1, %s1358
          %s1362 = scalar_lea.vmem %s1332, %s1361 [#allocation3]
          %s1363 = sshllo.u32 0, %s1358
          loop: start=0, step=1, limit=1
          $region610: #{three_inputs_net.1} parent=608 // loop_pre_header
            _
          $region611: #{three_inputs_net.1} parent=608 // loop_header
            %s1365 = sphi 0, %s1369
            %p1366 = scmp.ge.s32.totalorder %s1365, 1
            %s1370 = sphi %s1360, %s1360
            %s1371 = sphi %s1362, %s1362
          $region612: #{three_inputs_net.1} parent=608 // loop_header_branch
            %1368 = sbr.rel (%p1366) target = $region616
          $region613: #{three_inputs_net.1} parent=608 // loop_body
            %v1372 = vld [vmem:[%s1370] sm:%s1363]
            %1373 = vst [vmem:[%s1371] sm:%s1363] %v1372
          $region614: #{three_inputs_net.1} parent=608 // loop_footer
            %s1369 = sadd.s32 1, %s1365
          $region615: #{three_inputs_net.1} parent=608 // loop_footer_branch
            %1364 = sbr.rel target = $region611
          $region616: #{three_inputs_net.1} parent=608 // loop_exit
            _
        $region609: #{three_inputs_net.1} parent=593 // pred_fallthru
          _
      $region594: #{three_inputs_net.1} parent=79 // pred_fallthru
        _
      // Predicated region
      $region595: #{three_inputs_net.1} parent=79 // pred_check
        %p1339 = pneg %p1335
      $region596: #{three_inputs_net.1} parent=79 // pred_check_branch
        %1341 = sbr.rel (%p1339) target = $region598
      $region597: #{three_inputs_net.1} parent=79 // pred_region
        %s1342 = sshllo.u32 0, 1
        loop: start=0, step=1, limit=1
        $region599: #{three_inputs_net.1} parent=597 // loop_pre_header
          _
        $region600: #{three_inputs_net.1} parent=597 // loop_header
          %s1344 = sphi 0, %s1348
          %p1345 = scmp.ge.s32.totalorder %s1344, 1
          %s1349 = sphi %s1331, %s1331
          %s1350 = sphi %s1332, %s1332
        $region601: #{three_inputs_net.1} parent=597 // loop_header_branch
          %1347 = sbr.rel (%p1345) target = $region605
        $region602: #{three_inputs_net.1} parent=597 // loop_body
          %v1351 = vld [vmem:[%s1349] sm:%s1342]
          %1352 = vst [vmem:[%s1350] sm:%s1342] %v1351
        $region603: #{three_inputs_net.1} parent=597 // loop_footer
          %s1348 = sadd.s32 1, %s1344
        $region604: #{three_inputs_net.1} parent=597 // loop_footer_branch
          %1343 = sbr.rel target = $region600
        $region605: #{three_inputs_net.1} parent=597 // loop_exit
          _
      $region598: #{three_inputs_net.1} parent=79 // pred_fallthru
        _
      // Predicated region
      $region617: #{three_inputs_net.1} parent=79 // pred_check
        _
      $region618: #{three_inputs_net.1} parent=79 // pred_check_branch
        %1376 = sbr.rel (0) target = $region620
      $region619: #{three_inputs_net.1} parent=79 // pred_region
        %1377 = vsyncadd %s1333, 16
      $region620: #{three_inputs_net.1} parent=79 // pred_fallthru
        _
      %s1378 = sadd.s32 %s890, 10
      %s1379 = sld [smem:[#allocation8 + %s1378]]
      %s1380 = scalar_lea.vmem %s4, %s1379
      %s1381 = scalar_lea.vmem [#allocation3], 10
      %s1382 = scalar_lea.sflag [#allocation5], 10
      %p1384 = scmp.lt.u32.totalorder 1, 8
      %p1385 = pneg %p1384
      // Predicated region
      $region621: #{three_inputs_net.1} parent=79 // pred_check
        _
      $region622: #{three_inputs_net.1} parent=79 // pred_check_branch
        %1387 = sbr.rel (%p1384) target = $region624
      $region623: #{three_inputs_net.1} parent=79 // pred_region
        %s1402 = sand.u32 1, 7
        %p1403 = scmp.eq.s32.totalorder %s1402, 0
        %p1404 = pneg %p1403
        // Predicated region
        $region636: #{three_inputs_net.1} parent=623 // pred_check
          _
        $region637: #{three_inputs_net.1} parent=623 // pred_check_branch
          %1406 = sbr.rel (%p1403) target = $region639
        $region638: #{three_inputs_net.1} parent=623 // pred_region
          %s1407 = sand.u32 1, 7
          %s1408 = ssub.s32 1, %s1407
          %s1409 = scalar_lea.vmem %s1380, %s1408
          %s1410 = ssub.s32 1, %s1407
          %s1411 = scalar_lea.vmem %s1381, %s1410 [#allocation3]
          %s1412 = sshllo.u32 0, %s1407
          loop: start=0, step=1, limit=1
          $region640: #{three_inputs_net.1} parent=638 // loop_pre_header
            _
          $region641: #{three_inputs_net.1} parent=638 // loop_header
            %s1414 = sphi 0, %s1418
            %p1415 = scmp.ge.s32.totalorder %s1414, 1
            %s1419 = sphi %s1409, %s1409
            %s1420 = sphi %s1411, %s1411
          $region642: #{three_inputs_net.1} parent=638 // loop_header_branch
            %1417 = sbr.rel (%p1415) target = $region646
          $region643: #{three_inputs_net.1} parent=638 // loop_body
            %v1421 = vld [vmem:[%s1419] sm:%s1412]
            %1422 = vst [vmem:[%s1420] sm:%s1412] %v1421
          $region644: #{three_inputs_net.1} parent=638 // loop_footer
            %s1418 = sadd.s32 1, %s1414
          $region645: #{three_inputs_net.1} parent=638 // loop_footer_branch
            %1413 = sbr.rel target = $region641
          $region646: #{three_inputs_net.1} parent=638 // loop_exit
            _
        $region639: #{three_inputs_net.1} parent=623 // pred_fallthru
          _
      $region624: #{three_inputs_net.1} parent=79 // pred_fallthru
        _
      // Predicated region
      $region625: #{three_inputs_net.1} parent=79 // pred_check
        %p1388 = pneg %p1384
      $region626: #{three_inputs_net.1} parent=79 // pred_check_branch
        %1390 = sbr.rel (%p1388) target = $region628
      $region627: #{three_inputs_net.1} parent=79 // pred_region
        %s1391 = sshllo.u32 0, 1
        loop: start=0, step=1, limit=1
        $region629: #{three_inputs_net.1} parent=627 // loop_pre_header
          _
        $region630: #{three_inputs_net.1} parent=627 // loop_header
          %s1393 = sphi 0, %s1397
          %p1394 = scmp.ge.s32.totalorder %s1393, 1
          %s1398 = sphi %s1380, %s1380
          %s1399 = sphi %s1381, %s1381
        $region631: #{three_inputs_net.1} parent=627 // loop_header_branch
          %1396 = sbr.rel (%p1394) target = $region635
        $region632: #{three_inputs_net.1} parent=627 // loop_body
          %v1400 = vld [vmem:[%s1398] sm:%s1391]
          %1401 = vst [vmem:[%s1399] sm:%s1391] %v1400
        $region633: #{three_inputs_net.1} parent=627 // loop_footer
          %s1397 = sadd.s32 1, %s1393
        $region634: #{three_inputs_net.1} parent=627 // loop_footer_branch
          %1392 = sbr.rel target = $region630
        $region635: #{three_inputs_net.1} parent=627 // loop_exit
          _
      $region628: #{three_inputs_net.1} parent=79 // pred_fallthru
        _
      // Predicated region
      $region647: #{three_inputs_net.1} parent=79 // pred_check
        _
      $region648: #{three_inputs_net.1} parent=79 // pred_check_branch
        %1425 = sbr.rel (0) target = $region650
      $region649: #{three_inputs_net.1} parent=79 // pred_region
        %1426 = vsyncadd %s1382, 16
      $region650: #{three_inputs_net.1} parent=79 // pred_fallthru
        _
      %s1427 = sadd.s32 %s890, 11
      %s1428 = sld [smem:[#allocation8 + %s1427]]
      %s1429 = scalar_lea.vmem %s4, %s1428
      %s1430 = scalar_lea.vmem [#allocation3], 11
      %s1431 = scalar_lea.sflag [#allocation5], 11
      %p1433 = scmp.lt.u32.totalorder 1, 8
      %p1434 = pneg %p1433
      // Predicated region
      $region651: #{three_inputs_net.1} parent=79 // pred_check
        _
      $region652: #{three_inputs_net.1} parent=79 // pred_check_branch
        %1436 = sbr.rel (%p1433) target = $region654
      $region653: #{three_inputs_net.1} parent=79 // pred_region
        %s1451 = sand.u32 1, 7
        %p1452 = scmp.eq.s32.totalorder %s1451, 0
        %p1453 = pneg %p1452
        // Predicated region
        $region666: #{three_inputs_net.1} parent=653 // pred_check
          _
        $region667: #{three_inputs_net.1} parent=653 // pred_check_branch
          %1455 = sbr.rel (%p1452) target = $region669
        $region668: #{three_inputs_net.1} parent=653 // pred_region
          %s1456 = sand.u32 1, 7
          %s1457 = ssub.s32 1, %s1456
          %s1458 = scalar_lea.vmem %s1429, %s1457
          %s1459 = ssub.s32 1, %s1456
          %s1460 = scalar_lea.vmem %s1430, %s1459 [#allocation3]
          %s1461 = sshllo.u32 0, %s1456
          loop: start=0, step=1, limit=1
          $region670: #{three_inputs_net.1} parent=668 // loop_pre_header
            _
          $region671: #{three_inputs_net.1} parent=668 // loop_header
            %s1463 = sphi 0, %s1467
            %p1464 = scmp.ge.s32.totalorder %s1463, 1
            %s1468 = sphi %s1458, %s1458
            %s1469 = sphi %s1460, %s1460
          $region672: #{three_inputs_net.1} parent=668 // loop_header_branch
            %1466 = sbr.rel (%p1464) target = $region676
          $region673: #{three_inputs_net.1} parent=668 // loop_body
            %v1470 = vld [vmem:[%s1468] sm:%s1461]
            %1471 = vst [vmem:[%s1469] sm:%s1461] %v1470
          $region674: #{three_inputs_net.1} parent=668 // loop_footer
            %s1467 = sadd.s32 1, %s1463
          $region675: #{three_inputs_net.1} parent=668 // loop_footer_branch
            %1462 = sbr.rel target = $region671
          $region676: #{three_inputs_net.1} parent=668 // loop_exit
            _
        $region669: #{three_inputs_net.1} parent=653 // pred_fallthru
          _
      $region654: #{three_inputs_net.1} parent=79 // pred_fallthru
        _
      // Predicated region
      $region655: #{three_inputs_net.1} parent=79 // pred_check
        %p1437 = pneg %p1433
      $region656: #{three_inputs_net.1} parent=79 // pred_check_branch
        %1439 = sbr.rel (%p1437) target = $region658
      $region657: #{three_inputs_net.1} parent=79 // pred_region
        %s1440 = sshllo.u32 0, 1
        loop: start=0, step=1, limit=1
        $region659: #{three_inputs_net.1} parent=657 // loop_pre_header
          _
        $region660: #{three_inputs_net.1} parent=657 // loop_header
          %s1442 = sphi 0, %s1446
          %p1443 = scmp.ge.s32.totalorder %s1442, 1
          %s1447 = sphi %s1429, %s1429
          %s1448 = sphi %s1430, %s1430
        $region661: #{three_inputs_net.1} parent=657 // loop_header_branch
          %1445 = sbr.rel (%p1443) target = $region665
        $region662: #{three_inputs_net.1} parent=657 // loop_body
          %v1449 = vld [vmem:[%s1447] sm:%s1440]
          %1450 = vst [vmem:[%s1448] sm:%s1440] %v1449
        $region663: #{three_inputs_net.1} parent=657 // loop_footer
          %s1446 = sadd.s32 1, %s1442
        $region664: #{three_inputs_net.1} parent=657 // loop_footer_branch
          %1441 = sbr.rel target = $region660
        $region665: #{three_inputs_net.1} parent=657 // loop_exit
          _
      $region658: #{three_inputs_net.1} parent=79 // pred_fallthru
        _
      // Predicated region
      $region677: #{three_inputs_net.1} parent=79 // pred_check
        _
      $region678: #{three_inputs_net.1} parent=79 // pred_check_branch
        %1474 = sbr.rel (0) target = $region680
      $region679: #{three_inputs_net.1} parent=79 // pred_region
        %1475 = vsyncadd %s1431, 16
      $region680: #{three_inputs_net.1} parent=79 // pred_fallthru
        _
      %s1476 = smul.u32 1, 1
      %s1477 = sshll.u32 %s1476, 4
      %1478 = dma.done [#allocation4], %s1477
      %s1479 = sshll.u32 %s1476, 4
      %1480 = dma.done %s551, %s1479
      %s1481 = sshll.u32 %s1476, 4
      %1482 = dma.done %s600, %s1481
      %s1483 = sshll.u32 %s1476, 4
      %1484 = dma.done %s649, %s1483
      %s1485 = sshll.u32 %s1476, 4
      %1486 = dma.done %s698, %s1485
      %s1487 = sshll.u32 %s1476, 4
      %1488 = dma.done %s747, %s1487
      %s1489 = sshll.u32 %s1476, 4
      %1490 = dma.done %s796, %s1489
      %s1491 = sshll.u32 %s1476, 4
      %1492 = dma.done %s845, %s1491
      %v1493 = vld [vmem:[#allocation2] sm:$0xff]
      %v1494 = vpack.c.bf16 %v1493, %v1493
      %v1495 = vld [vmem:[%s5] sm:$0xf]
      %v1496 = vld [vmem:[%s5 + $0x4] sm:$0xf]
      %v1497 = vld [vmem:[%s5 + $0x8] sm:$0xf]
      %v1498 = vld [vmem:[%s5 + $0xc] sm:$0xf]
      %v1499 = vld [vmem:[%s5 + $0x10] sm:$0xf]
      %v1500 = vld [vmem:[%s5 + $0x14] sm:$0xf]
      %v1501 = vld [vmem:[%s5 + $0x18] sm:$0xf]
      %v1502 = vld [vmem:[%s5 + $0x1c] sm:$0xf]
      %v1504 = vshrl.u32 %v1494, 16
      %v1506 = vshll.u32 %v1494, 16
      %v1508 = vrot.slane %v1506, 1
      %v1509 = vor.u32 %v1504, %v1508
      %v1514 = vunpack.c.l.b16 %v1499
      %v1515 = vunpack.c.l.b16 %v1500
      %v1516 = vunpack.c.l.b16 %v1501
      %v1517 = vunpack.c.l.b16 %v1502
      %v1518 = vpack.c.b16 %v1515, %v1514
      %v1519 = vpack.c.b16 %v1517, %v1516
      %vm1522 = vcmask 261120
      %v1524 = vsel %vm1522, %v1509, 0
      %1526 = vmatprep.subr.bf16.mxu0 0
      %1527 = vmatpush1.bf16.msra.mxu0 %v1518
      %1528 = vmatprep.subr.bf16.mxu0 0
      %1529 = vmatpush1.bf16.msra.mxu0 %v1519
      %1530 = vmatprep.subr.bf16.mxu0 0
      %1531 = vmatpush1.bf16.msra.mxu0 0
      %1532 = vmatprep.subr.bf16.mxu0 0
      %1533 = vmatpush1.bf16.msra.mxu0 0
      %1534 = vmatprep.subr.bf16.mxu0 0
      %1535 = vmatpush1.bf16.msra.mxu0 0
      %1536 = vmatprep.subr.bf16.mxu0 0
      %1537 = vmatpush1.bf16.msra.mxu0 0
      %1538 = vmatprep.subr.bf16.mxu0 0
      %1539 = vmatpush1.bf16.msra.mxu0 0
      %1540 = vmatprep.subr.bf16.mxu0 0
      %1541 = vmatpush1.bf16.msra.mxu0 0
      %1542 = vmatprep.subr.bf16.mxu0 0
      %1543 = vmatpush1.bf16.msra.mxu0 0
      %1544 = vmatprep.subr.bf16.mxu0 0
      %1545 = vmatpush1.bf16.msra.mxu0 0
      %1546 = vmatprep.subr.bf16.mxu0 0
      %1547 = vmatpush1.bf16.msra.mxu0 0
      %1548 = vmatprep.subr.bf16.mxu0 0
      %1549 = vmatpush1.bf16.msra.mxu0 0
      %1550 = vmatprep.subr.bf16.mxu0 0
      %1551 = vmatpush1.bf16.msra.mxu0 0
      %1552 = vmatprep.subr.bf16.mxu0 0
      %1553 = vmatpush1.bf16.msra.mxu0 0
      %1554 = vmatprep.subr.bf16.mxu0 0
      %1555 = vmatpush1.bf16.msra.mxu0 0
      %1556 = vmatprep.subr.bf16.mxu0 0
      %1557 = vmatpush1.bf16.msra.mxu0 0
      %1558 = vmatprep.mubr.bf16.mxu0 0
      %1559 = vmatmul.mubr.bf16.gmra.mrb[0].mxu0 %v1524
      %v1560 = vpop.f32.mrb[0].mxu0
      %v1561 = vadd.f32 0.0, %v1560
      %v1562 = vpop.f32.mrb[0].mxu0
      %v1563 = vpop.f32.mrb[0].mxu0
      %v1564 = vpop.f32.mrb[0].mxu0
      %1565 = vdwg.mxu0
      %v1570 = vunpack.c.l.b16 %v1495
      %v1571 = vunpack.c.l.b16 %v1496
      %v1572 = vunpack.c.l.b16 %v1497
      %v1573 = vunpack.c.l.b16 %v1498
      %v1574 = vpack.c.b16 %v1571, %v1570
      %v1575 = vpack.c.b16 %v1573, %v1572
      %v1578 = vsel %vm1522, %v1494, 0
      %1580 = vmatprep.subr.bf16.mxu0 0
      %1581 = vmatpush1.bf16.msra.mxu0 %v1574
      %1582 = vmatprep.subr.bf16.mxu0 0
      %1583 = vmatpush1.bf16.msra.mxu0 %v1575
      %1584 = vmatprep.subr.bf16.mxu0 0
      %1585 = vmatpush1.bf16.msra.mxu0 0
      %1586 = vmatprep.subr.bf16.mxu0 0
      %1587 = vmatpush1.bf16.msra.mxu0 0
      %1588 = vmatprep.subr.bf16.mxu0 0
      %1589 = vmatpush1.bf16.msra.mxu0 0
      %1590 = vmatprep.subr.bf16.mxu0 0
      %1591 = vmatpush1.bf16.msra.mxu0 0
      %1592 = vmatprep.subr.bf16.mxu0 0
      %1593 = vmatpush1.bf16.msra.mxu0 0
      %1594 = vmatprep.subr.bf16.mxu0 0
      %1595 = vmatpush1.bf16.msra.mxu0 0
      %1596 = vmatprep.subr.bf16.mxu0 0
      %1597 = vmatpush1.bf16.msra.mxu0 0
      %1598 = vmatprep.subr.bf16.mxu0 0
      %1599 = vmatpush1.bf16.msra.mxu0 0
      %1600 = vmatprep.subr.bf16.mxu0 0
      %1601 = vmatpush1.bf16.msra.mxu0 0
      %1602 = vmatprep.subr.bf16.mxu0 0
      %1603 = vmatpush1.bf16.msra.mxu0 0
      %1604 = vmatprep.subr.bf16.mxu0 0
      %1605 = vmatpush1.bf16.msra.mxu0 0
      %1606 = vmatprep.subr.bf16.mxu0 0
      %1607 = vmatpush1.bf16.msra.mxu0 0
      %1608 = vmatprep.subr.bf16.mxu0 0
      %1609 = vmatpush1.bf16.msra.mxu0 0
      %1610 = vmatprep.subr.bf16.mxu0 0
      %1611 = vmatpush1.bf16.msra.mxu0 0
      %1612 = vmatprep.mubr.bf16.mxu0 0
      %1613 = vmatmul.mubr.bf16.gmra.mrb[0].mxu0 %v1578
      %v1614 = vpop.f32.mrb[0].mxu0
      %v1615 = vadd.f32 %v1561, %v1614
      %v1616 = vpop.f32.mrb[0].mxu0
      %v1617 = vpop.f32.mrb[0].mxu0
      %v1618 = vpop.f32.mrb[0].mxu0
      %1619 = vdwg.mxu0
      %v1620 = vld [vmem:[%s6] sm:$0x1]
      %v1622 = vlaneseq
      %v1623 = vshrl.u32 %v1622, 7
      %v1624 = vsub.s32 0, %v1623
      %v1625 = vrot.slane %v1620, %v1624
      %v1627 = vadd.f32 %v1615, %v1625
      %v1628 = vmax.f32 %v1627, 0.0
      %v1629 = vpack.c.bf16 %v1628, %v1628
      %v1630 = vld [vmem:[%s7] sm:$0xf]
      %v1631 = vld [vmem:[%s7 + $0x4] sm:$0xf]
      %v1632 = vld [vmem:[%s7 + $0x8] sm:$0xf]
      %v1633 = vld [vmem:[%s7 + $0xc] sm:$0xf]
      %v1634 = vld [vmem:[%s7 + $0x10] sm:$0xf]
      %v1635 = vld [vmem:[%s7 + $0x14] sm:$0xf]
      %v1636 = vld [vmem:[%s7 + $0x18] sm:$0xf]
      %v1637 = vld [vmem:[%s7 + $0x1c] sm:$0xf]
      %v1639 = vshrl.u32 %v1629, 16
      %v1641 = vshll.u32 %v1629, 16
      %v1643 = vrot.slane %v1641, 1
      %v1644 = vor.u32 %v1639, %v1643
      %v1649 = vunpack.c.l.b16 %v1634
      %v1650 = vunpack.c.l.b16 %v1635
      %v1651 = vunpack.c.l.b16 %v1636
      %v1652 = vunpack.c.l.b16 %v1637
      %v1653 = vpack.c.b16 %v1650, %v1649
      %v1654 = vpack.c.b16 %v1652, %v1651
      %v1658 = vsel %vm1522, %v1644, 0
      %1660 = vmatprep.subr.bf16.mxu0 0
      %1661 = vmatpush1.bf16.msra.mxu0 %v1653
      %1662 = vmatprep.subr.bf16.mxu0 0
      %1663 = vmatpush1.bf16.msra.mxu0 %v1654
      %1664 = vmatprep.subr.bf16.mxu0 0
      %1665 = vmatpush1.bf16.msra.mxu0 0
      %1666 = vmatprep.subr.bf16.mxu0 0
      %1667 = vmatpush1.bf16.msra.mxu0 0
      %1668 = vmatprep.subr.bf16.mxu0 0
      %1669 = vmatpush1.bf16.msra.mxu0 0
      %1670 = vmatprep.subr.bf16.mxu0 0
      %1671 = vmatpush1.bf16.msra.mxu0 0
      %1672 = vmatprep.subr.bf16.mxu0 0
      %1673 = vmatpush1.bf16.msra.mxu0 0
      %1674 = vmatprep.subr.bf16.mxu0 0
      %1675 = vmatpush1.bf16.msra.mxu0 0
      %1676 = vmatprep.subr.bf16.mxu0 0
      %1677 = vmatpush1.bf16.msra.mxu0 0
      %1678 = vmatprep.subr.bf16.mxu0 0
      %1679 = vmatpush1.bf16.msra.mxu0 0
      %1680 = vmatprep.subr.bf16.mxu0 0
      %1681 = vmatpush1.bf16.msra.mxu0 0
      %1682 = vmatprep.subr.bf16.mxu0 0
      %1683 = vmatpush1.bf16.msra.mxu0 0
      %1684 = vmatprep.subr.bf16.mxu0 0
      %1685 = vmatpush1.bf16.msra.mxu0 0
      %1686 = vmatprep.subr.bf16.mxu0 0
      %1687 = vmatpush1.bf16.msra.mxu0 0
      %1688 = vmatprep.subr.bf16.mxu0 0
      %1689 = vmatpush1.bf16.msra.mxu0 0
      %1690 = vmatprep.subr.bf16.mxu0 0
      %1691 = vmatpush1.bf16.msra.mxu0 0
      %1692 = vmatprep.mubr.bf16.mxu0 0
      %1693 = vmatmul.mubr.bf16.gmra.mrb[0].mxu0 %v1658
      %v1694 = vpop.f32.mrb[0].mxu0
      %v1695 = vadd.f32 0.0, %v1694
      %v1696 = vpop.f32.mrb[0].mxu0
      %v1697 = vpop.f32.mrb[0].mxu0
      %v1698 = vpop.f32.mrb[0].mxu0
      %1699 = vdwg.mxu0
      %v1704 = vunpack.c.l.b16 %v1630
      %v1705 = vunpack.c.l.b16 %v1631
      %v1706 = vunpack.c.l.b16 %v1632
      %v1707 = vunpack.c.l.b16 %v1633
      %v1708 = vpack.c.b16 %v1705, %v1704
      %v1709 = vpack.c.b16 %v1707, %v1706
      %v1712 = vsel %vm1522, %v1629, 0
      %1714 = vmatprep.subr.bf16.mxu0 0
      %1715 = vmatpush1.bf16.msra.mxu0 %v1708
      %1716 = vmatprep.subr.bf16.mxu0 0
      %1717 = vmatpush1.bf16.msra.mxu0 %v1709
      %1718 = vmatprep.subr.bf16.mxu0 0
      %1719 = vmatpush1.bf16.msra.mxu0 0
      %1720 = vmatprep.subr.bf16.mxu0 0
      %1721 = vmatpush1.bf16.msra.mxu0 0
      %1722 = vmatprep.subr.bf16.mxu0 0
      %1723 = vmatpush1.bf16.msra.mxu0 0
      %1724 = vmatprep.subr.bf16.mxu0 0
      %1725 = vmatpush1.bf16.msra.mxu0 0
      %1726 = vmatprep.subr.bf16.mxu0 0
      %1727 = vmatpush1.bf16.msra.mxu0 0
      %1728 = vmatprep.subr.bf16.mxu0 0
      %1729 = vmatpush1.bf16.msra.mxu0 0
      %1730 = vmatprep.subr.bf16.mxu0 0
      %1731 = vmatpush1.bf16.msra.mxu0 0
      %1732 = vmatprep.subr.bf16.mxu0 0
      %1733 = vmatpush1.bf16.msra.mxu0 0
      %1734 = vmatprep.subr.bf16.mxu0 0
      %1735 = vmatpush1.bf16.msra.mxu0 0
      %1736 = vmatprep.subr.bf16.mxu0 0
      %1737 = vmatpush1.bf16.msra.mxu0 0
      %1738 = vmatprep.subr.bf16.mxu0 0
      %1739 = vmatpush1.bf16.msra.mxu0 0
      %1740 = vmatprep.subr.bf16.mxu0 0
      %1741 = vmatpush1.bf16.msra.mxu0 0
      %1742 = vmatprep.subr.bf16.mxu0 0
      %1743 = vmatpush1.bf16.msra.mxu0 0
      %1744 = vmatprep.subr.bf16.mxu0 0
      %1745 = vmatpush1.bf16.msra.mxu0 0
      %1746 = vmatprep.mubr.bf16.mxu0 0
      %1747 = vmatmul.mubr.bf16.gmra.mrb[0].mxu0 %v1712
      %v1748 = vpop.f32.mrb[0].mxu0
      %v1749 = vadd.f32 %v1695, %v1748
      %v1750 = vpop.f32.mrb[0].mxu0
      %v1751 = vpop.f32.mrb[0].mxu0
      %v1752 = vpop.f32.mrb[0].mxu0
      %1753 = vdwg.mxu0
      %v1754 = vld [vmem:[%s8] sm:$0x1]
      %v1756 = vlaneseq
      %v1757 = vshrl.u32 %v1756, 7
      %v1758 = vsub.s32 0, %v1757
      %v1759 = vrot.slane %v1754, %v1758
      %v1761 = vadd.f32 %v1749, %v1759
      %v1762 = vmax.f32 %v1761, 0.0
      %vm1763 = vcmask 259072
      %v1764 = vsel %vm1763, %v1762, 0.0
      %v1765 = vrot.slane %v1764, 4
      %v1766 = vadd.f32 %v1764, %v1765
      %v1767 = vrot.slane %v1766, 2
      %v1768 = vadd.f32 %v1766, %v1767
      %v1769 = vrot.slane %v1768, 1
      %v1770 = vadd.f32 %v1768, %v1769
      %v1771 = vrcp.pop 6.0
      %v1772 = vmul.f32 %v1770, %v1771
      %s1773 = sshll.u32 %s1476, 4
      %1774 = dma.done [#allocation5], %s1773
      %s1775 = sshll.u32 %s1476, 4
      %1776 = dma.done %s941, %s1775
      %s1777 = sshll.u32 %s1476, 4
      %1778 = dma.done %s990, %s1777
      %s1779 = sshll.u32 %s1476, 4
      %1780 = dma.done %s1039, %s1779
      %s1781 = sshll.u32 %s1476, 4
      %1782 = dma.done %s1088, %s1781
      %s1783 = sshll.u32 %s1476, 4
      %1784 = dma.done %s1137, %s1783
      %s1785 = sshll.u32 %s1476, 4
      %1786 = dma.done %s1186, %s1785
      %s1787 = sshll.u32 %s1476, 4
      %1788 = dma.done %s1235, %s1787
      %s1789 = sshll.u32 %s1476, 4
      %1790 = dma.done %s1284, %s1789
      %s1791 = sshll.u32 %s1476, 4
      %1792 = dma.done %s1333, %s1791
      %s1793 = sshll.u32 %s1476, 4
      %1794 = dma.done %s1382, %s1793
      %s1795 = sshll.u32 %s1476, 4
      %1796 = dma.done %s1431, %s1795
      %v1797 = vld [vmem:[#allocation3] sm:$0xff]
      %v1798 = vld [vmem:[#allocation3 + $0x8] sm:$0xf]
      %v1799 = vpack.c.bf16 %v1798, %v1797
      %v1800 = vld [vmem:[%s9] sm:$0xf]
      %v1801 = vld [vmem:[%s9 + $0x4] sm:$0xf]
      %v1802 = vld [vmem:[%s9 + $0x8] sm:$0xf]
      %v1803 = vld [vmem:[%s9 + $0xc] sm:$0xf]
      %v1804 = vld [vmem:[%s9 + $0x10] sm:$0xf]
      %v1805 = vld [vmem:[%s9 + $0x14] sm:$0xf]
      %v1806 = vld [vmem:[%s9 + $0x18] sm:$0xf]
      %v1807 = vld [vmem:[%s9 + $0x1c] sm:$0xf]
      %v1809 = vshrl.u32 %v1799, 16
      %v1811 = vshll.u32 %v1799, 16
      %v1813 = vrot.slane %v1811, 1
      %v1814 = vor.u32 %v1809, %v1813
      %v1819 = vunpack.c.l.b16 %v1804
      %v1820 = vunpack.c.l.b16 %v1805
      %v1821 = vunpack.c.l.b16 %v1806
      %v1822 = vunpack.c.l.b16 %v1807
      %v1823 = vpack.c.b16 %v1820, %v1819
      %v1824 = vpack.c.b16 %v1822, %v1821
      %v1828 = vsel %vm1522, %v1814, 0
      %1830 = vmatprep.subr.bf16.mxu0 0
      %1831 = vmatpush1.bf16.msra.mxu0 %v1823
      %1832 = vmatprep.subr.bf16.mxu0 0
      %1833 = vmatpush1.bf16.msra.mxu0 %v1824
      %1834 = vmatprep.subr.bf16.mxu0 0
      %1835 = vmatpush1.bf16.msra.mxu0 0
      %1836 = vmatprep.subr.bf16.mxu0 0
      %1837 = vmatpush1.bf16.msra.mxu0 0
      %1838 = vmatprep.subr.bf16.mxu0 0
      %1839 = vmatpush1.bf16.msra.mxu0 0
      %1840 = vmatprep.subr.bf16.mxu0 0
      %1841 = vmatpush1.bf16.msra.mxu0 0
      %1842 = vmatprep.subr.bf16.mxu0 0
      %1843 = vmatpush1.bf16.msra.mxu0 0
      %1844 = vmatprep.subr.bf16.mxu0 0
      %1845 = vmatpush1.bf16.msra.mxu0 0
      %1846 = vmatprep.subr.bf16.mxu0 0
      %1847 = vmatpush1.bf16.msra.mxu0 0
      %1848 = vmatprep.subr.bf16.mxu0 0
      %1849 = vmatpush1.bf16.msra.mxu0 0
      %1850 = vmatprep.subr.bf16.mxu0 0
      %1851 = vmatpush1.bf16.msra.mxu0 0
      %1852 = vmatprep.subr.bf16.mxu0 0
      %1853 = vmatpush1.bf16.msra.mxu0 0
      %1854 = vmatprep.subr.bf16.mxu0 0
      %1855 = vmatpush1.bf16.msra.mxu0 0
      %1856 = vmatprep.subr.bf16.mxu0 0
      %1857 = vmatpush1.bf16.msra.mxu0 0
      %1858 = vmatprep.subr.bf16.mxu0 0
      %1859 = vmatpush1.bf16.msra.mxu0 0
      %1860 = vmatprep.subr.bf16.mxu0 0
      %1861 = vmatpush1.bf16.msra.mxu0 0
      %1862 = vmatprep.mubr.bf16.mxu0 0
      %1863 = vmatmul.mubr.bf16.gmra.mrb[0].mxu0 %v1828
      %v1864 = vpop.f32.mrb[0].mxu0
      %v1865 = vadd.f32 0.0, %v1864
      %v1866 = vpop.f32.mrb[0].mxu0
      %v1867 = vpop.f32.mrb[0].mxu0
      %v1868 = vadd.f32 0.0, %v1867
      %v1869 = vpop.f32.mrb[0].mxu0
      %1870 = vdwg.mxu0
      %v1875 = vunpack.c.l.b16 %v1800
      %v1876 = vunpack.c.l.b16 %v1801
      %v1877 = vunpack.c.l.b16 %v1802
      %v1878 = vunpack.c.l.b16 %v1803
      %v1879 = vpack.c.b16 %v1876, %v1875
      %v1880 = vpack.c.b16 %v1878, %v1877
      %v1883 = vsel %vm1522, %v1799, 0
      %1885 = vmatprep.subr.bf16.mxu0 0
      %1886 = vmatpush1.bf16.msra.mxu0 %v1879
      %1887 = vmatprep.subr.bf16.mxu0 0
      %1888 = vmatpush1.bf16.msra.mxu0 %v1880
      %1889 = vmatprep.subr.bf16.mxu0 0
      %1890 = vmatpush1.bf16.msra.mxu0 0
      %1891 = vmatprep.subr.bf16.mxu0 0
      %1892 = vmatpush1.bf16.msra.mxu0 0
      %1893 = vmatprep.subr.bf16.mxu0 0
      %1894 = vmatpush1.bf16.msra.mxu0 0
      %1895 = vmatprep.subr.bf16.mxu0 0
      %1896 = vmatpush1.bf16.msra.mxu0 0
      %1897 = vmatprep.subr.bf16.mxu0 0
      %1898 = vmatpush1.bf16.msra.mxu0 0
      %1899 = vmatprep.subr.bf16.mxu0 0
      %1900 = vmatpush1.bf16.msra.mxu0 0
      %1901 = vmatprep.subr.bf16.mxu0 0
      %1902 = vmatpush1.bf16.msra.mxu0 0
      %1903 = vmatprep.subr.bf16.mxu0 0
      %1904 = vmatpush1.bf16.msra.mxu0 0
      %1905 = vmatprep.subr.bf16.mxu0 0
      %1906 = vmatpush1.bf16.msra.mxu0 0
      %1907 = vmatprep.subr.bf16.mxu0 0
      %1908 = vmatpush1.bf16.msra.mxu0 0
      %1909 = vmatprep.subr.bf16.mxu0 0
      %1910 = vmatpush1.bf16.msra.mxu0 0
      %1911 = vmatprep.subr.bf16.mxu0 0
      %1912 = vmatpush1.bf16.msra.mxu0 0
      %1913 = vmatprep.subr.bf16.mxu0 0
      %1914 = vmatpush1.bf16.msra.mxu0 0
      %1915 = vmatprep.subr.bf16.mxu0 0
      %1916 = vmatpush1.bf16.msra.mxu0 0
      %1917 = vmatprep.mubr.bf16.mxu0 0
      %1918 = vmatmul.mubr.bf16.gmra.mrb[0].mxu0 %v1883
      %v1919 = vpop.f32.mrb[0].mxu0
      %v1920 = vadd.f32 %v1865, %v1919
      %v1921 = vpop.f32.mrb[0].mxu0
      %v1922 = vpop.f32.mrb[0].mxu0
      %v1923 = vadd.f32 %v1868, %v1922
      %v1924 = vpop.f32.mrb[0].mxu0
      %1925 = vdwg.mxu0
      %v1926 = vld [vmem:[%s10] sm:$0x1]
      %v1928 = vlaneseq
      %v1929 = vshrl.u32 %v1928, 7
      %v1930 = vsub.s32 0, %v1929
      %v1931 = vrot.slane %v1926, %v1930
      %v1933 = vadd.f32 %v1920, %v1931
      %v1934 = vadd.f32 %v1923, %v1931
      %v1935 = vmax.f32 %v1933, 0.0
      %v1936 = vmax.f32 %v1934, 0.0
      %v1937 = vpack.c.bf16 %v1936, %v1935
      %v1938 = vld [vmem:[%s11] sm:$0xf]
      %v1939 = vld [vmem:[%s11 + $0x4] sm:$0xf]
      %v1940 = vld [vmem:[%s11 + $0x8] sm:$0xf]
      %v1941 = vld [vmem:[%s11 + $0xc] sm:$0xf]
      %v1942 = vld [vmem:[%s11 + $0x10] sm:$0xf]
      %v1943 = vld [vmem:[%s11 + $0x14] sm:$0xf]
      %v1944 = vld [vmem:[%s11 + $0x18] sm:$0xf]
      %v1945 = vld [vmem:[%s11 + $0x1c] sm:$0xf]
      %v1947 = vshrl.u32 %v1937, 16
      %v1949 = vshll.u32 %v1937, 16
      %v1951 = vrot.slane %v1949, 1
      %v1952 = vor.u32 %v1947, %v1951
      %v1957 = vunpack.c.l.b16 %v1942
      %v1958 = vunpack.c.l.b16 %v1943
      %v1959 = vunpack.c.l.b16 %v1944
      %v1960 = vunpack.c.l.b16 %v1945
      %v1961 = vpack.c.b16 %v1958, %v1957
      %v1962 = vpack.c.b16 %v1960, %v1959
      %v1966 = vsel %vm1522, %v1952, 0
      %1968 = vmatprep.subr.bf16.mxu0 0
      %1969 = vmatpush1.bf16.msra.mxu0 %v1961
      %1970 = vmatprep.subr.bf16.mxu0 0
      %1971 = vmatpush1.bf16.msra.mxu0 %v1962
      %1972 = vmatprep.subr.bf16.mxu0 0
      %1973 = vmatpush1.bf16.msra.mxu0 0
      %1974 = vmatprep.subr.bf16.mxu0 0
      %1975 = vmatpush1.bf16.msra.mxu0 0
      %1976 = vmatprep.subr.bf16.mxu0 0
      %1977 = vmatpush1.bf16.msra.mxu0 0
      %1978 = vmatprep.subr.bf16.mxu0 0
      %1979 = vmatpush1.bf16.msra.mxu0 0
      %1980 = vmatprep.subr.bf16.mxu0 0
      %1981 = vmatpush1.bf16.msra.mxu0 0
      %1982 = vmatprep.subr.bf16.mxu0 0
      %1983 = vmatpush1.bf16.msra.mxu0 0
      %1984 = vmatprep.subr.bf16.mxu0 0
      %1985 = vmatpush1.bf16.msra.mxu0 0
      %1986 = vmatprep.subr.bf16.mxu0 0
      %1987 = vmatpush1.bf16.msra.mxu0 0
      %1988 = vmatprep.subr.bf16.mxu0 0
      %1989 = vmatpush1.bf16.msra.mxu0 0
      %1990 = vmatprep.subr.bf16.mxu0 0
      %1991 = vmatpush1.bf16.msra.mxu0 0
      %1992 = vmatprep.subr.bf16.mxu0 0
      %1993 = vmatpush1.bf16.msra.mxu0 0
      %1994 = vmatprep.subr.bf16.mxu0 0
      %1995 = vmatpush1.bf16.msra.mxu0 0
      %1996 = vmatprep.subr.bf16.mxu0 0
      %1997 = vmatpush1.bf16.msra.mxu0 0
      %1998 = vmatprep.subr.bf16.mxu0 0
      %1999 = vmatpush1.bf16.msra.mxu0 0
      %2000 = vmatprep.mubr.bf16.mxu0 0
      %2001 = vmatmul.mubr.bf16.gmra.mrb[0].mxu0 %v1966
      %v2002 = vpop.f32.mrb[0].mxu0
      %v2003 = vadd.f32 0.0, %v2002
      %v2004 = vpop.f32.mrb[0].mxu0
      %v2005 = vpop.f32.mrb[0].mxu0
      %v2006 = vadd.f32 0.0, %v2005
      %v2007 = vpop.f32.mrb[0].mxu0
      %2008 = vdwg.mxu0
      %v2013 = vunpack.c.l.b16 %v1938
      %v2014 = vunpack.c.l.b16 %v1939
      %v2015 = vunpack.c.l.b16 %v1940
      %v2016 = vunpack.c.l.b16 %v1941
      %v2017 = vpack.c.b16 %v2014, %v2013
      %v2018 = vpack.c.b16 %v2016, %v2015
      %v2021 = vsel %vm1522, %v1937, 0
      %2023 = vmatprep.subr.bf16.mxu0 0
      %2024 = vmatpush1.bf16.msra.mxu0 %v2017
      %2025 = vmatprep.subr.bf16.mxu0 0
      %2026 = vmatpush1.bf16.msra.mxu0 %v2018
      %2027 = vmatprep.subr.bf16.mxu0 0
      %2028 = vmatpush1.bf16.msra.mxu0 0
      %2029 = vmatprep.subr.bf16.mxu0 0
      %2030 = vmatpush1.bf16.msra.mxu0 0
      %2031 = vmatprep.subr.bf16.mxu0 0
      %2032 = vmatpush1.bf16.msra.mxu0 0
      %2033 = vmatprep.subr.bf16.mxu0 0
      %2034 = vmatpush1.bf16.msra.mxu0 0
      %2035 = vmatprep.subr.bf16.mxu0 0
      %2036 = vmatpush1.bf16.msra.mxu0 0
      %2037 = vmatprep.subr.bf16.mxu0 0
      %2038 = vmatpush1.bf16.msra.mxu0 0
      %2039 = vmatprep.subr.bf16.mxu0 0
      %2040 = vmatpush1.bf16.msra.mxu0 0
      %2041 = vmatprep.subr.bf16.mxu0 0
      %2042 = vmatpush1.bf16.msra.mxu0 0
      %2043 = vmatprep.subr.bf16.mxu0 0
      %2044 = vmatpush1.bf16.msra.mxu0 0
      %2045 = vmatprep.subr.bf16.mxu0 0
      %2046 = vmatpush1.bf16.msra.mxu0 0
      %2047 = vmatprep.subr.bf16.mxu0 0
      %2048 = vmatpush1.bf16.msra.mxu0 0
      %2049 = vmatprep.subr.bf16.mxu0 0
      %2050 = vmatpush1.bf16.msra.mxu0 0
      %2051 = vmatprep.subr.bf16.mxu0 0
      %2052 = vmatpush1.bf16.msra.mxu0 0
      %2053 = vmatprep.subr.bf16.mxu0 0
      %2054 = vmatpush1.bf16.msra.mxu0 0
      %2055 = vmatprep.mubr.bf16.mxu0 0
      %2056 = vmatmul.mubr.bf16.gmra.mrb[0].mxu0 %v2021
      %v2057 = vpop.f32.mrb[0].mxu0
      %v2058 = vadd.f32 %v2003, %v2057
      %v2059 = vpop.f32.mrb[0].mxu0
      %v2060 = vpop.f32.mrb[0].mxu0
      %v2061 = vadd.f32 %v2006, %v2060
      %v2062 = vpop.f32.mrb[0].mxu0
      %2063 = vdwg.mxu0
      %v2064 = vld [vmem:[%s12] sm:$0x1]
      %v2066 = vlaneseq
      %v2067 = vshrl.u32 %v2066, 7
      %v2068 = vsub.s32 0, %v2067
      %v2069 = vrot.slane %v2064, %v2068
      %v2071 = vadd.f32 %v2058, %v2069
      %v2072 = vadd.f32 %v2061, %v2069
      %v2073 = vmax.f32 %v2071, 0.0
      %v2074 = vmax.f32 %v2072, 0.0
      %v2075 = vsel %vm1522, %v2073, 0.0
      %vm2076 = vcmask 254976
      %v2077 = vsel %vm2076, %v2074, 0.0
      %v2078 = vadd.f32 %v2075, %v2077
      %v2079 = vrot.slane %v2078, 4
      %v2080 = vadd.f32 %v2078, %v2079
      %v2081 = vrot.slane %v2080, 2
      %v2082 = vadd.f32 %v2080, %v2081
      %v2083 = vrot.slane %v2082, 1
      %v2084 = vadd.f32 %v2082, %v2083
      %v2085 = vrcp.pop 10.0
      %v2086 = vmul.f32 %v2084, %v2085
      %v2087 = vld [vmem:[%s495] sm:$0x1]
      %v2088 = vld [vmem:[%s13] sm:$0xf]
      %v2089 = vld [vmem:[%s13 + $0x4] sm:$0xf]
      %v2090 = vld [vmem:[%s14] sm:$0x1]
      %v2093 = vunpack.c.l.b16 %v2088
      %v2094 = vunpack.c.l.b16 %v2089
      %v2095 = vpack.c.b16 %v2094, %v2093
      %vm2097 = vcmask 130048
      %v2099 = vsel %vm2097, %v2087, 0
      %2101 = vmatprep.subr.bf16.mxu0 0
      %2102 = vmatpush1.bf16.msra.mxu0 %v2095
      %2103 = vmatprep.subr.bf16.mxu0 0
      %2104 = vmatpush1.bf16.msra.mxu0 0
      %2105 = vmatprep.subr.bf16.mxu0 0
      %2106 = vmatpush1.bf16.msra.mxu0 0
      %2107 = vmatprep.subr.bf16.mxu0 0
      %2108 = vmatpush1.bf16.msra.mxu0 0
      %2109 = vmatprep.subr.bf16.mxu0 0
      %2110 = vmatpush1.bf16.msra.mxu0 0
      %2111 = vmatprep.subr.bf16.mxu0 0
      %2112 = vmatpush1.bf16.msra.mxu0 0
      %2113 = vmatprep.subr.bf16.mxu0 0
      %2114 = vmatpush1.bf16.msra.mxu0 0
      %2115 = vmatprep.subr.bf16.mxu0 0
      %2116 = vmatpush1.bf16.msra.mxu0 0
      %2117 = vmatprep.subr.bf16.mxu0 0
      %2118 = vmatpush1.bf16.msra.mxu0 0
      %2119 = vmatprep.subr.bf16.mxu0 0
      %2120 = vmatpush1.bf16.msra.mxu0 0
      %2121 = vmatprep.subr.bf16.mxu0 0
      %2122 = vmatpush1.bf16.msra.mxu0 0
      %2123 = vmatprep.subr.bf16.mxu0 0
      %2124 = vmatpush1.bf16.msra.mxu0 0
      %2125 = vmatprep.subr.bf16.mxu0 0
      %2126 = vmatpush1.bf16.msra.mxu0 0
      %2127 = vmatprep.subr.bf16.mxu0 0
      %2128 = vmatpush1.bf16.msra.mxu0 0
      %2129 = vmatprep.subr.bf16.mxu0 0
      %2130 = vmatpush1.bf16.msra.mxu0 0
      %2131 = vmatprep.subr.bf16.mxu0 0
      %2132 = vmatpush1.bf16.msra.mxu0 0
      %2133 = vmatprep.mubr.bf16.mxu0 0
      %2134 = vmatmul.mubr.bf16.gmra.mrb[0].mxu0 %v2099
      %v2135 = vpop.f32.mrb[0].mxu0
      %v2136 = vadd.f32 %v2090, %v2135
      %v2137 = vpop.f32.mrb[0].mxu0
      %v2138 = vpop.f32.mrb[0].mxu0
      %v2139 = vpop.f32.mrb[0].mxu0
      %2140 = vdwg.mxu0
      %2142 = vrot.lane.b32.xlu0 %v2086, 32
      %v2143 = vpop.permute.xlu0 %2142
      %2146 = vrot.lane.b32.xlu0 %v2136, 64
      %v2147 = vpop.permute.xlu0 %2146
      %v2149 = vsel %vm1522, %v1772, %v2143
      %vm2150 = vcmask 523264
      %v2151 = vsel %vm2150, %v2149, %v2147
      %v2152 = vpack.c.bf16 %v2151, %v2151
      %v2153 = vld [vmem:[%s15] sm:$0xf]
      %v2154 = vld [vmem:[%s15 + $0x4] sm:$0xf]
      %v2155 = vld [vmem:[%s15 + $0x8] sm:$0xf]
      %v2156 = vld [vmem:[%s15 + $0xc] sm:$0xf]
      %v2157 = vld [vmem:[%s15 + $0x10] sm:$0xf]
      %v2158 = vld [vmem:[%s15 + $0x14] sm:$0xf]
      %v2159 = vld [vmem:[%s15 + $0x18] sm:$0xf]
      %v2160 = vld [vmem:[%s15 + $0x1c] sm:$0xf]
      %v2161 = vld [vmem:[%s15 + $0x20] sm:$0xf]
      %v2162 = vld [vmem:[%s15 + $0x24] sm:$0xf]
      %v2163 = vld [vmem:[%s15 + $0x28] sm:$0xf]
      %v2164 = vld [vmem:[%s15 + $0x2c] sm:$0xf]
      %v2165 = vld [vmem:[%s16] sm:$0x1]
      %v2178 = vunpack.c.l.b16 %v2153
      %v2179 = vunpack.c.l.b16 %v2154
      %v2180 = vunpack.c.l.b16 %v2155
      %v2181 = vunpack.c.l.b16 %v2156
      %v2182 = vunpack.c.l.b16 %v2157
      %v2183 = vunpack.c.l.b16 %v2158
      %v2184 = vunpack.c.l.b16 %v2159
      %v2185 = vunpack.c.l.b16 %v2160
      %v2186 = vunpack.c.l.b16 %v2161
      %v2187 = vunpack.c.l.b16 %v2162
      %v2188 = vunpack.c.l.b16 %v2163
      %v2189 = vunpack.c.l.b16 %v2164
      %v2190 = vpack.c.b16 %v2179, %v2178
      %v2191 = vpack.c.b16 %v2181, %v2180
      %v2192 = vpack.c.b16 %v2183, %v2182
      %v2193 = vpack.c.b16 %v2185, %v2184
      %v2194 = vpack.c.b16 %v2187, %v2186
      %v2195 = vpack.c.b16 %v2189, %v2188
      %vm2202 = vcmask 785408
      %v2204 = vsel %vm2202, %v2152, 0
      %2206 = vmatprep.subr.bf16.mxu0 0
      %2207 = vmatpush1.bf16.msra.mxu0 %v2190
      %2208 = vmatprep.subr.bf16.mxu0 0
      %2209 = vmatpush1.bf16.msra.mxu0 %v2191
      %2210 = vmatprep.subr.bf16.mxu0 0
      %2211 = vmatpush1.bf16.msra.mxu0 %v2192
      %2212 = vmatprep.subr.bf16.mxu0 0
      %2213 = vmatpush1.bf16.msra.mxu0 %v2193
      %2214 = vmatprep.subr.bf16.mxu0 0
      %2215 = vmatpush1.bf16.msra.mxu0 %v2194
      %2216 = vmatprep.subr.bf16.mxu0 0
      %2217 = vmatpush1.bf16.msra.mxu0 %v2195
      %2218 = vmatprep.subr.bf16.mxu0 0
      %2219 = vmatpush1.bf16.msra.mxu0 0
      %2220 = vmatprep.subr.bf16.mxu0 0
      %2221 = vmatpush1.bf16.msra.mxu0 0
      %2222 = vmatprep.subr.bf16.mxu0 0
      %2223 = vmatpush1.bf16.msra.mxu0 0
      %2224 = vmatprep.subr.bf16.mxu0 0
      %2225 = vmatpush1.bf16.msra.mxu0 0
      %2226 = vmatprep.subr.bf16.mxu0 0
      %2227 = vmatpush1.bf16.msra.mxu0 0
      %2228 = vmatprep.subr.bf16.mxu0 0
      %2229 = vmatpush1.bf16.msra.mxu0 0
      %2230 = vmatprep.subr.bf16.mxu0 0
      %2231 = vmatpush1.bf16.msra.mxu0 0
      %2232 = vmatprep.subr.bf16.mxu0 0
      %2233 = vmatpush1.bf16.msra.mxu0 0
      %2234 = vmatprep.subr.bf16.mxu0 0
      %2235 = vmatpush1.bf16.msra.mxu0 0
      %2236 = vmatprep.subr.bf16.mxu0 0
      %2237 = vmatpush1.bf16.msra.mxu0 0
      %2238 = vmatprep.mubr.bf16.mxu0 0
      %2239 = vmatmul.mubr.bf16.gmra.mrb[0].mxu0 %v2204
      %v2240 = vpop.f32.mrb[0].mxu0
      %v2241 = vadd.f32 %v2165, %v2240
      %v2242 = vpop.f32.mrb[0].mxu0
      %v2243 = vpop.f32.mrb[0].mxu0
      %v2244 = vpop.f32.mrb[0].mxu0
      %2245 = vdwg.mxu0
      %v2246 = vmax.f32 %v2241, 0.0
      %v2247 = vpack.c.bf16 %v2246, %v2246
      %v2248 = vld [vmem:[%s17] sm:$0xf]
      %v2249 = vld [vmem:[%s17 + $0x4] sm:$0xf]
      %v2250 = vld [vmem:[%s17 + $0x8] sm:$0xf]
      %v2251 = vld [vmem:[%s17 + $0xc] sm:$0xf]
      %v2252 = vld [vmem:[%s17 + $0x10] sm:$0xf]
      %v2253 = vld [vmem:[%s17 + $0x14] sm:$0xf]
      %v2254 = vld [vmem:[%s17 + $0x18] sm:$0xf]
      %v2255 = vld [vmem:[%s17 + $0x1c] sm:$0xf]
      %v2256 = vld [vmem:[%s18] sm:$0x1]
      %v2265 = vunpack.c.l.b16 %v2248
      %v2266 = vunpack.c.l.b16 %v2249
      %v2267 = vunpack.c.l.b16 %v2250
      %v2268 = vunpack.c.l.b16 %v2251
      %v2269 = vunpack.c.l.b16 %v2252
      %v2270 = vunpack.c.l.b16 %v2253
      %v2271 = vunpack.c.l.b16 %v2254
      %v2272 = vunpack.c.l.b16 %v2255
      %v2273 = vpack.c.b16 %v2266, %v2265
      %v2274 = vpack.c.b16 %v2268, %v2267
      %v2275 = vpack.c.b16 %v2270, %v2269
      %v2276 = vpack.c.b16 %v2272, %v2271
      %v2282 = vsel %vm2150, %v2247, 0
      %2284 = vmatprep.subr.bf16.mxu0 0
      %2285 = vmatpush1.bf16.msra.mxu0 %v2273
      %2286 = vmatprep.subr.bf16.mxu0 0
      %2287 = vmatpush1.bf16.msra.mxu0 %v2274
      %2288 = vmatprep.subr.bf16.mxu0 0
      %2289 = vmatpush1.bf16.msra.mxu0 %v2275
      %2290 = vmatprep.subr.bf16.mxu0 0
      %2291 = vmatpush1.bf16.msra.mxu0 %v2276
      %2292 = vmatprep.subr.bf16.mxu0 0
      %2293 = vmatpush1.bf16.msra.mxu0 0
      %2294 = vmatprep.subr.bf16.mxu0 0
      %2295 = vmatpush1.bf16.msra.mxu0 0
      %2296 = vmatprep.subr.bf16.mxu0 0
      %2297 = vmatpush1.bf16.msra.mxu0 0
      %2298 = vmatprep.subr.bf16.mxu0 0
      %2299 = vmatpush1.bf16.msra.mxu0 0
      %2300 = vmatprep.subr.bf16.mxu0 0
      %2301 = vmatpush1.bf16.msra.mxu0 0
      %2302 = vmatprep.subr.bf16.mxu0 0
      %2303 = vmatpush1.bf16.msra.mxu0 0
      %2304 = vmatprep.subr.bf16.mxu0 0
      %2305 = vmatpush1.bf16.msra.mxu0 0
      %2306 = vmatprep.subr.bf16.mxu0 0
      %2307 = vmatpush1.bf16.msra.mxu0 0
      %2308 = vmatprep.subr.bf16.mxu0 0
      %2309 = vmatpush1.bf16.msra.mxu0 0
      %2310 = vmatprep.subr.bf16.mxu0 0
      %2311 = vmatpush1.bf16.msra.mxu0 0
      %2312 = vmatprep.subr.bf16.mxu0 0
      %2313 = vmatpush1.bf16.msra.mxu0 0
      %2314 = vmatprep.subr.bf16.mxu0 0
      %2315 = vmatpush1.bf16.msra.mxu0 0
      %2316 = vmatprep.mubr.bf16.mxu0 0
      %2317 = vmatmul.mubr.bf16.gmra.mrb[0].mxu0 %v2282
      %v2318 = vpop.f32.mrb[0].mxu0
      %v2319 = vadd.f32 %v2256, %v2318
      %v2320 = vpop.f32.mrb[0].mxu0
      %v2321 = vpop.f32.mrb[0].mxu0
      %v2322 = vpop.f32.mrb[0].mxu0
      %2323 = vdwg.mxu0
      %2324 = vst [vmem:[%s498] sm:$0x1] %v2319
      %p2325 = scmp.lt.s32.totalorder %s40, 1
      %s2326 = scalar_select %p2325, %s40, 1
      %s2327 = scalar_lea.vmem %s19, %s2326
      // Predicated region
      $region681: #{three_inputs_net.1} parent=79 // pred_check
        %p2328 = pneg %p378
      $region682: #{three_inputs_net.1} parent=79 // pred_check_branch
        %2330 = sbr.rel (%p2328) target = $region684
      $region683: #{three_inputs_net.1} parent=79 // pred_region
        _
      $region684: #{three_inputs_net.1} parent=79 // pred_fallthru
        _
    $region80: #{three_inputs_net.1} parent=5 // pred_fallthru
      _
    %p2331 = scmp.le.s32.totalorder 2, %s35
    // Predicated region
    $region685: #{three_inputs_net.1} parent=5 // pred_check
      %p2332 = pneg %p2331
    $region686: #{three_inputs_net.1} parent=5 // pred_check_branch
      %2334 = sbr.rel (%p2332) target = $region688
    $region687: #{three_inputs_net.1} parent=5 // pred_region
      %s2335 = ssub.s32 %s35, 2
      // Predicated region
      $region689: #{three_inputs_net.1} parent=687 // pred_check
        %p2336 = pneg %p384
      $region690: #{three_inputs_net.1} parent=687 // pred_check_branch
        %2338 = sbr.rel (%p2336) target = $region692
      $region691: #{three_inputs_net.1} parent=687 // pred_region
        %p2339 = scmp.lt.s32.totalorder %s41, 1
        %s2340 = scalar_select %p2339, %s41, 1
        %s2341 = scalar_lea.vmem %s19, %s2340
      $region692: #{three_inputs_net.1} parent=687 // pred_fallthru
        _
    $region688: #{three_inputs_net.1} parent=5 // pred_fallthru
      _
  $region6: #{three_inputs_net.1} parent=0 // loop_footer
    %s39 = sadd.s32 1, %s35
  $region7: #{three_inputs_net.1} parent=0 // loop_footer_branch
    %34 = sbr.rel target = $region3
  $region8: #{three_inputs_net.1} parent=0 // loop_exit
    _
  %2342 = vsyncmov [#allocation4]
  %s2343 = vpop.sfrf %2342
  %p2344 = scmp.eq.s32.totalorder %s2343, 0
  %p2345 = pneg %p2344
  %2347 = shalt.err (%p2345)
  %s2348 = scalar_lea.sflag [#allocation4], 1
  %2349 = vsyncmov %s2348
  %s2350 = vpop.sfrf %2349
  %p2351 = scmp.eq.s32.totalorder %s2350, 0
  %p2352 = pneg %p2351
  %2354 = shalt.err (%p2352)
  %s2355 = scalar_lea.sflag [#allocation4], 2
  %2356 = vsyncmov %s2355
  %s2357 = vpop.sfrf %2356
  %p2358 = scmp.eq.s32.totalorder %s2357, 0
  %p2359 = pneg %p2358
  %2361 = shalt.err (%p2359)
  %s2362 = scalar_lea.sflag [#allocation4], 3
  %2363 = vsyncmov %s2362
  %s2364 = vpop.sfrf %2363
  %p2365 = scmp.eq.s32.totalorder %s2364, 0
  %p2366 = pneg %p2365
  %2368 = shalt.err (%p2366)
  %s2369 = scalar_lea.sflag [#allocation4], 4
  %2370 = vsyncmov %s2369
  %s2371 = vpop.sfrf %2370
  %p2372 = scmp.eq.s32.totalorder %s2371, 0
  %p2373 = pneg %p2372
  %2375 = shalt.err (%p2373)
  %s2376 = scalar_lea.sflag [#allocation4], 5
  %2377 = vsyncmov %s2376
  %s2378 = vpop.sfrf %2377
  %p2379 = scmp.eq.s32.totalorder %s2378, 0
  %p2380 = pneg %p2379
  %2382 = shalt.err (%p2380)
  %s2383 = scalar_lea.sflag [#allocation4], 6
  %2384 = vsyncmov %s2383
  %s2385 = vpop.sfrf %2384
  %p2386 = scmp.eq.s32.totalorder %s2385, 0
  %p2387 = pneg %p2386
  %2389 = shalt.err (%p2387)
  %s2390 = scalar_lea.sflag [#allocation4], 7
  %2391 = vsyncmov %s2390
  %s2392 = vpop.sfrf %2391
  %p2393 = scmp.eq.s32.totalorder %s2392, 0
  %p2394 = pneg %p2393
  %2396 = shalt.err (%p2394)
  %2397 = vsyncmov [#allocation5]
  %s2398 = vpop.sfrf %2397
  %p2399 = scmp.eq.s32.totalorder %s2398, 0
  %p2400 = pneg %p2399
  %2402 = shalt.err (%p2400)
  %s2403 = scalar_lea.sflag [#allocation5], 1
  %2404 = vsyncmov %s2403
  %s2405 = vpop.sfrf %2404
  %p2406 = scmp.eq.s32.totalorder %s2405, 0
  %p2407 = pneg %p2406
  %2409 = shalt.err (%p2407)
  %s2410 = scalar_lea.sflag [#allocation5], 2
  %2411 = vsyncmov %s2410
  %s2412 = vpop.sfrf %2411
  %p2413 = scmp.eq.s32.totalorder %s2412, 0
  %p2414 = pneg %p2413
  %2416 = shalt.err (%p2414)
  %s2417 = scalar_lea.sflag [#allocation5], 3
  %2418 = vsyncmov %s2417
  %s2419 = vpop.sfrf %2418
  %p2420 = scmp.eq.s32.totalorder %s2419, 0
  %p2421 = pneg %p2420
  %2423 = shalt.err (%p2421)
  %s2424 = scalar_lea.sflag [#allocation5], 4
  %2425 = vsyncmov %s2424
  %s2426 = vpop.sfrf %2425
  %p2427 = scmp.eq.s32.totalorder %s2426, 0
  %p2428 = pneg %p2427
  %2430 = shalt.err (%p2428)
  %s2431 = scalar_lea.sflag [#allocation5], 5
  %2432 = vsyncmov %s2431
  %s2433 = vpop.sfrf %2432
  %p2434 = scmp.eq.s32.totalorder %s2433, 0
  %p2435 = pneg %p2434
  %2437 = shalt.err (%p2435)
  %s2438 = scalar_lea.sflag [#allocation5], 6
  %2439 = vsyncmov %s2438
  %s2440 = vpop.sfrf %2439
  %p2441 = scmp.eq.s32.totalorder %s2440, 0
  %p2442 = pneg %p2441
  %2444 = shalt.err (%p2442)
  %s2445 = scalar_lea.sflag [#allocation5], 7
  %2446 = vsyncmov %s2445
  %s2447 = vpop.sfrf %2446
  %p2448 = scmp.eq.s32.totalorder %s2447, 0
  %p2449 = pneg %p2448
  %2451 = shalt.err (%p2449)
  %s2452 = scalar_lea.sflag [#allocation5], 8
  %2453 = vsyncmov %s2452
  %s2454 = vpop.sfrf %2453
  %p2455 = scmp.eq.s32.totalorder %s2454, 0
  %p2456 = pneg %p2455
  %2458 = shalt.err (%p2456)
  %s2459 = scalar_lea.sflag [#allocation5], 9
  %2460 = vsyncmov %s2459
  %s2461 = vpop.sfrf %2460
  %p2462 = scmp.eq.s32.totalorder %s2461, 0
  %p2463 = pneg %p2462
  %2465 = shalt.err (%p2463)
  %s2466 = scalar_lea.sflag [#allocation5], 10
  %2467 = vsyncmov %s2466
  %s2468 = vpop.sfrf %2467
  %p2469 = scmp.eq.s32.totalorder %s2468, 0
  %p2470 = pneg %p2469
  %2472 = shalt.err (%p2470)
  %s2473 = scalar_lea.sflag [#allocation5], 11
  %2474 = vsyncmov %s2473
  %s2475 = vpop.sfrf %2474
  %p2476 = scmp.eq.s32.totalorder %s2475, 0
  %p2477 = pneg %p2476
  %2479 = shalt.err (%p2477)

</llo_original>
